<compile_context>
chip_gen: v7x
topology: tpu7x:2x2x1
jax: 0.10.0
libtpu: 0.0.40
codegen_flags: <defaults>
</compile_context>

<pallas_src>
import functools

import numpy as np
import jax
import jax.numpy as jnp
from jax import lax
from jax.experimental import pallas as pl

_EPS = 1e-5


# --------------------------------- kernel ----------------------------------

def _lenet_kernel(x_ref, w1b_ref, w2b_ref, vec_ref, wf1_ref, wf2_ref, wf3_ref,
                  o_ref, *, eps):
    """Entire LeNet_BatchNorm forward on VMEM-resident data.

    x_ref   : (N, 32, 32)   28x28 input zero-padded by 2 (conv1 padding=2).
    w1b_ref : (5, 32, 168)  conv1 banded weights, one (W_in, 28*6) band per kh.
    w2b_ref : (5, 84, 160)  conv2 banded weights, one (14*6, 10*16) band per kh.
    vec_ref : (13, 256)     packed per-channel vectors (biases, BN gamma/beta).
    wf1_ref : (400, 256)    fc1 weight (rows permuted to (h, w, c) flatten order).
    wf2_ref : (256, 64)     fc2 weight.
    wf3_ref : (64, 10)      fc3 weight.
    o_ref   : (N, 10)       logits.

    Conv activations are laid out as (H_out, W_out*C_out) with the channel
    minor, so the next conv's banded matmul consumes them directly.
    """
    f32 = jnp.float32
    n_img = x_ref.shape[0]

    vecs = vec_ref[...]
    b1_t, g1_t, be1_t = vecs[0:1, 0:168], vecs[1:2, 0:84], vecs[2:3, 0:84]
    b2_t, g2_t, be2_t = vecs[3:4, 0:160], vecs[4:5, 0:80], vecs[5:6, 0:80]
    bf1, g3, be3 = vecs[6:7, 0:256], vecs[7:8, 0:256], vecs[8:9, 0:256]
    bf2, g4, be4 = vecs[9:10, 0:64], vecs[10:11, 0:64], vecs[11:12, 0:64]
    bf3 = vecs[12:13, 0:10]

    def fiota(shape, dim):
        return lax.broadcasted_iota(jnp.int32, shape, dim).astype(f32)

    def fmod(v, m):
        # exact for the small integer-valued iotas used here
        return v - m * jnp.floor(v / m)

    def pool_sel_mats(h_out, w_out, n_ch):
        """Constant matrices for per-channel BN stats and 2x2 average pooling."""
        h_p, w_p = h_out // 2, w_out // 2
        cols_z, cols_p = w_out * n_ch, w_p * n_ch
        # (cols_z, n_ch): fold per-(w, c) column sums into per-channel sums.
        sel = jnp.where(fmod(fiota((cols_z, n_ch), 0), float(n_ch))
                        == fiota((cols_z, n_ch), 1), 1.0, 0.0).astype(f32)
        # (n_ch, cols_p): broadcast a per-channel row to pooled (w, c) columns.
        bsel = jnp.where(fiota((n_ch, cols_p), 0)
                         == fmod(fiota((n_ch, cols_p), 1), float(n_ch)),
                         1.0, 0.0).astype(f32)
        # (h_p, h_out): average adjacent row pairs.
        ah = jnp.where(jnp.floor(fiota((h_p, h_out), 1) * 0.5)
                       == fiota((h_p, h_out), 0), 0.5, 0.0).astype(f32)
        # (cols_z, cols_p): average adjacent (w, c) column pairs per channel.
        r = fiota((cols_z, cols_p), 0)
        c = fiota((cols_z, cols_p), 1)
        bw = jnp.where(
            jnp.logical_and(
                fmod(r, float(n_ch)) == fmod(c, float(n_ch)),
                jnp.floor(r / float(2 * n_ch)) == jnp.floor(c / float(n_ch))),
            0.5, 0.0).astype(f32)
        return sel, bsel, ah, bw

    sel1, bsel1, ah1, bw1 = pool_sel_mats(28, 28, 6)      # conv1 block
    sel2, bsel2, ah2, bw2 = pool_sel_mats(10, 10, 16)     # conv2 block

    def conv_block(img_rows, w_band_ref, bias_t, h_out):
        """Banded-matmul conv (+ bias + ReLU) over 5 kernel rows."""
        acc = jnp.dot(img_rows[0:h_out, :], w_band_ref[0],
                      preferred_element_type=f32)
        for kh in range(1, 5):
            acc = acc + jnp.dot(img_rows[kh:kh + h_out, :], w_band_ref[kh],
                                preferred_element_type=f32)
        return jnp.maximum(acc + bias_t, 0.0)

    # ---- conv1 -> ReLU, accumulating training-mode BN1 statistics ----------
    z1 = []
    s1 = jnp.zeros((1, 168), f32)
    q1 = jnp.zeros((1, 168), f32)
    for n in range(n_img):
        zn = conv_block(x_ref[n], w1b_ref, b1_t, 28)          # (28, 168)
        s1 = s1 + jnp.sum(zn, axis=0, keepdims=True)
        q1 = q1 + jnp.sum(zn * zn, axis=0, keepdims=True)
        z1.append(zn)

    cnt1 = float(n_img * 28 * 28)
    mean1 = jnp.dot(s1, sel1, preferred_element_type=f32) / cnt1        # (1, 6)
    var1 = jnp.dot(q1, sel1, preferred_element_type=f32) / cnt1 - mean1 * mean1
    scale1 = g1_t * jnp.dot(lax.rsqrt(var1 + eps), bsel1,
                            preferred_element_type=f32)                 # (1, 84)
    shift1 = be1_t - jnp.dot(mean1, bsel1, preferred_element_type=f32) * scale1

    # ---- BN1 affine + pool1 (matmuls), conv2 -> ReLU, BN2 statistics -------
    z2 = []
    s2 = jnp.zeros((1, 160), f32)
    q2 = jnp.zeros((1, 160), f32)
    for n in range(n_img):
        pooled = jnp.dot(jnp.dot(ah1, z1[n], preferred_element_type=f32), bw1,
                         preferred_element_type=f32)                    # (14, 84)
        y1n = pooled * scale1 + shift1
        zn = conv_block(y1n, w2b_ref, b2_t, 10)                         # (10, 160)
        s2 = s2 + jnp.sum(zn, axis=0, keepdims=True)
        q2 = q2 + jnp.sum(zn * zn, axis=0, keepdims=True)
        z2.append(zn)

    cnt2 = float(n_img * 10 * 10)
    mean2 = jnp.dot(s2, sel2, preferred_element_type=f32) / cnt2        # (1, 16)
    var2 = jnp.dot(q2, sel2, preferred_element_type=f32) / cnt2 - mean2 * mean2
    scale2 = g2_t * jnp.dot(lax.rsqrt(var2 + eps), bsel2,
                            preferred_element_type=f32)                 # (1, 80)
    shift2 = be2_t - jnp.dot(mean2, bsel2, preferred_element_type=f32) * scale2

    # ---- BN2 affine + pool2, flatten each image (h, w, c) ------------------
    rows = []
    for n in range(n_img):
        pooled = jnp.dot(jnp.dot(ah2, z2[n], preferred_element_type=f32), bw2,
                         preferred_element_type=f32)                    # (5, 80)
        y2n = pooled * scale2 + shift2
        rows.append(jnp.concatenate([y2n[h:h + 1, :] for h in range(5)],
                                    axis=1))                            # (1, 400)
    xfc = jnp.concatenate(rows, axis=0)                                 # (N, 400)

    # ---- fc1 -> ReLU -> BN3 -> fc2 -> ReLU -> BN4 -> fc3 -------------------
    def fc_bn(x, w_ref, bias, gamma, beta):
        h = jnp.maximum(
            jnp.dot(x, w_ref[...], preferred_element_type=f32) + bias, 0.0)
        m = jnp.mean(h, axis=0, keepdims=True)
        v = jnp.mean((h - m) * (h - m), axis=0, keepdims=True)
        return (h - m) * lax.rsqrt(v + eps) * gamma + beta

    h1 = fc_bn(xfc, wf1_ref, bf1, g3, be3)                              # (N, 256)
    h2 = fc_bn(h1, wf2_ref, bf2, g4, be4)                               # (N, 64)
    out = jnp.dot(h2, wf3_ref[...], preferred_element_type=f32) + bf3   # (N, 10)
    o_ref[...] = out.astype(o_ref.dtype)


# -------------------------------- wrapper -----------------------------------

def _fused_forward(x_pad, w1_band, w2_band, vecs, fc1_w, fc2_w, fc3_w):
    n = x_pad.shape[0]
    # Gridless call: every operand is a whole-array VMEM-resident ref (total
    # < 1 MiB), no pipeline wrapper.  At N=2 one TensorCore is the right
    # choice; for larger batches add a leading "parallel" grid axis over
    # images so v7x's second core gets work.
    return pl.pallas_call(
        functools.partial(_lenet_kernel, eps=_EPS),
        out_shape=jax.ShapeDtypeStruct((n, 10), jnp.float32),
    )(x_pad, w1_band, w2_band, vecs, fc1_w, fc2_w, fc3_w)


def lenet_batchnorm_forward(x, params):
    """x: (N, 1, 28, 28) NCHW, like the PyTorch module."""
    x_pad = jnp.pad(x[:, 0, :, :], ((0, 0), (2, 2), (2, 2)))  # conv1 padding=2
    return _fused_forward(x_pad, params["w1_band"], params["w2_band"],
                          params["vecs"], params["fc1_w"], params["fc2_w"],
                          params["fc3_w"])


# --------------------------------- params -----------------------------------

def _band_conv_weight(w, w_in, w_out):
    """(O, C, KH, KW) torch conv weight -> (KH, w_in*C, w_out*O) banded matrices.

    band[kh, wi*C + c, wo*O + o] = w[o, c, kh, wi - wo] for 0 <= wi - wo <= KW-1,
    so conv output row i is  sum_kh  input_row(i+kh) @ band[kh].
    """
    o_ch, c_ch, kh_sz, kw_sz = w.shape
    band = np.zeros((kh_sz, w_in * c_ch, w_out * o_ch), np.float32)
    for kh in range(kh_sz):
        for wo in range(w_out):
            for kw in range(kw_sz):
                wi = wo + kw
                band[kh, wi * c_ch:(wi + 1) * c_ch,
                     wo * o_ch:(wo + 1) * o_ch] = w[:, :, kh, kw].T
    return band


def init_params(key):
    ks = jax.random.split(key, 16)

    def rnd(k, shape, s=0.05):
        return np.asarray(s * jax.random.normal(k, shape), np.float32)

    conv1_w = rnd(ks[0], (6, 1, 5, 5))        # torch (O, Cin, KH, KW)
    conv1_b = rnd(ks[1], (6,))
    conv2_w = rnd(ks[2], (16, 6, 5, 5))
    conv2_b = rnd(ks[3], (16,))
    fc1_w_chw = rnd(ks[4], (400, 256))        # rows in torch (c, h, w) flatten order
    fc1_b = rnd(ks[5], (256,))
    fc2_w = rnd(ks[6], (256, 64))
    fc2_b = rnd(ks[7], (64,))
    fc3_w = rnd(ks[8], (64, 10))
    fc3_b = rnd(ks[9], (10,))
    bn1_g = 1.0 + rnd(ks[10], (6,))
    bn1_b = rnd(ks[11], (6,))
    bn2_g = 1.0 + rnd(ks[12], (16,))
    bn2_b = rnd(ks[13], (16,))
    bn3_g = 1.0 + rnd(ks[14], (256,))
    bn3_b = np.zeros((256,), np.float32)
    bn4_g = np.ones((64,), np.float32)
    bn4_b = rnd(ks[15], (64,))

    # fc1 rows permuted once from torch's NCHW flatten order (c, h, w) to the
    # kernel's channels-last (h, w, c) flatten order.
    hwc_to_chw = np.arange(400).reshape(16, 5, 5).transpose(1, 2, 0).reshape(-1)
    fc1_w = fc1_w_chw[hwc_to_chw, :]

    w1_band = _band_conv_weight(conv1_w, w_in=32, w_out=28)   # (5, 32, 168)
    w2_band = _band_conv_weight(conv2_w, w_in=14, w_out=10)   # (5, 84, 160)

    # All per-channel vectors packed into one operand (one DMA).  Conv biases
    # are pre-tiled to the conv-output column layout (w, c); BN gamma/beta to
    # the pooled column layout.
    vecs = np.zeros((13, 256), np.float32)
    vecs[0, :168] = np.tile(conv1_b, 28)
    vecs[1, :84] = np.tile(bn1_g, 14)
    vecs[2, :84] = np.tile(bn1_b, 14)
    vecs[3, :160] = np.tile(conv2_b, 10)
    vecs[4, :80] = np.tile(bn2_g, 5)
    vecs[5, :80] = np.tile(bn2_b, 5)
    vecs[6, :256] = fc1_b
    vecs[7, :256] = bn3_g
    vecs[8, :256] = bn3_b
    vecs[9, :64] = fc2_b
    vecs[10, :64] = bn4_g
    vecs[11, :64] = bn4_b
    vecs[12, :10] = fc3_b

    return {
        "w1_band": jnp.asarray(w1_band),
        "w2_band": jnp.asarray(w2_band),
        "vecs": jnp.asarray(vecs),
        "fc1_w": jnp.asarray(fc1_w),
        "fc2_w": jnp.asarray(fc2_w),
        "fc3_w": jnp.asarray(fc3_w),
    }


if __name__ == "__main__":
    key = jax.random.PRNGKey(0)
    kx, kp = jax.random.split(key)
    # LeNet geometry requires 28x28 single-channel input (flatten == 16*5*5).
    x = jax.random.normal(kx, (2, 1, 28, 28), dtype=jnp.float32)
    params = init_params(kp)

    fwd = jax.jit(lenet_batchnorm_forward)
    out = fwd(x, params)                                      # (2, 10)
    jax.block_until_ready(out)
    assert out.shape == (2, 10) and out.dtype == jnp.float32
    assert bool(jnp.all(jnp.isfinite(out)))
    print("KERNEL_OK")
</pallas_src>

<mosaic_0001>
module attributes {stable_mosaic.version = 11 : i64} {
  func.func @_lenet_kernel(%arg0: memref<2x32x32xf32, #tpu.memory_space<vmem>>, %arg1: memref<5x32x168xf32, #tpu.memory_space<vmem>>, %arg2: memref<5x84x160xf32, #tpu.memory_space<vmem>>, %arg3: memref<13x256xf32, #tpu.memory_space<vmem>>, %arg4: memref<400x256xf32, #tpu.memory_space<vmem>>, %arg5: memref<256x64xf32, #tpu.memory_space<vmem>>, %arg6: memref<64x10xf32, #tpu.memory_space<vmem>>, %arg7: memref<2x10xf32, #tpu.memory_space<vmem>>) attributes {dimension_semantics = [], scalar_prefetch = 0 : i64, scratch_operands = 0 : i64, tpu.core_type = #tpu.core_type<tc>} {
    %c0 = arith.constant 0 : index
    %c0_0 = arith.constant 0 : index
    %0 = vector.load %arg3[%c0, %c0_0] : memref<13x256xf32, #tpu.memory_space<vmem>>, vector<13x256xf32>
    %1 = vector.extract_strided_slice %0 {offsets = [0, 0], sizes = [1, 168], strides = [1, 1]} : vector<13x256xf32> to vector<1x168xf32>
    %2 = vector.extract_strided_slice %0 {offsets = [1, 0], sizes = [1, 84], strides = [1, 1]} : vector<13x256xf32> to vector<1x84xf32>
    %3 = vector.extract_strided_slice %0 {offsets = [2, 0], sizes = [1, 84], strides = [1, 1]} : vector<13x256xf32> to vector<1x84xf32>
    %4 = vector.extract_strided_slice %0 {offsets = [3, 0], sizes = [1, 160], strides = [1, 1]} : vector<13x256xf32> to vector<1x160xf32>
    %5 = vector.extract_strided_slice %0 {offsets = [4, 0], sizes = [1, 80], strides = [1, 1]} : vector<13x256xf32> to vector<1x80xf32>
    %6 = vector.extract_strided_slice %0 {offsets = [5, 0], sizes = [1, 80], strides = [1, 1]} : vector<13x256xf32> to vector<1x80xf32>
    %7 = vector.extract_strided_slice %0 {offsets = [6, 0], sizes = [1, 256], strides = [1, 1]} : vector<13x256xf32> to vector<1x256xf32>
    %8 = vector.extract_strided_slice %0 {offsets = [7, 0], sizes = [1, 256], strides = [1, 1]} : vector<13x256xf32> to vector<1x256xf32>
    %9 = vector.extract_strided_slice %0 {offsets = [8, 0], sizes = [1, 256], strides = [1, 1]} : vector<13x256xf32> to vector<1x256xf32>
    %10 = vector.extract_strided_slice %0 {offsets = [9, 0], sizes = [1, 64], strides = [1, 1]} : vector<13x256xf32> to vector<1x64xf32>
    %11 = vector.extract_strided_slice %0 {offsets = [10, 0], sizes = [1, 64], strides = [1, 1]} : vector<13x256xf32> to vector<1x64xf32>
    %12 = vector.extract_strided_slice %0 {offsets = [11, 0], sizes = [1, 64], strides = [1, 1]} : vector<13x256xf32> to vector<1x64xf32>
    %13 = vector.extract_strided_slice %0 {offsets = [12, 0], sizes = [1, 10], strides = [1, 1]} : vector<13x256xf32> to vector<1x10xf32>
    %14 = tpu.iota {dimensions = array<i32: 0>} : vector<168x6xi32>
    %15 = arith.sitofp %14 : vector<168x6xi32> to vector<168x6xf32>
    %cst = arith.constant 6.000000e+00 : f32
    %16 = vector.broadcast %cst : f32 to vector<168x6xf32>
    %17 = arith.divf %15, %16 : vector<168x6xf32>
    %18 = math.floor %17 : vector<168x6xf32>
    %cst_1 = arith.constant 6.000000e+00 : f32
    %19 = vector.broadcast %cst_1 : f32 to vector<168x6xf32>
    %20 = arith.mulf %19, %18 : vector<168x6xf32>
    %21 = arith.subf %15, %20 : vector<168x6xf32>
    %22 = tpu.iota {dimensions = array<i32: 1>} : vector<168x6xi32>
    %23 = arith.sitofp %22 : vector<168x6xi32> to vector<168x6xf32>
    %24 = arith.cmpf oeq, %21, %23 : vector<168x6xf32>
    %cst_2 = arith.constant 1.000000e+00 : f32
    %cst_3 = arith.constant 0.000000e+00 : f32
    %25 = vector.broadcast %cst_2 : f32 to vector<168x6xf32>
    %26 = vector.broadcast %cst_3 : f32 to vector<168x6xf32>
    %27 = arith.select %24, %25, %26 : vector<168x6xi1>, vector<168x6xf32>
    %28 = tpu.iota {dimensions = array<i32: 0>} : vector<6x84xi32>
    %29 = arith.sitofp %28 : vector<6x84xi32> to vector<6x84xf32>
    %30 = tpu.iota {dimensions = array<i32: 1>} : vector<6x84xi32>
    %31 = arith.sitofp %30 : vector<6x84xi32> to vector<6x84xf32>
    %cst_4 = arith.constant 6.000000e+00 : f32
    %32 = vector.broadcast %cst_4 : f32 to vector<6x84xf32>
    %33 = arith.divf %31, %32 : vector<6x84xf32>
    %34 = math.floor %33 : vector<6x84xf32>
    %cst_5 = arith.constant 6.000000e+00 : f32
    %35 = vector.broadcast %cst_5 : f32 to vector<6x84xf32>
    %36 = arith.mulf %35, %34 : vector<6x84xf32>
    %37 = arith.subf %31, %36 : vector<6x84xf32>
    %38 = arith.cmpf oeq, %29, %37 : vector<6x84xf32>
    %cst_6 = arith.constant 1.000000e+00 : f32
    %cst_7 = arith.constant 0.000000e+00 : f32
    %39 = vector.broadcast %cst_6 : f32 to vector<6x84xf32>
    %40 = vector.broadcast %cst_7 : f32 to vector<6x84xf32>
    %41 = arith.select %38, %39, %40 : vector<6x84xi1>, vector<6x84xf32>
    %42 = tpu.iota {dimensions = array<i32: 1>} : vector<14x28xi32>
    %43 = arith.sitofp %42 : vector<14x28xi32> to vector<14x28xf32>
    %cst_8 = arith.constant 5.000000e-01 : f32
    %44 = vector.broadcast %cst_8 : f32 to vector<14x28xf32>
    %45 = arith.mulf %43, %44 : vector<14x28xf32>
    %46 = math.floor %45 : vector<14x28xf32>
    %47 = tpu.iota {dimensions = array<i32: 0>} : vector<14x28xi32>
    %48 = arith.sitofp %47 : vector<14x28xi32> to vector<14x28xf32>
    %49 = arith.cmpf oeq, %46, %48 : vector<14x28xf32>
    %cst_9 = arith.constant 5.000000e-01 : f32
    %cst_10 = arith.constant 0.000000e+00 : f32
    %50 = vector.broadcast %cst_9 : f32 to vector<14x28xf32>
    %51 = vector.broadcast %cst_10 : f32 to vector<14x28xf32>
    %52 = arith.select %49, %50, %51 : vector<14x28xi1>, vector<14x28xf32>
    %53 = tpu.iota {dimensions = array<i32: 0>} : vector<168x84xi32>
    %54 = arith.sitofp %53 : vector<168x84xi32> to vector<168x84xf32>
    %55 = tpu.iota {dimensions = array<i32: 1>} : vector<168x84xi32>
    %56 = arith.sitofp %55 : vector<168x84xi32> to vector<168x84xf32>
    %cst_11 = arith.constant 6.000000e+00 : f32
    %57 = vector.broadcast %cst_11 : f32 to vector<168x84xf32>
    %58 = arith.divf %54, %57 : vector<168x84xf32>
    %59 = math.floor %58 : vector<168x84xf32>
    %cst_12 = arith.constant 6.000000e+00 : f32
    %60 = vector.broadcast %cst_12 : f32 to vector<168x84xf32>
    %61 = arith.mulf %60, %59 : vector<168x84xf32>
    %62 = arith.subf %54, %61 : vector<168x84xf32>
    %cst_13 = arith.constant 6.000000e+00 : f32
    %63 = vector.broadcast %cst_13 : f32 to vector<168x84xf32>
    %64 = arith.divf %56, %63 : vector<168x84xf32>
    %65 = math.floor %64 : vector<168x84xf32>
    %cst_14 = arith.constant 6.000000e+00 : f32
    %66 = vector.broadcast %cst_14 : f32 to vector<168x84xf32>
    %67 = arith.mulf %66, %65 : vector<168x84xf32>
    %68 = arith.subf %56, %67 : vector<168x84xf32>
    %69 = arith.cmpf oeq, %62, %68 : vector<168x84xf32>
    %cst_15 = arith.constant 1.200000e+01 : f32
    %70 = vector.broadcast %cst_15 : f32 to vector<168x84xf32>
    %71 = arith.divf %54, %70 : vector<168x84xf32>
    %72 = math.floor %71 : vector<168x84xf32>
    %cst_16 = arith.constant 6.000000e+00 : f32
    %73 = vector.broadcast %cst_16 : f32 to vector<168x84xf32>
    %74 = arith.divf %56, %73 : vector<168x84xf32>
    %75 = math.floor %74 : vector<168x84xf32>
    %76 = arith.cmpf oeq, %72, %75 : vector<168x84xf32>
    %77 = arith.andi %69, %76 : vector<168x84xi1>
    %cst_17 = arith.constant 5.000000e-01 : f32
    %cst_18 = arith.constant 0.000000e+00 : f32
    %78 = vector.broadcast %cst_17 : f32 to vector<168x84xf32>
    %79 = vector.broadcast %cst_18 : f32 to vector<168x84xf32>
    %80 = arith.select %77, %78, %79 : vector<168x84xi1>, vector<168x84xf32>
    %81 = tpu.iota {dimensions = array<i32: 0>} : vector<160x16xi32>
    %82 = arith.sitofp %81 : vector<160x16xi32> to vector<160x16xf32>
    %cst_19 = arith.constant 1.600000e+01 : f32
    %83 = vector.broadcast %cst_19 : f32 to vector<160x16xf32>
    %84 = arith.divf %82, %83 : vector<160x16xf32>
    %85 = math.floor %84 : vector<160x16xf32>
    %cst_20 = arith.constant 1.600000e+01 : f32
    %86 = vector.broadcast %cst_20 : f32 to vector<160x16xf32>
    %87 = arith.mulf %86, %85 : vector<160x16xf32>
    %88 = arith.subf %82, %87 : vector<160x16xf32>
    %89 = tpu.iota {dimensions = array<i32: 1>} : vector<160x16xi32>
    %90 = arith.sitofp %89 : vector<160x16xi32> to vector<160x16xf32>
    %91 = arith.cmpf oeq, %88, %90 : vector<160x16xf32>
    %cst_21 = arith.constant 1.000000e+00 : f32
    %cst_22 = arith.constant 0.000000e+00 : f32
    %92 = vector.broadcast %cst_21 : f32 to vector<160x16xf32>
    %93 = vector.broadcast %cst_22 : f32 to vector<160x16xf32>
    %94 = arith.select %91, %92, %93 : vector<160x16xi1>, vector<160x16xf32>
    %95 = tpu.iota {dimensions = array<i32: 0>} : vector<16x80xi32>
    %96 = arith.sitofp %95 : vector<16x80xi32> to vector<16x80xf32>
    %97 = tpu.iota {dimensions = array<i32: 1>} : vector<16x80xi32>
    %98 = arith.sitofp %97 : vector<16x80xi32> to vector<16x80xf32>
    %cst_23 = arith.constant 1.600000e+01 : f32
    %99 = vector.broadcast %cst_23 : f32 to vector<16x80xf32>
    %100 = arith.divf %98, %99 : vector<16x80xf32>
    %101 = math.floor %100 : vector<16x80xf32>
    %cst_24 = arith.constant 1.600000e+01 : f32
    %102 = vector.broadcast %cst_24 : f32 to vector<16x80xf32>
    %103 = arith.mulf %102, %101 : vector<16x80xf32>
    %104 = arith.subf %98, %103 : vector<16x80xf32>
    %105 = arith.cmpf oeq, %96, %104 : vector<16x80xf32>
    %cst_25 = arith.constant 1.000000e+00 : f32
    %cst_26 = arith.constant 0.000000e+00 : f32
    %106 = vector.broadcast %cst_25 : f32 to vector<16x80xf32>
    %107 = vector.broadcast %cst_26 : f32 to vector<16x80xf32>
    %108 = arith.select %105, %106, %107 : vector<16x80xi1>, vector<16x80xf32>
    %109 = tpu.iota {dimensions = array<i32: 1>} : vector<5x10xi32>
    %110 = arith.sitofp %109 : vector<5x10xi32> to vector<5x10xf32>
    %cst_27 = arith.constant 5.000000e-01 : f32
    %111 = vector.broadcast %cst_27 : f32 to vector<5x10xf32>
    %112 = arith.mulf %110, %111 : vector<5x10xf32>
    %113 = math.floor %112 : vector<5x10xf32>
    %114 = tpu.iota {dimensions = array<i32: 0>} : vector<5x10xi32>
    %115 = arith.sitofp %114 : vector<5x10xi32> to vector<5x10xf32>
    %116 = arith.cmpf oeq, %113, %115 : vector<5x10xf32>
    %cst_28 = arith.constant 5.000000e-01 : f32
    %cst_29 = arith.constant 0.000000e+00 : f32
    %117 = vector.broadcast %cst_28 : f32 to vector<5x10xf32>
    %118 = vector.broadcast %cst_29 : f32 to vector<5x10xf32>
    %119 = arith.select %116, %117, %118 : vector<5x10xi1>, vector<5x10xf32>
    %120 = tpu.iota {dimensions = array<i32: 0>} : vector<160x80xi32>
    %121 = arith.sitofp %120 : vector<160x80xi32> to vector<160x80xf32>
    %122 = tpu.iota {dimensions = array<i32: 1>} : vector<160x80xi32>
    %123 = arith.sitofp %122 : vector<160x80xi32> to vector<160x80xf32>
    %cst_30 = arith.constant 1.600000e+01 : f32
    %124 = vector.broadcast %cst_30 : f32 to vector<160x80xf32>
    %125 = arith.divf %121, %124 : vector<160x80xf32>
    %126 = math.floor %125 : vector<160x80xf32>
    %cst_31 = arith.constant 1.600000e+01 : f32
    %127 = vector.broadcast %cst_31 : f32 to vector<160x80xf32>
    %128 = arith.mulf %127, %126 : vector<160x80xf32>
    %129 = arith.subf %121, %128 : vector<160x80xf32>
    %cst_32 = arith.constant 1.600000e+01 : f32
    %130 = vector.broadcast %cst_32 : f32 to vector<160x80xf32>
    %131 = arith.divf %123, %130 : vector<160x80xf32>
    %132 = math.floor %131 : vector<160x80xf32>
    %cst_33 = arith.constant 1.600000e+01 : f32
    %133 = vector.broadcast %cst_33 : f32 to vector<160x80xf32>
    %134 = arith.mulf %133, %132 : vector<160x80xf32>
    %135 = arith.subf %123, %134 : vector<160x80xf32>
    %136 = arith.cmpf oeq, %129, %135 : vector<160x80xf32>
    %cst_34 = arith.constant 3.200000e+01 : f32
    %137 = vector.broadcast %cst_34 : f32 to vector<160x80xf32>
    %138 = arith.divf %121, %137 : vector<160x80xf32>
    %139 = math.floor %138 : vector<160x80xf32>
    %cst_35 = arith.constant 1.600000e+01 : f32
    %140 = vector.broadcast %cst_35 : f32 to vector<160x80xf32>
    %141 = arith.divf %123, %140 : vector<160x80xf32>
    %142 = math.floor %141 : vector<160x80xf32>
    %143 = arith.cmpf oeq, %139, %142 : vector<160x80xf32>
    %144 = arith.andi %136, %143 : vector<160x80xi1>
    %cst_36 = arith.constant 5.000000e-01 : f32
    %cst_37 = arith.constant 0.000000e+00 : f32
    %145 = vector.broadcast %cst_36 : f32 to vector<160x80xf32>
    %146 = vector.broadcast %cst_37 : f32 to vector<160x80xf32>
    %147 = arith.select %144, %145, %146 : vector<160x80xi1>, vector<160x80xf32>
    %cst_38 = arith.constant 0.000000e+00 : f32
    %148 = vector.broadcast %cst_38 : f32 to vector<1x168xf32>
    %cst_39 = arith.constant 0.000000e+00 : f32
    %149 = vector.broadcast %cst_39 : f32 to vector<1x168xf32>
    %c0_40 = arith.constant 0 : index
    %c0_41 = arith.constant 0 : index
    %c0_42 = arith.constant 0 : index
    %150 = vector.load %arg0[%c0_40, %c0_41, %c0_42] : memref<2x32x32xf32, #tpu.memory_space<vmem>>, vector<1x32x32xf32>
    %151 = vector.shape_cast %150 : vector<1x32x32xf32> to vector<32x32xf32>
    %152 = vector.extract_strided_slice %151 {offsets = [0, 0], sizes = [28, 32], strides = [1, 1]} : vector<32x32xf32> to vector<28x32xf32>
    %c0_43 = arith.constant 0 : index
    %c0_44 = arith.constant 0 : index
    %c0_45 = arith.constant 0 : index
    %153 = vector.load %arg1[%c0_43, %c0_44, %c0_45] : memref<5x32x168xf32, #tpu.memory_space<vmem>>, vector<1x32x168xf32>
    %154 = vector.shape_cast %153 : vector<1x32x168xf32> to vector<32x168xf32>
    %cst_46 = arith.constant dense<0.000000e+00> : vector<28x168xf32>
    %155 = tpu.matmul %152, %154, %cst_46 {dimension_numbers = #tpu.dot_dimension_numbers<[1], [0], [0], [1], [0, 0, 1, 1], [], []>} : vector<28x32xf32>, vector<32x168xf32>, vector<28x168xf32> -> vector<28x168xf32>
    %156 = vector.extract_strided_slice %151 {offsets = [1, 0], sizes = [28, 32], strides = [1, 1]} : vector<32x32xf32> to vector<28x32xf32>
    %c1 = arith.constant 1 : index
    %c0_47 = arith.constant 0 : index
    %c0_48 = arith.constant 0 : index
    %157 = vector.load %arg1[%c1, %c0_47, %c0_48] : memref<5x32x168xf32, #tpu.memory_space<vmem>>, vector<1x32x168xf32>
    %158 = vector.shape_cast %157 : vector<1x32x168xf32> to vector<32x168xf32>
    %cst_49 = arith.constant dense<0.000000e+00> : vector<28x168xf32>
    %159 = tpu.matmul %156, %158, %cst_49 {dimension_numbers = #tpu.dot_dimension_numbers<[1], [0], [0], [1], [0, 0, 1, 1], [], []>} : vector<28x32xf32>, vector<32x168xf32>, vector<28x168xf32> -> vector<28x168xf32>
    %160 = arith.addf %155, %159 : vector<28x168xf32>
    %161 = vector.extract_strided_slice %151 {offsets = [2, 0], sizes = [28, 32], strides = [1, 1]} : vector<32x32xf32> to vector<28x32xf32>
    %c2 = arith.constant 2 : index
    %c0_50 = arith.constant 0 : index
    %c0_51 = arith.constant 0 : index
    %162 = vector.load %arg1[%c2, %c0_50, %c0_51] : memref<5x32x168xf32, #tpu.memory_space<vmem>>, vector<1x32x168xf32>
    %163 = vector.shape_cast %162 : vector<1x32x168xf32> to vector<32x168xf32>
    %cst_52 = arith.constant dense<0.000000e+00> : vector<28x168xf32>
    %164 = tpu.matmul %161, %163, %cst_52 {dimension_numbers = #tpu.dot_dimension_numbers<[1], [0], [0], [1], [0, 0, 1, 1], [], []>} : vector<28x32xf32>, vector<32x168xf32>, vector<28x168xf32> -> vector<28x168xf32>
    %165 = arith.addf %160, %164 : vector<28x168xf32>
    %166 = vector.extract_strided_slice %151 {offsets = [3, 0], sizes = [28, 32], strides = [1, 1]} : vector<32x32xf32> to vector<28x32xf32>
    %c3 = arith.constant 3 : index
    %c0_53 = arith.constant 0 : index
    %c0_54 = arith.constant 0 : index
    %167 = vector.load %arg1[%c3, %c0_53, %c0_54] : memref<5x32x168xf32, #tpu.memory_space<vmem>>, vector<1x32x168xf32>
    %168 = vector.shape_cast %167 : vector<1x32x168xf32> to vector<32x168xf32>
    %cst_55 = arith.constant dense<0.000000e+00> : vector<28x168xf32>
    %169 = tpu.matmul %166, %168, %cst_55 {dimension_numbers = #tpu.dot_dimension_numbers<[1], [0], [0], [1], [0, 0, 1, 1], [], []>} : vector<28x32xf32>, vector<32x168xf32>, vector<28x168xf32> -> vector<28x168xf32>
    %170 = arith.addf %165, %169 : vector<28x168xf32>
    %171 = vector.extract_strided_slice %151 {offsets = [4, 0], sizes = [28, 32], strides = [1, 1]} : vector<32x32xf32> to vector<28x32xf32>
    %c4 = arith.constant 4 : index
    %c0_56 = arith.constant 0 : index
    %c0_57 = arith.constant 0 : index
    %172 = vector.load %arg1[%c4, %c0_56, %c0_57] : memref<5x32x168xf32, #tpu.memory_space<vmem>>, vector<1x32x168xf32>
    %173 = vector.shape_cast %172 : vector<1x32x168xf32> to vector<32x168xf32>
    %cst_58 = arith.constant dense<0.000000e+00> : vector<28x168xf32>
    %174 = tpu.matmul %171, %173, %cst_58 {dimension_numbers = #tpu.dot_dimension_numbers<[1], [0], [0], [1], [0, 0, 1, 1], [], []>} : vector<28x32xf32>, vector<32x168xf32>, vector<28x168xf32> -> vector<28x168xf32>
    %175 = arith.addf %170, %174 : vector<28x168xf32>
    %176 = vector.broadcast %1 : vector<1x168xf32> to vector<28x168xf32>
    %177 = arith.addf %175, %176 : vector<28x168xf32>
    %cst_59 = arith.constant 0.000000e+00 : f32
    %178 = vector.broadcast %cst_59 : f32 to vector<28x168xf32>
    %179 = arith.maximumf %177, %178 : vector<28x168xf32>
    %cst_60 = arith.constant dense<0.000000e+00> : vector<168xf32>
    %180 = vector.multi_reduction <add>, %179, %cst_60 [0] : vector<28x168xf32> to vector<168xf32>
    %181 = vector.shape_cast %180 : vector<168xf32> to vector<1x168xf32>
    %182 = arith.addf %148, %181 : vector<1x168xf32>
    %183 = arith.mulf %179, %179 : vector<28x168xf32>
    %cst_61 = arith.constant dense<0.000000e+00> : vector<168xf32>
    %184 = vector.multi_reduction <add>, %183, %cst_61 [0] : vector<28x168xf32> to vector<168xf32>
    %185 = vector.shape_cast %184 : vector<168xf32> to vector<1x168xf32>
    %186 = arith.addf %149, %185 : vector<1x168xf32>
    %c1_62 = arith.constant 1 : index
    %c0_63 = arith.constant 0 : index
    %c0_64 = arith.constant 0 : index
    %187 = vector.load %arg0[%c1_62, %c0_63, %c0_64] : memref<2x32x32xf32, #tpu.memory_space<vmem>>, vector<1x32x32xf32>
    %188 = vector.shape_cast %187 : vector<1x32x32xf32> to vector<32x32xf32>
    %189 = vector.extract_strided_slice %188 {offsets = [0, 0], sizes = [28, 32], strides = [1, 1]} : vector<32x32xf32> to vector<28x32xf32>
    %c0_65 = arith.constant 0 : index
    %c0_66 = arith.constant 0 : index
    %c0_67 = arith.constant 0 : index
    %190 = vector.load %arg1[%c0_65, %c0_66, %c0_67] : memref<5x32x168xf32, #tpu.memory_space<vmem>>, vector<1x32x168xf32>
    %191 = vector.shape_cast %190 : vector<1x32x168xf32> to vector<32x168xf32>
    %cst_68 = arith.constant dense<0.000000e+00> : vector<28x168xf32>
    %192 = tpu.matmul %189, %191, %cst_68 {dimension_numbers = #tpu.dot_dimension_numbers<[1], [0], [0], [1], [0, 0, 1, 1], [], []>} : vector<28x32xf32>, vector<32x168xf32>, vector<28x168xf32> -> vector<28x168xf32>
    %193 = vector.extract_strided_slice %188 {offsets = [1, 0], sizes = [28, 32], strides = [1, 1]} : vector<32x32xf32> to vector<28x32xf32>
    %c1_69 = arith.constant 1 : index
    %c0_70 = arith.constant 0 : index
    %c0_71 = arith.constant 0 : index
    %194 = vector.load %arg1[%c1_69, %c0_70, %c0_71] : memref<5x32x168xf32, #tpu.memory_space<vmem>>, vector<1x32x168xf32>
    %195 = vector.shape_cast %194 : vector<1x32x168xf32> to vector<32x168xf32>
    %cst_72 = arith.constant dense<0.000000e+00> : vector<28x168xf32>
    %196 = tpu.matmul %193, %195, %cst_72 {dimension_numbers = #tpu.dot_dimension_numbers<[1], [0], [0], [1], [0, 0, 1, 1], [], []>} : vector<28x32xf32>, vector<32x168xf32>, vector<28x168xf32> -> vector<28x168xf32>
    %197 = arith.addf %192, %196 : vector<28x168xf32>
    %198 = vector.extract_strided_slice %188 {offsets = [2, 0], sizes = [28, 32], strides = [1, 1]} : vector<32x32xf32> to vector<28x32xf32>
    %c2_73 = arith.constant 2 : index
    %c0_74 = arith.constant 0 : index
    %c0_75 = arith.constant 0 : index
    %199 = vector.load %arg1[%c2_73, %c0_74, %c0_75] : memref<5x32x168xf32, #tpu.memory_space<vmem>>, vector<1x32x168xf32>
    %200 = vector.shape_cast %199 : vector<1x32x168xf32> to vector<32x168xf32>
    %cst_76 = arith.constant dense<0.000000e+00> : vector<28x168xf32>
    %201 = tpu.matmul %198, %200, %cst_76 {dimension_numbers = #tpu.dot_dimension_numbers<[1], [0], [0], [1], [0, 0, 1, 1], [], []>} : vector<28x32xf32>, vector<32x168xf32>, vector<28x168xf32> -> vector<28x168xf32>
    %202 = arith.addf %197, %201 : vector<28x168xf32>
    %203 = vector.extract_strided_slice %188 {offsets = [3, 0], sizes = [28, 32], strides = [1, 1]} : vector<32x32xf32> to vector<28x32xf32>
    %c3_77 = arith.constant 3 : index
    %c0_78 = arith.constant 0 : index
    %c0_79 = arith.constant 0 : index
    %204 = vector.load %arg1[%c3_77, %c0_78, %c0_79] : memref<5x32x168xf32, #tpu.memory_space<vmem>>, vector<1x32x168xf32>
    %205 = vector.shape_cast %204 : vector<1x32x168xf32> to vector<32x168xf32>
    %cst_80 = arith.constant dense<0.000000e+00> : vector<28x168xf32>
    %206 = tpu.matmul %203, %205, %cst_80 {dimension_numbers = #tpu.dot_dimension_numbers<[1], [0], [0], [1], [0, 0, 1, 1], [], []>} : vector<28x32xf32>, vector<32x168xf32>, vector<28x168xf32> -> vector<28x168xf32>
    %207 = arith.addf %202, %206 : vector<28x168xf32>
    %208 = vector.extract_strided_slice %188 {offsets = [4, 0], sizes = [28, 32], strides = [1, 1]} : vector<32x32xf32> to vector<28x32xf32>
    %c4_81 = arith.constant 4 : index
    %c0_82 = arith.constant 0 : index
    %c0_83 = arith.constant 0 : index
    %209 = vector.load %arg1[%c4_81, %c0_82, %c0_83] : memref<5x32x168xf32, #tpu.memory_space<vmem>>, vector<1x32x168xf32>
    %210 = vector.shape_cast %209 : vector<1x32x168xf32> to vector<32x168xf32>
    %cst_84 = arith.constant dense<0.000000e+00> : vector<28x168xf32>
    %211 = tpu.matmul %208, %210, %cst_84 {dimension_numbers = #tpu.dot_dimension_numbers<[1], [0], [0], [1], [0, 0, 1, 1], [], []>} : vector<28x32xf32>, vector<32x168xf32>, vector<28x168xf32> -> vector<28x168xf32>
    %212 = arith.addf %207, %211 : vector<28x168xf32>
    %213 = vector.broadcast %1 : vector<1x168xf32> to vector<28x168xf32>
    %214 = arith.addf %212, %213 : vector<28x168xf32>
    %cst_85 = arith.constant 0.000000e+00 : f32
    %215 = vector.broadcast %cst_85 : f32 to vector<28x168xf32>
    %216 = arith.maximumf %214, %215 : vector<28x168xf32>
    %cst_86 = arith.constant dense<0.000000e+00> : vector<168xf32>
    %217 = vector.multi_reduction <add>, %216, %cst_86 [0] : vector<28x168xf32> to vector<168xf32>
    %218 = vector.shape_cast %217 : vector<168xf32> to vector<1x168xf32>
    %219 = arith.addf %182, %218 : vector<1x168xf32>
    %220 = arith.mulf %216, %216 : vector<28x168xf32>
    %cst_87 = arith.constant dense<0.000000e+00> : vector<168xf32>
    %221 = vector.multi_reduction <add>, %220, %cst_87 [0] : vector<28x168xf32> to vector<168xf32>
    %222 = vector.shape_cast %221 : vector<168xf32> to vector<1x168xf32>
    %223 = arith.addf %186, %222 : vector<1x168xf32>
    %cst_88 = arith.constant dense<0.000000e+00> : vector<1x6xf32>
    %224 = tpu.matmul %219, %27, %cst_88 {dimension_numbers = #tpu.dot_dimension_numbers<[1], [0], [0], [1], [0, 0, 1, 1], [], []>} : vector<1x168xf32>, vector<168x6xf32>, vector<1x6xf32> -> vector<1x6xf32>
    %cst_89 = arith.constant 1.568000e+03 : f32
    %225 = vector.broadcast %cst_89 : f32 to vector<1x6xf32>
    %226 = arith.divf %224, %225 : vector<1x6xf32>
    %cst_90 = arith.constant dense<0.000000e+00> : vector<1x6xf32>
    %227 = tpu.matmul %223, %27, %cst_90 {dimension_numbers = #tpu.dot_dimension_numbers<[1], [0], [0], [1], [0, 0, 1, 1], [], []>} : vector<1x168xf32>, vector<168x6xf32>, vector<1x6xf32> -> vector<1x6xf32>
    %cst_91 = arith.constant 1.568000e+03 : f32
    %228 = vector.broadcast %cst_91 : f32 to vector<1x6xf32>
    %229 = arith.divf %227, %228 : vector<1x6xf32>
    %230 = arith.mulf %226, %226 : vector<1x6xf32>
    %231 = arith.subf %229, %230 : vector<1x6xf32>
    %cst_92 = arith.constant 9.99999974E-6 : f32
    %232 = vector.broadcast %cst_92 : f32 to vector<1x6xf32>
    %233 = arith.addf %231, %232 : vector<1x6xf32>
    %234 = math.rsqrt %233 : vector<1x6xf32>
    %cst_93 = arith.constant dense<0.000000e+00> : vector<1x84xf32>
    %235 = tpu.matmul %234, %41, %cst_93 {dimension_numbers = #tpu.dot_dimension_numbers<[1], [0], [0], [1], [0, 0, 1, 1], [], []>} : vector<1x6xf32>, vector<6x84xf32>, vector<1x84xf32> -> vector<1x84xf32>
    %236 = arith.mulf %2, %235 : vector<1x84xf32>
    %cst_94 = arith.constant dense<0.000000e+00> : vector<1x84xf32>
    %237 = tpu.matmul %226, %41, %cst_94 {dimension_numbers = #tpu.dot_dimension_numbers<[1], [0], [0], [1], [0, 0, 1, 1], [], []>} : vector<1x6xf32>, vector<6x84xf32>, vector<1x84xf32> -> vector<1x84xf32>
    %238 = arith.mulf %237, %236 : vector<1x84xf32>
    %239 = arith.subf %3, %238 : vector<1x84xf32>
    %cst_95 = arith.constant 0.000000e+00 : f32
    %240 = vector.broadcast %cst_95 : f32 to vector<1x160xf32>
    %cst_96 = arith.constant 0.000000e+00 : f32
    %241 = vector.broadcast %cst_96 : f32 to vector<1x160xf32>
    %cst_97 = arith.constant dense<0.000000e+00> : vector<14x168xf32>
    %242 = tpu.matmul %52, %179, %cst_97 {dimension_numbers = #tpu.dot_dimension_numbers<[1], [0], [0], [1], [0, 0, 1, 1], [], []>} : vector<14x28xf32>, vector<28x168xf32>, vector<14x168xf32> -> vector<14x168xf32>
    %cst_98 = arith.constant dense<0.000000e+00> : vector<14x84xf32>
    %243 = tpu.matmul %242, %80, %cst_98 {dimension_numbers = #tpu.dot_dimension_numbers<[1], [0], [0], [1], [0, 0, 1, 1], [], []>} : vector<14x168xf32>, vector<168x84xf32>, vector<14x84xf32> -> vector<14x84xf32>
    %244 = vector.broadcast %236 : vector<1x84xf32> to vector<14x84xf32>
    %245 = arith.mulf %243, %244 : vector<14x84xf32>
    %246 = vector.broadcast %239 : vector<1x84xf32> to vector<14x84xf32>
    %247 = arith.addf %245, %246 : vector<14x84xf32>
    %248 = vector.extract_strided_slice %247 {offsets = [0, 0], sizes = [10, 84], strides = [1, 1]} : vector<14x84xf32> to vector<10x84xf32>
    %c0_99 = arith.constant 0 : index
    %c0_100 = arith.constant 0 : index
    %c0_101 = arith.constant 0 : index
    %249 = vector.load %arg2[%c0_99, %c0_100, %c0_101] : memref<5x84x160xf32, #tpu.memory_space<vmem>>, vector<1x84x160xf32>
    %250 = vector.shape_cast %249 : vector<1x84x160xf32> to vector<84x160xf32>
    %cst_102 = arith.constant dense<0.000000e+00> : vector<10x160xf32>
    %251 = tpu.matmul %248, %250, %cst_102 {dimension_numbers = #tpu.dot_dimension_numbers<[1], [0], [0], [1], [0, 0, 1, 1], [], []>} : vector<10x84xf32>, vector<84x160xf32>, vector<10x160xf32> -> vector<10x160xf32>
    %252 = vector.extract_strided_slice %247 {offsets = [1, 0], sizes = [10, 84], strides = [1, 1]} : vector<14x84xf32> to vector<10x84xf32>
    %c1_103 = arith.constant 1 : index
    %c0_104 = arith.constant 0 : index
    %c0_105 = arith.constant 0 : index
    %253 = vector.load %arg2[%c1_103, %c0_104, %c0_105] : memref<5x84x160xf32, #tpu.memory_space<vmem>>, vector<1x84x160xf32>
    %254 = vector.shape_cast %253 : vector<1x84x160xf32> to vector<84x160xf32>
    %cst_106 = arith.constant dense<0.000000e+00> : vector<10x160xf32>
    %255 = tpu.matmul %252, %254, %cst_106 {dimension_numbers = #tpu.dot_dimension_numbers<[1], [0], [0], [1], [0, 0, 1, 1], [], []>} : vector<10x84xf32>, vector<84x160xf32>, vector<10x160xf32> -> vector<10x160xf32>
    %256 = arith.addf %251, %255 : vector<10x160xf32>
    %257 = vector.extract_strided_slice %247 {offsets = [2, 0], sizes = [10, 84], strides = [1, 1]} : vector<14x84xf32> to vector<10x84xf32>
    %c2_107 = arith.constant 2 : index
    %c0_108 = arith.constant 0 : index
    %c0_109 = arith.constant 0 : index
    %258 = vector.load %arg2[%c2_107, %c0_108, %c0_109] : memref<5x84x160xf32, #tpu.memory_space<vmem>>, vector<1x84x160xf32>
    %259 = vector.shape_cast %258 : vector<1x84x160xf32> to vector<84x160xf32>
    %cst_110 = arith.constant dense<0.000000e+00> : vector<10x160xf32>
    %260 = tpu.matmul %257, %259, %cst_110 {dimension_numbers = #tpu.dot_dimension_numbers<[1], [0], [0], [1], [0, 0, 1, 1], [], []>} : vector<10x84xf32>, vector<84x160xf32>, vector<10x160xf32> -> vector<10x160xf32>
    %261 = arith.addf %256, %260 : vector<10x160xf32>
    %262 = vector.extract_strided_slice %247 {offsets = [3, 0], sizes = [10, 84], strides = [1, 1]} : vector<14x84xf32> to vector<10x84xf32>
    %c3_111 = arith.constant 3 : index
    %c0_112 = arith.constant 0 : index
    %c0_113 = arith.constant 0 : index
    %263 = vector.load %arg2[%c3_111, %c0_112, %c0_113] : memref<5x84x160xf32, #tpu.memory_space<vmem>>, vector<1x84x160xf32>
    %264 = vector.shape_cast %263 : vector<1x84x160xf32> to vector<84x160xf32>
    %cst_114 = arith.constant dense<0.000000e+00> : vector<10x160xf32>
    %265 = tpu.matmul %262, %264, %cst_114 {dimension_numbers = #tpu.dot_dimension_numbers<[1], [0], [0], [1], [0, 0, 1, 1], [], []>} : vector<10x84xf32>, vector<84x160xf32>, vector<10x160xf32> -> vector<10x160xf32>
    %266 = arith.addf %261, %265 : vector<10x160xf32>
    %267 = vector.extract_strided_slice %247 {offsets = [4, 0], sizes = [10, 84], strides = [1, 1]} : vector<14x84xf32> to vector<10x84xf32>
    %c4_115 = arith.constant 4 : index
    %c0_116 = arith.constant 0 : index
    %c0_117 = arith.constant 0 : index
    %268 = vector.load %arg2[%c4_115, %c0_116, %c0_117] : memref<5x84x160xf32, #tpu.memory_space<vmem>>, vector<1x84x160xf32>
    %269 = vector.shape_cast %268 : vector<1x84x160xf32> to vector<84x160xf32>
    %cst_118 = arith.constant dense<0.000000e+00> : vector<10x160xf32>
    %270 = tpu.matmul %267, %269, %cst_118 {dimension_numbers = #tpu.dot_dimension_numbers<[1], [0], [0], [1], [0, 0, 1, 1], [], []>} : vector<10x84xf32>, vector<84x160xf32>, vector<10x160xf32> -> vector<10x160xf32>
    %271 = arith.addf %266, %270 : vector<10x160xf32>
    %272 = vector.broadcast %4 : vector<1x160xf32> to vector<10x160xf32>
    %273 = arith.addf %271, %272 : vector<10x160xf32>
    %cst_119 = arith.constant 0.000000e+00 : f32
    %274 = vector.broadcast %cst_119 : f32 to vector<10x160xf32>
    %275 = arith.maximumf %273, %274 : vector<10x160xf32>
    %cst_120 = arith.constant dense<0.000000e+00> : vector<160xf32>
    %276 = vector.multi_reduction <add>, %275, %cst_120 [0] : vector<10x160xf32> to vector<160xf32>
    %277 = vector.shape_cast %276 : vector<160xf32> to vector<1x160xf32>
    %278 = arith.addf %240, %277 : vector<1x160xf32>
    %279 = arith.mulf %275, %275 : vector<10x160xf32>
    %cst_121 = arith.constant dense<0.000000e+00> : vector<160xf32>
    %280 = vector.multi_reduction <add>, %279, %cst_121 [0] : vector<10x160xf32> to vector<160xf32>
    %281 = vector.shape_cast %280 : vector<160xf32> to vector<1x160xf32>
    %282 = arith.addf %241, %281 : vector<1x160xf32>
    %cst_122 = arith.constant dense<0.000000e+00> : vector<14x168xf32>
    %283 = tpu.matmul %52, %216, %cst_122 {dimension_numbers = #tpu.dot_dimension_numbers<[1], [0], [0], [1], [0, 0, 1, 1], [], []>} : vector<14x28xf32>, vector<28x168xf32>, vector<14x168xf32> -> vector<14x168xf32>
    %cst_123 = arith.constant dense<0.000000e+00> : vector<14x84xf32>
    %284 = tpu.matmul %283, %80, %cst_123 {dimension_numbers = #tpu.dot_dimension_numbers<[1], [0], [0], [1], [0, 0, 1, 1], [], []>} : vector<14x168xf32>, vector<168x84xf32>, vector<14x84xf32> -> vector<14x84xf32>
    %285 = vector.broadcast %236 : vector<1x84xf32> to vector<14x84xf32>
    %286 = arith.mulf %284, %285 : vector<14x84xf32>
    %287 = vector.broadcast %239 : vector<1x84xf32> to vector<14x84xf32>
    %288 = arith.addf %286, %287 : vector<14x84xf32>
    %289 = vector.extract_strided_slice %288 {offsets = [0, 0], sizes = [10, 84], strides = [1, 1]} : vector<14x84xf32> to vector<10x84xf32>
    %c0_124 = arith.constant 0 : index
    %c0_125 = arith.constant 0 : index
    %c0_126 = arith.constant 0 : index
    %290 = vector.load %arg2[%c0_124, %c0_125, %c0_126] : memref<5x84x160xf32, #tpu.memory_space<vmem>>, vector<1x84x160xf32>
    %291 = vector.shape_cast %290 : vector<1x84x160xf32> to vector<84x160xf32>
    %cst_127 = arith.constant dense<0.000000e+00> : vector<10x160xf32>
    %292 = tpu.matmul %289, %291, %cst_127 {dimension_numbers = #tpu.dot_dimension_numbers<[1], [0], [0], [1], [0, 0, 1, 1], [], []>} : vector<10x84xf32>, vector<84x160xf32>, vector<10x160xf32> -> vector<10x160xf32>
    %293 = vector.extract_strided_slice %288 {offsets = [1, 0], sizes = [10, 84], strides = [1, 1]} : vector<14x84xf32> to vector<10x84xf32>
    %c1_128 = arith.constant 1 : index
    %c0_129 = arith.constant 0 : index
    %c0_130 = arith.constant 0 : index
    %294 = vector.load %arg2[%c1_128, %c0_129, %c0_130] : memref<5x84x160xf32, #tpu.memory_space<vmem>>, vector<1x84x160xf32>
    %295 = vector.shape_cast %294 : vector<1x84x160xf32> to vector<84x160xf32>
    %cst_131 = arith.constant dense<0.000000e+00> : vector<10x160xf32>
    %296 = tpu.matmul %293, %295, %cst_131 {dimension_numbers = #tpu.dot_dimension_numbers<[1], [0], [0], [1], [0, 0, 1, 1], [], []>} : vector<10x84xf32>, vector<84x160xf32>, vector<10x160xf32> -> vector<10x160xf32>
    %297 = arith.addf %292, %296 : vector<10x160xf32>
    %298 = vector.extract_strided_slice %288 {offsets = [2, 0], sizes = [10, 84], strides = [1, 1]} : vector<14x84xf32> to vector<10x84xf32>
    %c2_132 = arith.constant 2 : index
    %c0_133 = arith.constant 0 : index
    %c0_134 = arith.constant 0 : index
    %299 = vector.load %arg2[%c2_132, %c0_133, %c0_134] : memref<5x84x160xf32, #tpu.memory_space<vmem>>, vector<1x84x160xf32>
    %300 = vector.shape_cast %299 : vector<1x84x160xf32> to vector<84x160xf32>
    %cst_135 = arith.constant dense<0.000000e+00> : vector<10x160xf32>
    %301 = tpu.matmul %298, %300, %cst_135 {dimension_numbers = #tpu.dot_dimension_numbers<[1], [0], [0], [1], [0, 0, 1, 1], [], []>} : vector<10x84xf32>, vector<84x160xf32>, vector<10x160xf32> -> vector<10x160xf32>
    %302 = arith.addf %297, %301 : vector<10x160xf32>
    %303 = vector.extract_strided_slice %288 {offsets = [3, 0], sizes = [10, 84], strides = [1, 1]} : vector<14x84xf32> to vector<10x84xf32>
    %c3_136 = arith.constant 3 : index
    %c0_137 = arith.constant 0 : index
    %c0_138 = arith.constant 0 : index
    %304 = vector.load %arg2[%c3_136, %c0_137, %c0_138] : memref<5x84x160xf32, #tpu.memory_space<vmem>>, vector<1x84x160xf32>
    %305 = vector.shape_cast %304 : vector<1x84x160xf32> to vector<84x160xf32>
    %cst_139 = arith.constant dense<0.000000e+00> : vector<10x160xf32>
    %306 = tpu.matmul %303, %305, %cst_139 {dimension_numbers = #tpu.dot_dimension_numbers<[1], [0], [0], [1], [0, 0, 1, 1], [], []>} : vector<10x84xf32>, vector<84x160xf32>, vector<10x160xf32> -> vector<10x160xf32>
    %307 = arith.addf %302, %306 : vector<10x160xf32>
    %308 = vector.extract_strided_slice %288 {offsets = [4, 0], sizes = [10, 84], strides = [1, 1]} : vector<14x84xf32> to vector<10x84xf32>
    %c4_140 = arith.constant 4 : index
    %c0_141 = arith.constant 0 : index
    %c0_142 = arith.constant 0 : index
    %309 = vector.load %arg2[%c4_140, %c0_141, %c0_142] : memref<5x84x160xf32, #tpu.memory_space<vmem>>, vector<1x84x160xf32>
    %310 = vector.shape_cast %309 : vector<1x84x160xf32> to vector<84x160xf32>
    %cst_143 = arith.constant dense<0.000000e+00> : vector<10x160xf32>
    %311 = tpu.matmul %308, %310, %cst_143 {dimension_numbers = #tpu.dot_dimension_numbers<[1], [0], [0], [1], [0, 0, 1, 1], [], []>} : vector<10x84xf32>, vector<84x160xf32>, vector<10x160xf32> -> vector<10x160xf32>
    %312 = arith.addf %307, %311 : vector<10x160xf32>
    %313 = vector.broadcast %4 : vector<1x160xf32> to vector<10x160xf32>
    %314 = arith.addf %312, %313 : vector<10x160xf32>
    %cst_144 = arith.constant 0.000000e+00 : f32
    %315 = vector.broadcast %cst_144 : f32 to vector<10x160xf32>
    %316 = arith.maximumf %314, %315 : vector<10x160xf32>
    %cst_145 = arith.constant dense<0.000000e+00> : vector<160xf32>
    %317 = vector.multi_reduction <add>, %316, %cst_145 [0] : vector<10x160xf32> to vector<160xf32>
    %318 = vector.shape_cast %317 : vector<160xf32> to vector<1x160xf32>
    %319 = arith.addf %278, %318 : vector<1x160xf32>
    %320 = arith.mulf %316, %316 : vector<10x160xf32>
    %cst_146 = arith.constant dense<0.000000e+00> : vector<160xf32>
    %321 = vector.multi_reduction <add>, %320, %cst_146 [0] : vector<10x160xf32> to vector<160xf32>
    %322 = vector.shape_cast %321 : vector<160xf32> to vector<1x160xf32>
    %323 = arith.addf %282, %322 : vector<1x160xf32>
    %cst_147 = arith.constant dense<0.000000e+00> : vector<1x16xf32>
    %324 = tpu.matmul %319, %94, %cst_147 {dimension_numbers = #tpu.dot_dimension_numbers<[1], [0], [0], [1], [0, 0, 1, 1], [], []>} : vector<1x160xf32>, vector<160x16xf32>, vector<1x16xf32> -> vector<1x16xf32>
    %cst_148 = arith.constant 2.000000e+02 : f32
    %325 = vector.broadcast %cst_148 : f32 to vector<1x16xf32>
    %326 = arith.divf %324, %325 : vector<1x16xf32>
    %cst_149 = arith.constant dense<0.000000e+00> : vector<1x16xf32>
    %327 = tpu.matmul %323, %94, %cst_149 {dimension_numbers = #tpu.dot_dimension_numbers<[1], [0], [0], [1], [0, 0, 1, 1], [], []>} : vector<1x160xf32>, vector<160x16xf32>, vector<1x16xf32> -> vector<1x16xf32>
    %cst_150 = arith.constant 2.000000e+02 : f32
    %328 = vector.broadcast %cst_150 : f32 to vector<1x16xf32>
    %329 = arith.divf %327, %328 : vector<1x16xf32>
    %330 = arith.mulf %326, %326 : vector<1x16xf32>
    %331 = arith.subf %329, %330 : vector<1x16xf32>
    %cst_151 = arith.constant 9.99999974E-6 : f32
    %332 = vector.broadcast %cst_151 : f32 to vector<1x16xf32>
    %333 = arith.addf %331, %332 : vector<1x16xf32>
    %334 = math.rsqrt %333 : vector<1x16xf32>
    %cst_152 = arith.constant dense<0.000000e+00> : vector<1x80xf32>
    %335 = tpu.matmul %334, %108, %cst_152 {dimension_numbers = #tpu.dot_dimension_numbers<[1], [0], [0], [1], [0, 0, 1, 1], [], []>} : vector<1x16xf32>, vector<16x80xf32>, vector<1x80xf32> -> vector<1x80xf32>
    %336 = arith.mulf %5, %335 : vector<1x80xf32>
    %cst_153 = arith.constant dense<0.000000e+00> : vector<1x80xf32>
    %337 = tpu.matmul %326, %108, %cst_153 {dimension_numbers = #tpu.dot_dimension_numbers<[1], [0], [0], [1], [0, 0, 1, 1], [], []>} : vector<1x16xf32>, vector<16x80xf32>, vector<1x80xf32> -> vector<1x80xf32>
    %338 = arith.mulf %337, %336 : vector<1x80xf32>
    %339 = arith.subf %6, %338 : vector<1x80xf32>
    %cst_154 = arith.constant dense<0.000000e+00> : vector<5x160xf32>
    %340 = tpu.matmul %119, %275, %cst_154 {dimension_numbers = #tpu.dot_dimension_numbers<[1], [0], [0], [1], [0, 0, 1, 1], [], []>} : vector<5x10xf32>, vector<10x160xf32>, vector<5x160xf32> -> vector<5x160xf32>
    %cst_155 = arith.constant dense<0.000000e+00> : vector<5x80xf32>
    %341 = tpu.matmul %340, %147, %cst_155 {dimension_numbers = #tpu.dot_dimension_numbers<[1], [0], [0], [1], [0, 0, 1, 1], [], []>} : vector<5x160xf32>, vector<160x80xf32>, vector<5x80xf32> -> vector<5x80xf32>
    %342 = vector.broadcast %336 : vector<1x80xf32> to vector<5x80xf32>
    %343 = arith.mulf %341, %342 : vector<5x80xf32>
    %344 = vector.broadcast %339 : vector<1x80xf32> to vector<5x80xf32>
    %345 = arith.addf %343, %344 : vector<5x80xf32>
    %346 = vector.extract_strided_slice %345 {offsets = [0, 0], sizes = [1, 80], strides = [1, 1]} : vector<5x80xf32> to vector<1x80xf32>
    %347 = vector.extract_strided_slice %345 {offsets = [1, 0], sizes = [1, 80], strides = [1, 1]} : vector<5x80xf32> to vector<1x80xf32>
    %348 = vector.extract_strided_slice %345 {offsets = [2, 0], sizes = [1, 80], strides = [1, 1]} : vector<5x80xf32> to vector<1x80xf32>
    %349 = vector.extract_strided_slice %345 {offsets = [3, 0], sizes = [1, 80], strides = [1, 1]} : vector<5x80xf32> to vector<1x80xf32>
    %350 = vector.extract_strided_slice %345 {offsets = [4, 0], sizes = [1, 80], strides = [1, 1]} : vector<5x80xf32> to vector<1x80xf32>
    %351 = tpu.concatenate %346, %347, %348, %349, %350 in 1 : vector<1x80xf32>, vector<1x80xf32>, vector<1x80xf32>, vector<1x80xf32>, vector<1x80xf32> -> vector<1x400xf32>
    %cst_156 = arith.constant dense<0.000000e+00> : vector<5x160xf32>
    %352 = tpu.matmul %119, %316, %cst_156 {dimension_numbers = #tpu.dot_dimension_numbers<[1], [0], [0], [1], [0, 0, 1, 1], [], []>} : vector<5x10xf32>, vector<10x160xf32>, vector<5x160xf32> -> vector<5x160xf32>
    %cst_157 = arith.constant dense<0.000000e+00> : vector<5x80xf32>
    %353 = tpu.matmul %352, %147, %cst_157 {dimension_numbers = #tpu.dot_dimension_numbers<[1], [0], [0], [1], [0, 0, 1, 1], [], []>} : vector<5x160xf32>, vector<160x80xf32>, vector<5x80xf32> -> vector<5x80xf32>
    %354 = vector.broadcast %336 : vector<1x80xf32> to vector<5x80xf32>
    %355 = arith.mulf %353, %354 : vector<5x80xf32>
    %356 = vector.broadcast %339 : vector<1x80xf32> to vector<5x80xf32>
    %357 = arith.addf %355, %356 : vector<5x80xf32>
    %358 = vector.extract_strided_slice %357 {offsets = [0, 0], sizes = [1, 80], strides = [1, 1]} : vector<5x80xf32> to vector<1x80xf32>
    %359 = vector.extract_strided_slice %357 {offsets = [1, 0], sizes = [1, 80], strides = [1, 1]} : vector<5x80xf32> to vector<1x80xf32>
    %360 = vector.extract_strided_slice %357 {offsets = [2, 0], sizes = [1, 80], strides = [1, 1]} : vector<5x80xf32> to vector<1x80xf32>
    %361 = vector.extract_strided_slice %357 {offsets = [3, 0], sizes = [1, 80], strides = [1, 1]} : vector<5x80xf32> to vector<1x80xf32>
    %362 = vector.extract_strided_slice %357 {offsets = [4, 0], sizes = [1, 80], strides = [1, 1]} : vector<5x80xf32> to vector<1x80xf32>
    %363 = tpu.concatenate %358, %359, %360, %361, %362 in 1 : vector<1x80xf32>, vector<1x80xf32>, vector<1x80xf32>, vector<1x80xf32>, vector<1x80xf32> -> vector<1x400xf32>
    %364 = tpu.concatenate %351, %363 in 0 : vector<1x400xf32>, vector<1x400xf32> -> vector<2x400xf32>
    %c0_158 = arith.constant 0 : index
    %c0_159 = arith.constant 0 : index
    %365 = vector.load %arg4[%c0_158, %c0_159] : memref<400x256xf32, #tpu.memory_space<vmem>>, vector<400x256xf32>
    %cst_160 = arith.constant dense<0.000000e+00> : vector<2x256xf32>
    %366 = tpu.matmul %364, %365, %cst_160 {dimension_numbers = #tpu.dot_dimension_numbers<[1], [0], [0], [1], [0, 0, 1, 1], [], []>} : vector<2x400xf32>, vector<400x256xf32>, vector<2x256xf32> -> vector<2x256xf32>
    %367 = vector.broadcast %7 : vector<1x256xf32> to vector<2x256xf32>
    %368 = arith.addf %366, %367 : vector<2x256xf32>
    %cst_161 = arith.constant 0.000000e+00 : f32
    %369 = vector.broadcast %cst_161 : f32 to vector<2x256xf32>
    %370 = arith.maximumf %368, %369 : vector<2x256xf32>
    %cst_162 = arith.constant dense<0.000000e+00> : vector<256xf32>
    %371 = vector.multi_reduction <add>, %370, %cst_162 [0] : vector<2x256xf32> to vector<256xf32>
    %372 = vector.shape_cast %371 : vector<256xf32> to vector<1x256xf32>
    %cst_163 = arith.constant 2.000000e+00 : f32
    %373 = vector.broadcast %cst_163 : f32 to vector<1x256xf32>
    %374 = arith.divf %372, %373 : vector<1x256xf32>
    %375 = vector.broadcast %374 : vector<1x256xf32> to vector<2x256xf32>
    %376 = arith.subf %370, %375 : vector<2x256xf32>
    %377 = vector.broadcast %374 : vector<1x256xf32> to vector<2x256xf32>
    %378 = arith.subf %370, %377 : vector<2x256xf32>
    %379 = arith.mulf %376, %378 : vector<2x256xf32>
    %cst_164 = arith.constant dense<0.000000e+00> : vector<256xf32>
    %380 = vector.multi_reduction <add>, %379, %cst_164 [0] : vector<2x256xf32> to vector<256xf32>
    %381 = vector.shape_cast %380 : vector<256xf32> to vector<1x256xf32>
    %cst_165 = arith.constant 2.000000e+00 : f32
    %382 = vector.broadcast %cst_165 : f32 to vector<1x256xf32>
    %383 = arith.divf %381, %382 : vector<1x256xf32>
    %384 = vector.broadcast %374 : vector<1x256xf32> to vector<2x256xf32>
    %385 = arith.subf %370, %384 : vector<2x256xf32>
    %cst_166 = arith.constant 9.99999974E-6 : f32
    %386 = vector.broadcast %cst_166 : f32 to vector<1x256xf32>
    %387 = arith.addf %383, %386 : vector<1x256xf32>
    %388 = math.rsqrt %387 : vector<1x256xf32>
    %389 = vector.broadcast %388 : vector<1x256xf32> to vector<2x256xf32>
    %390 = arith.mulf %385, %389 : vector<2x256xf32>
    %391 = vector.broadcast %8 : vector<1x256xf32> to vector<2x256xf32>
    %392 = arith.mulf %390, %391 : vector<2x256xf32>
    %393 = vector.broadcast %9 : vector<1x256xf32> to vector<2x256xf32>
    %394 = arith.addf %392, %393 : vector<2x256xf32>
    %c0_167 = arith.constant 0 : index
    %c0_168 = arith.constant 0 : index
    %395 = vector.load %arg5[%c0_167, %c0_168] : memref<256x64xf32, #tpu.memory_space<vmem>>, vector<256x64xf32>
    %cst_169 = arith.constant dense<0.000000e+00> : vector<2x64xf32>
    %396 = tpu.matmul %394, %395, %cst_169 {dimension_numbers = #tpu.dot_dimension_numbers<[1], [0], [0], [1], [0, 0, 1, 1], [], []>} : vector<2x256xf32>, vector<256x64xf32>, vector<2x64xf32> -> vector<2x64xf32>
    %397 = vector.broadcast %10 : vector<1x64xf32> to vector<2x64xf32>
    %398 = arith.addf %396, %397 : vector<2x64xf32>
    %cst_170 = arith.constant 0.000000e+00 : f32
    %399 = vector.broadcast %cst_170 : f32 to vector<2x64xf32>
    %400 = arith.maximumf %398, %399 : vector<2x64xf32>
    %cst_171 = arith.constant dense<0.000000e+00> : vector<64xf32>
    %401 = vector.multi_reduction <add>, %400, %cst_171 [0] : vector<2x64xf32> to vector<64xf32>
    %402 = vector.shape_cast %401 : vector<64xf32> to vector<1x64xf32>
    %cst_172 = arith.constant 2.000000e+00 : f32
    %403 = vector.broadcast %cst_172 : f32 to vector<1x64xf32>
    %404 = arith.divf %402, %403 : vector<1x64xf32>
    %405 = vector.broadcast %404 : vector<1x64xf32> to vector<2x64xf32>
    %406 = arith.subf %400, %405 : vector<2x64xf32>
    %407 = vector.broadcast %404 : vector<1x64xf32> to vector<2x64xf32>
    %408 = arith.subf %400, %407 : vector<2x64xf32>
    %409 = arith.mulf %406, %408 : vector<2x64xf32>
    %cst_173 = arith.constant dense<0.000000e+00> : vector<64xf32>
    %410 = vector.multi_reduction <add>, %409, %cst_173 [0] : vector<2x64xf32> to vector<64xf32>
    %411 = vector.shape_cast %410 : vector<64xf32> to vector<1x64xf32>
    %cst_174 = arith.constant 2.000000e+00 : f32
    %412 = vector.broadcast %cst_174 : f32 to vector<1x64xf32>
    %413 = arith.divf %411, %412 : vector<1x64xf32>
    %414 = vector.broadcast %404 : vector<1x64xf32> to vector<2x64xf32>
    %415 = arith.subf %400, %414 : vector<2x64xf32>
    %cst_175 = arith.constant 9.99999974E-6 : f32
    %416 = vector.broadcast %cst_175 : f32 to vector<1x64xf32>
    %417 = arith.addf %413, %416 : vector<1x64xf32>
    %418 = math.rsqrt %417 : vector<1x64xf32>
    %419 = vector.broadcast %418 : vector<1x64xf32> to vector<2x64xf32>
    %420 = arith.mulf %415, %419 : vector<2x64xf32>
    %421 = vector.broadcast %11 : vector<1x64xf32> to vector<2x64xf32>
    %422 = arith.mulf %420, %421 : vector<2x64xf32>
    %423 = vector.broadcast %12 : vector<1x64xf32> to vector<2x64xf32>
    %424 = arith.addf %422, %423 : vector<2x64xf32>
    %c0_176 = arith.constant 0 : index
    %c0_177 = arith.constant 0 : index
    %425 = vector.load %arg6[%c0_176, %c0_177] : memref<64x10xf32, #tpu.memory_space<vmem>>, vector<64x10xf32>
    %cst_178 = arith.constant dense<0.000000e+00> : vector<2x10xf32>
    %426 = tpu.matmul %424, %425, %cst_178 {dimension_numbers = #tpu.dot_dimension_numbers<[1], [0], [0], [1], [0, 0, 1, 1], [], []>} : vector<2x64xf32>, vector<64x10xf32>, vector<2x10xf32> -> vector<2x10xf32>
    %427 = vector.broadcast %13 : vector<1x10xf32> to vector<2x10xf32>
    %428 = arith.addf %426, %427 : vector<2x10xf32>
    %c0_179 = arith.constant 0 : index
    %c0_180 = arith.constant 0 : index
    %429 = vector.load %arg7[%c0_179, %c0_180] : memref<2x10xf32, #tpu.memory_space<vmem>>, vector<2x10xf32>
    tpu.vector_store %arg7[%c0_179, %c0_180], %428 {strides = array<i32>} : memref<2x10xf32, #tpu.memory_space<vmem>>, vector<2x10xf32>,
    return
  }
}

</mosaic_0001>

<llo_original>
// kernel: lenet_batchnorm_forward.1
$region0: #{lenet_batchnorm_forward.1}
  #allocation0 [shape = 'u32[]', space=smem, size = 0x4, offset = 0x4, fixed_abs, tag = 'smem constant byte address 0x4 - core index']
  #allocation1 [shape = 'u32[144,128]{1,0:T(1,128)}', space=vmem, size = 0x12000, scoped, tag = 'internal scratch']
  %s0 = inlined_call_operand.vmem [shape: f32[2,32,32], index: 0, kind: input, shape index: {}]
  %s1 = inlined_call_operand.vmem [shape: f32[5,32,168], index: 1, kind: input, shape index: {}]
  %s2 = inlined_call_operand.vmem [shape: f32[5,84,160], index: 2, kind: input, shape index: {}]
  %s3 = inlined_call_operand.vmem [shape: f32[13,256], index: 3, kind: input, shape index: {}]
  %s4 = inlined_call_operand.vmem [shape: f32[400,256], index: 4, kind: input, shape index: {}]
  %s5 = inlined_call_operand.vmem [shape: f32[256,64], index: 5, kind: input, shape index: {}]
  %s6 = inlined_call_operand.vmem [shape: f32[64,10], index: 6, kind: input, shape index: {}]
  %s7 = inlined_call_operand.hbm [shape: f32[2,10], index: 7, kind: output, shape index: {}]
  %s8 = sld [smem:[#allocation0]]
  $region38: #{lenet_batchnorm_forward.1} parent=0
    _
  %s10 = ssub.s32 1, %s8
  %s11 = scalar_select 0, %s10, %s8
  $region1: #{lenet_batchnorm_forward.1} parent=0
    #allocation2 [shape = 'u8[1024]{0}', space=vmem, size = 0x400, scoped, tag = 'output window, operand 0, single buffered']
    #allocation3 [shape = 's32[1]{0}', space=sflag, size = 0x4, scoped, tag = 'scoped memory for lenet_batchnorm_forward.1']
    %12 = vsyncpa [#allocation3], 0
    // Predicated region
    $region2: #{lenet_batchnorm_forward.1} parent=1 // pred_check
      _
    $region3: #{lenet_batchnorm_forward.1} parent=1 // pred_check_branch
      %14 = sbr.rel (0) target = $region5
    $region4: #{lenet_batchnorm_forward.1} parent=1 // pred_region
      _
    $region5: #{lenet_batchnorm_forward.1} parent=1 // pred_fallthru
      _
    // Predicated region
    $region6: #{lenet_batchnorm_forward.1} parent=1 // pred_check
      _
    $region7: #{lenet_batchnorm_forward.1} parent=1 // pred_check_branch
      %16 = sbr.rel (0) target = $region9
    $region8: #{lenet_batchnorm_forward.1} parent=1 // pred_region
      _
    $region9: #{lenet_batchnorm_forward.1} parent=1 // pred_fallthru
      _
    // Predicated region
    $region10: #{lenet_batchnorm_forward.1} parent=1 // pred_check
      _
    $region11: #{lenet_batchnorm_forward.1} parent=1 // pred_check_branch
      %18 = sbr.rel (0) target = $region13
    $region12: #{lenet_batchnorm_forward.1} parent=1 // pred_region
      _
    $region13: #{lenet_batchnorm_forward.1} parent=1 // pred_fallthru
      _
    // Predicated region
    $region14: #{lenet_batchnorm_forward.1} parent=1 // pred_check
      _
    $region15: #{lenet_batchnorm_forward.1} parent=1 // pred_check_branch
      %20 = sbr.rel (0) target = $region17
    $region16: #{lenet_batchnorm_forward.1} parent=1 // pred_region
      _
    $region17: #{lenet_batchnorm_forward.1} parent=1 // pred_fallthru
      _
    // Predicated region
    $region18: #{lenet_batchnorm_forward.1} parent=1 // pred_check
      _
    $region19: #{lenet_batchnorm_forward.1} parent=1 // pred_check_branch
      %22 = sbr.rel (0) target = $region21
    $region20: #{lenet_batchnorm_forward.1} parent=1 // pred_region
      _
    $region21: #{lenet_batchnorm_forward.1} parent=1 // pred_fallthru
      _
    // Predicated region
    $region22: #{lenet_batchnorm_forward.1} parent=1 // pred_check
      _
    $region23: #{lenet_batchnorm_forward.1} parent=1 // pred_check_branch
      %24 = sbr.rel (0) target = $region25
    $region24: #{lenet_batchnorm_forward.1} parent=1 // pred_region
      _
    $region25: #{lenet_batchnorm_forward.1} parent=1 // pred_fallthru
      _
    // Predicated region
    $region26: #{lenet_batchnorm_forward.1} parent=1 // pred_check
      _
    $region27: #{lenet_batchnorm_forward.1} parent=1 // pred_check_branch
      %26 = sbr.rel (0) target = $region29
    $region28: #{lenet_batchnorm_forward.1} parent=1 // pred_region
      _
    $region29: #{lenet_batchnorm_forward.1} parent=1 // pred_fallthru
      _
    %v27 = vld [vmem:[%s3] sm:$0xff]
    %v28 = vld [vmem:[%s3 + $0x8] sm:$0xff]
    %v29 = vld [vmem:[%s3 + $0x10] sm:$0x1f]
    %v30 = vld [vmem:[%s3 + $0x18] sm:$0x1f]
    %v31 = vlaneseq
    %v32 = vshrl.u32 %v31, 7
    %v33 = vadd.s32 %v32, 8
    %v34 = vadd.s32 %v32, 16
    %v35 = vadd.s32 %v32, 24
    %v36 = vadd.s32 %v32, 32
    %v37 = vadd.s32 %v32, 40
    %v38 = vadd.s32 %v32, 48
    %v39 = vadd.s32 %v32, 56
    %v40 = vadd.s32 %v32, 64
    %v41 = vadd.s32 %v32, 72
    %v42 = vadd.s32 %v32, 80
    %v43 = vadd.s32 %v32, 88
    %v44 = vadd.s32 %v32, 96
    %v45 = vadd.s32 %v32, 104
    %v46 = vadd.s32 %v32, 112
    %v47 = vadd.s32 %v32, 120
    %v48 = vadd.s32 %v32, 128
    %v49 = vadd.s32 %v32, 136
    %v50 = vadd.s32 %v32, 144
    %v51 = vadd.s32 %v32, 152
    %v52 = vadd.s32 %v32, 160
    %v53 = vcvt.s32.f32 %v32
    %v54 = vcvt.s32.f32 %v33
    %v55 = vcvt.s32.f32 %v34
    %v56 = vcvt.s32.f32 %v35
    %v57 = vcvt.s32.f32 %v36
    %v58 = vcvt.s32.f32 %v37
    %v59 = vcvt.s32.f32 %v38
    %v60 = vcvt.s32.f32 %v39
    %v61 = vcvt.s32.f32 %v40
    %v62 = vcvt.s32.f32 %v41
    %v63 = vcvt.s32.f32 %v42
    %v64 = vcvt.s32.f32 %v43
    %v65 = vcvt.s32.f32 %v44
    %v66 = vcvt.s32.f32 %v45
    %v67 = vcvt.s32.f32 %v46
    %v68 = vcvt.s32.f32 %v47
    %v69 = vcvt.s32.f32 %v48
    %v70 = vcvt.s32.f32 %v49
    %v71 = vcvt.s32.f32 %v50
    %v72 = vcvt.s32.f32 %v51
    %v73 = vcvt.s32.f32 %v52
    %v74 = vrcp.pop 6.0
    %v75 = vmul.f32 %v53, %v74
    %v76 = vmul.f32 %v54, %v74
    %v77 = vmul.f32 %v55, %v74
    %v78 = vmul.f32 %v56, %v74
    %v79 = vmul.f32 %v57, %v74
    %v80 = vmul.f32 %v58, %v74
    %v81 = vmul.f32 %v59, %v74
    %v82 = vmul.f32 %v60, %v74
    %v83 = vmul.f32 %v61, %v74
    %v84 = vmul.f32 %v62, %v74
    %v85 = vmul.f32 %v63, %v74
    %v86 = vmul.f32 %v64, %v74
    %v87 = vmul.f32 %v65, %v74
    %v88 = vmul.f32 %v66, %v74
    %v89 = vmul.f32 %v67, %v74
    %v90 = vmul.f32 %v68, %v74
    %v91 = vmul.f32 %v69, %v74
    %v92 = vmul.f32 %v70, %v74
    %v93 = vmul.f32 %v71, %v74
    %v94 = vmul.f32 %v72, %v74
    %v95 = vmul.f32 %v73, %v74
    %v96 = vfloor.f32 %v75
    %v97 = vfloor.f32 %v76
    %v98 = vfloor.f32 %v77
    %v99 = vfloor.f32 %v78
    %v100 = vfloor.f32 %v79
    %v101 = vfloor.f32 %v80
    %v102 = vfloor.f32 %v81
    %v103 = vfloor.f32 %v82
    %v104 = vfloor.f32 %v83
    %v105 = vfloor.f32 %v84
    %v106 = vfloor.f32 %v85
    %v107 = vfloor.f32 %v86
    %v108 = vfloor.f32 %v87
    %v109 = vfloor.f32 %v88
    %v110 = vfloor.f32 %v89
    %v111 = vfloor.f32 %v90
    %v112 = vfloor.f32 %v91
    %v113 = vfloor.f32 %v92
    %v114 = vfloor.f32 %v93
    %v115 = vfloor.f32 %v94
    %v116 = vfloor.f32 %v95
    %v117 = vmul.f32 %v96, 6.0
    %v118 = vmul.f32 %v97, 6.0
    %v119 = vmul.f32 %v98, 6.0
    %v120 = vmul.f32 %v99, 6.0
    %v121 = vmul.f32 %v100, 6.0
    %v122 = vmul.f32 %v101, 6.0
    %v123 = vmul.f32 %v102, 6.0
    %v124 = vmul.f32 %v103, 6.0
    %v125 = vmul.f32 %v104, 6.0
    %v126 = vmul.f32 %v105, 6.0
    %v127 = vmul.f32 %v106, 6.0
    %v128 = vmul.f32 %v107, 6.0
    %v129 = vmul.f32 %v108, 6.0
    %v130 = vmul.f32 %v109, 6.0
    %v131 = vmul.f32 %v110, 6.0
    %v132 = vmul.f32 %v111, 6.0
    %v133 = vmul.f32 %v112, 6.0
    %v134 = vmul.f32 %v113, 6.0
    %v135 = vmul.f32 %v114, 6.0
    %v136 = vmul.f32 %v115, 6.0
    %v137 = vmul.f32 %v116, 6.0
    %v138 = vsub.f32 %v53, %v117
    %v139 = vsub.f32 %v54, %v118
    %v140 = vsub.f32 %v55, %v119
    %v141 = vsub.f32 %v56, %v120
    %v142 = vsub.f32 %v57, %v121
    %v143 = vsub.f32 %v58, %v122
    %v144 = vsub.f32 %v59, %v123
    %v145 = vsub.f32 %v60, %v124
    %v146 = vsub.f32 %v61, %v125
    %v147 = vsub.f32 %v62, %v126
    %v148 = vsub.f32 %v63, %v127
    %v149 = vsub.f32 %v64, %v128
    %v150 = vsub.f32 %v65, %v129
    %v151 = vsub.f32 %v66, %v130
    %v152 = vsub.f32 %v67, %v131
    %v153 = vsub.f32 %v68, %v132
    %v154 = vsub.f32 %v69, %v133
    %v155 = vsub.f32 %v70, %v134
    %v156 = vsub.f32 %v71, %v135
    %v157 = vsub.f32 %v72, %v136
    %v158 = vsub.f32 %v73, %v137
    %v159 = vlaneseq
    %v160 = vand.u32 %v159, 127
    %v161 = vcvt.s32.f32 %v160
    %vm162 = vcmp.eq.f32.partialorder %v138, %v161
    %vm163 = vcmp.eq.f32.partialorder %v139, %v161
    %vm164 = vcmp.eq.f32.partialorder %v140, %v161
    %vm165 = vcmp.eq.f32.partialorder %v141, %v161
    %vm166 = vcmp.eq.f32.partialorder %v142, %v161
    %vm167 = vcmp.eq.f32.partialorder %v143, %v161
    %vm168 = vcmp.eq.f32.partialorder %v144, %v161
    %vm169 = vcmp.eq.f32.partialorder %v145, %v161
    %vm170 = vcmp.eq.f32.partialorder %v146, %v161
    %vm171 = vcmp.eq.f32.partialorder %v147, %v161
    %vm172 = vcmp.eq.f32.partialorder %v148, %v161
    %vm173 = vcmp.eq.f32.partialorder %v149, %v161
    %vm174 = vcmp.eq.f32.partialorder %v150, %v161
    %vm175 = vcmp.eq.f32.partialorder %v151, %v161
    %vm176 = vcmp.eq.f32.partialorder %v152, %v161
    %vm177 = vcmp.eq.f32.partialorder %v153, %v161
    %vm178 = vcmp.eq.f32.partialorder %v154, %v161
    %vm179 = vcmp.eq.f32.partialorder %v155, %v161
    %vm180 = vcmp.eq.f32.partialorder %v156, %v161
    %vm181 = vcmp.eq.f32.partialorder %v157, %v161
    %vm182 = vcmp.eq.f32.partialorder %v158, %v161
    %v183 = vsel %vm162, 1.0, 0.0
    %v184 = vsel %vm163, 1.0, 0.0
    %v185 = vsel %vm164, 1.0, 0.0
    %v186 = vsel %vm165, 1.0, 0.0
    %v187 = vsel %vm166, 1.0, 0.0
    %v188 = vsel %vm167, 1.0, 0.0
    %v189 = vsel %vm168, 1.0, 0.0
    %v190 = vsel %vm169, 1.0, 0.0
    %v191 = vsel %vm170, 1.0, 0.0
    %v192 = vsel %vm171, 1.0, 0.0
    %v193 = vsel %vm172, 1.0, 0.0
    %v194 = vsel %vm173, 1.0, 0.0
    %v195 = vsel %vm174, 1.0, 0.0
    %v196 = vsel %vm175, 1.0, 0.0
    %v197 = vsel %vm176, 1.0, 0.0
    %v198 = vsel %vm177, 1.0, 0.0
    %v199 = vsel %vm178, 1.0, 0.0
    %v200 = vsel %vm179, 1.0, 0.0
    %v201 = vsel %vm180, 1.0, 0.0
    %v202 = vsel %vm181, 1.0, 0.0
    %v203 = vsel %vm182, 1.0, 0.0
    %v204 = vmul.f32 %v161, %v74
    %v205 = vfloor.f32 %v204
    %v206 = vmul.f32 %v205, 6.0
    %v207 = vsub.f32 %v161, %v206
    %vm208 = vcmp.eq.f32.partialorder %v53, %v207
    %v209 = vsel %vm208, 1.0, 0.0
    %v210 = vmul.f32 %v161, 0.5
    %v211 = vfloor.f32 %v210
    %vm212 = vcmp.eq.f32.partialorder %v211, %v53
    %vm213 = vcmp.eq.f32.partialorder %v211, %v54
    %v214 = vsel %vm212, 0.5, 0.0
    %v215 = vsel %vm213, 0.5, 0.0
    %vm216 = vcmp.eq.f32.partialorder %v138, %v207
    %vm217 = vcmp.eq.f32.partialorder %v139, %v207
    %vm218 = vcmp.eq.f32.partialorder %v140, %v207
    %vm219 = vcmp.eq.f32.partialorder %v141, %v207
    %vm220 = vcmp.eq.f32.partialorder %v142, %v207
    %vm221 = vcmp.eq.f32.partialorder %v143, %v207
    %vm222 = vcmp.eq.f32.partialorder %v144, %v207
    %vm223 = vcmp.eq.f32.partialorder %v145, %v207
    %vm224 = vcmp.eq.f32.partialorder %v146, %v207
    %vm225 = vcmp.eq.f32.partialorder %v147, %v207
    %vm226 = vcmp.eq.f32.partialorder %v148, %v207
    %vm227 = vcmp.eq.f32.partialorder %v149, %v207
    %vm228 = vcmp.eq.f32.partialorder %v150, %v207
    %vm229 = vcmp.eq.f32.partialorder %v151, %v207
    %vm230 = vcmp.eq.f32.partialorder %v152, %v207
    %vm231 = vcmp.eq.f32.partialorder %v153, %v207
    %vm232 = vcmp.eq.f32.partialorder %v154, %v207
    %vm233 = vcmp.eq.f32.partialorder %v155, %v207
    %vm234 = vcmp.eq.f32.partialorder %v156, %v207
    %vm235 = vcmp.eq.f32.partialorder %v157, %v207
    %vm236 = vcmp.eq.f32.partialorder %v158, %v207
    %v237 = vrcp.pop 12.0
    %v238 = vmul.f32 %v53, %v237
    %v239 = vmul.f32 %v54, %v237
    %v240 = vmul.f32 %v55, %v237
    %v241 = vmul.f32 %v56, %v237
    %v242 = vmul.f32 %v57, %v237
    %v243 = vmul.f32 %v58, %v237
    %v244 = vmul.f32 %v59, %v237
    %v245 = vmul.f32 %v60, %v237
    %v246 = vmul.f32 %v61, %v237
    %v247 = vmul.f32 %v62, %v237
    %v248 = vmul.f32 %v63, %v237
    %v249 = vmul.f32 %v64, %v237
    %v250 = vmul.f32 %v65, %v237
    %v251 = vmul.f32 %v66, %v237
    %v252 = vmul.f32 %v67, %v237
    %v253 = vmul.f32 %v68, %v237
    %v254 = vmul.f32 %v69, %v237
    %v255 = vmul.f32 %v70, %v237
    %v256 = vmul.f32 %v71, %v237
    %v257 = vmul.f32 %v72, %v237
    %v258 = vmul.f32 %v73, %v237
    %v259 = vfloor.f32 %v238
    %v260 = vfloor.f32 %v239
    %v261 = vfloor.f32 %v240
    %v262 = vfloor.f32 %v241
    %v263 = vfloor.f32 %v242
    %v264 = vfloor.f32 %v243
    %v265 = vfloor.f32 %v244
    %v266 = vfloor.f32 %v245
    %v267 = vfloor.f32 %v246
    %v268 = vfloor.f32 %v247
    %v269 = vfloor.f32 %v248
    %v270 = vfloor.f32 %v249
    %v271 = vfloor.f32 %v250
    %v272 = vfloor.f32 %v251
    %v273 = vfloor.f32 %v252
    %v274 = vfloor.f32 %v253
    %v275 = vfloor.f32 %v254
    %v276 = vfloor.f32 %v255
    %v277 = vfloor.f32 %v256
    %v278 = vfloor.f32 %v257
    %v279 = vfloor.f32 %v258
    %vm280 = vcmp.eq.f32.partialorder %v259, %v205
    %vm281 = vcmp.eq.f32.partialorder %v260, %v205
    %vm282 = vcmp.eq.f32.partialorder %v261, %v205
    %vm283 = vcmp.eq.f32.partialorder %v262, %v205
    %vm284 = vcmp.eq.f32.partialorder %v263, %v205
    %vm285 = vcmp.eq.f32.partialorder %v264, %v205
    %vm286 = vcmp.eq.f32.partialorder %v265, %v205
    %vm287 = vcmp.eq.f32.partialorder %v266, %v205
    %vm288 = vcmp.eq.f32.partialorder %v267, %v205
    %vm289 = vcmp.eq.f32.partialorder %v268, %v205
    %vm290 = vcmp.eq.f32.partialorder %v269, %v205
    %vm291 = vcmp.eq.f32.partialorder %v270, %v205
    %vm292 = vcmp.eq.f32.partialorder %v271, %v205
    %vm293 = vcmp.eq.f32.partialorder %v272, %v205
    %vm294 = vcmp.eq.f32.partialorder %v273, %v205
    %vm295 = vcmp.eq.f32.partialorder %v274, %v205
    %vm296 = vcmp.eq.f32.partialorder %v275, %v205
    %vm297 = vcmp.eq.f32.partialorder %v276, %v205
    %vm298 = vcmp.eq.f32.partialorder %v277, %v205
    %vm299 = vcmp.eq.f32.partialorder %v278, %v205
    %vm300 = vcmp.eq.f32.partialorder %v279, %v205
    %vm301 = vmand %vm216, %vm280
    %vm302 = vmand %vm217, %vm281
    %vm303 = vmand %vm218, %vm282
    %vm304 = vmand %vm219, %vm283
    %vm305 = vmand %vm220, %vm284
    %vm306 = vmand %vm221, %vm285
    %vm307 = vmand %vm222, %vm286
    %vm308 = vmand %vm223, %vm287
    %vm309 = vmand %vm224, %vm288
    %vm310 = vmand %vm225, %vm289
    %vm311 = vmand %vm226, %vm290
    %vm312 = vmand %vm227, %vm291
    %vm313 = vmand %vm228, %vm292
    %vm314 = vmand %vm229, %vm293
    %vm315 = vmand %vm230, %vm294
    %vm316 = vmand %vm231, %vm295
    %vm317 = vmand %vm232, %vm296
    %vm318 = vmand %vm233, %vm297
    %vm319 = vmand %vm234, %vm298
    %vm320 = vmand %vm235, %vm299
    %vm321 = vmand %vm236, %vm300
    %v322 = vsel %vm301, 0.5, 0.0
    %v323 = vsel %vm302, 0.5, 0.0
    %v324 = vsel %vm303, 0.5, 0.0
    %v325 = vsel %vm304, 0.5, 0.0
    %v326 = vsel %vm305, 0.5, 0.0
    %v327 = vsel %vm306, 0.5, 0.0
    %v328 = vsel %vm307, 0.5, 0.0
    %v329 = vsel %vm308, 0.5, 0.0
    %v330 = vsel %vm309, 0.5, 0.0
    %v331 = vsel %vm310, 0.5, 0.0
    %v332 = vsel %vm311, 0.5, 0.0
    %v333 = vsel %vm312, 0.5, 0.0
    %v334 = vsel %vm313, 0.5, 0.0
    %v335 = vsel %vm314, 0.5, 0.0
    %v336 = vsel %vm315, 0.5, 0.0
    %v337 = vsel %vm316, 0.5, 0.0
    %v338 = vsel %vm317, 0.5, 0.0
    %v339 = vsel %vm318, 0.5, 0.0
    %v340 = vsel %vm319, 0.5, 0.0
    %v341 = vsel %vm320, 0.5, 0.0
    %v342 = vsel %vm321, 0.5, 0.0
    %v343 = vrcp.pop 16.0
    %v344 = vmul.f32 %v53, %v343
    %v345 = vmul.f32 %v54, %v343
    %v346 = vmul.f32 %v55, %v343
    %v347 = vmul.f32 %v56, %v343
    %v348 = vmul.f32 %v57, %v343
    %v349 = vmul.f32 %v58, %v343
    %v350 = vmul.f32 %v59, %v343
    %v351 = vmul.f32 %v60, %v343
    %v352 = vmul.f32 %v61, %v343
    %v353 = vmul.f32 %v62, %v343
    %v354 = vmul.f32 %v63, %v343
    %v355 = vmul.f32 %v64, %v343
    %v356 = vmul.f32 %v65, %v343
    %v357 = vmul.f32 %v66, %v343
    %v358 = vmul.f32 %v67, %v343
    %v359 = vmul.f32 %v68, %v343
    %v360 = vmul.f32 %v69, %v343
    %v361 = vmul.f32 %v70, %v343
    %v362 = vmul.f32 %v71, %v343
    %v363 = vmul.f32 %v72, %v343
    %v364 = vfloor.f32 %v344
    %v365 = vfloor.f32 %v345
    %v366 = vfloor.f32 %v346
    %v367 = vfloor.f32 %v347
    %v368 = vfloor.f32 %v348
    %v369 = vfloor.f32 %v349
    %v370 = vfloor.f32 %v350
    %v371 = vfloor.f32 %v351
    %v372 = vfloor.f32 %v352
    %v373 = vfloor.f32 %v353
    %v374 = vfloor.f32 %v354
    %v375 = vfloor.f32 %v355
    %v376 = vfloor.f32 %v356
    %v377 = vfloor.f32 %v357
    %v378 = vfloor.f32 %v358
    %v379 = vfloor.f32 %v359
    %v380 = vfloor.f32 %v360
    %v381 = vfloor.f32 %v361
    %v382 = vfloor.f32 %v362
    %v383 = vfloor.f32 %v363
    %v384 = vmul.f32 %v364, 16.0
    %v385 = vmul.f32 %v365, 16.0
    %v386 = vmul.f32 %v366, 16.0
    %v387 = vmul.f32 %v367, 16.0
    %v388 = vmul.f32 %v368, 16.0
    %v389 = vmul.f32 %v369, 16.0
    %v390 = vmul.f32 %v370, 16.0
    %v391 = vmul.f32 %v371, 16.0
    %v392 = vmul.f32 %v372, 16.0
    %v393 = vmul.f32 %v373, 16.0
    %v394 = vmul.f32 %v374, 16.0
    %v395 = vmul.f32 %v375, 16.0
    %v396 = vmul.f32 %v376, 16.0
    %v397 = vmul.f32 %v377, 16.0
    %v398 = vmul.f32 %v378, 16.0
    %v399 = vmul.f32 %v379, 16.0
    %v400 = vmul.f32 %v380, 16.0
    %v401 = vmul.f32 %v381, 16.0
    %v402 = vmul.f32 %v382, 16.0
    %v403 = vmul.f32 %v383, 16.0
    %v404 = vsub.f32 %v53, %v384
    %v405 = vsub.f32 %v54, %v385
    %v406 = vsub.f32 %v55, %v386
    %v407 = vsub.f32 %v56, %v387
    %v408 = vsub.f32 %v57, %v388
    %v409 = vsub.f32 %v58, %v389
    %v410 = vsub.f32 %v59, %v390
    %v411 = vsub.f32 %v60, %v391
    %v412 = vsub.f32 %v61, %v392
    %v413 = vsub.f32 %v62, %v393
    %v414 = vsub.f32 %v63, %v394
    %v415 = vsub.f32 %v64, %v395
    %v416 = vsub.f32 %v65, %v396
    %v417 = vsub.f32 %v66, %v397
    %v418 = vsub.f32 %v67, %v398
    %v419 = vsub.f32 %v68, %v399
    %v420 = vsub.f32 %v69, %v400
    %v421 = vsub.f32 %v70, %v401
    %v422 = vsub.f32 %v71, %v402
    %v423 = vsub.f32 %v72, %v403
    %vm424 = vcmp.eq.f32.partialorder %v404, %v161
    %vm425 = vcmp.eq.f32.partialorder %v405, %v161
    %vm426 = vcmp.eq.f32.partialorder %v406, %v161
    %vm427 = vcmp.eq.f32.partialorder %v407, %v161
    %vm428 = vcmp.eq.f32.partialorder %v408, %v161
    %vm429 = vcmp.eq.f32.partialorder %v409, %v161
    %vm430 = vcmp.eq.f32.partialorder %v410, %v161
    %vm431 = vcmp.eq.f32.partialorder %v411, %v161
    %vm432 = vcmp.eq.f32.partialorder %v412, %v161
    %vm433 = vcmp.eq.f32.partialorder %v413, %v161
    %vm434 = vcmp.eq.f32.partialorder %v414, %v161
    %vm435 = vcmp.eq.f32.partialorder %v415, %v161
    %vm436 = vcmp.eq.f32.partialorder %v416, %v161
    %vm437 = vcmp.eq.f32.partialorder %v417, %v161
    %vm438 = vcmp.eq.f32.partialorder %v418, %v161
    %vm439 = vcmp.eq.f32.partialorder %v419, %v161
    %vm440 = vcmp.eq.f32.partialorder %v420, %v161
    %vm441 = vcmp.eq.f32.partialorder %v421, %v161
    %vm442 = vcmp.eq.f32.partialorder %v422, %v161
    %vm443 = vcmp.eq.f32.partialorder %v423, %v161
    %v444 = vsel %vm424, 1.0, 0.0
    %v445 = vsel %vm425, 1.0, 0.0
    %v446 = vsel %vm426, 1.0, 0.0
    %v447 = vsel %vm427, 1.0, 0.0
    %v448 = vsel %vm428, 1.0, 0.0
    %v449 = vsel %vm429, 1.0, 0.0
    %v450 = vsel %vm430, 1.0, 0.0
    %v451 = vsel %vm431, 1.0, 0.0
    %v452 = vsel %vm432, 1.0, 0.0
    %v453 = vsel %vm433, 1.0, 0.0
    %v454 = vsel %vm434, 1.0, 0.0
    %v455 = vsel %vm435, 1.0, 0.0
    %v456 = vsel %vm436, 1.0, 0.0
    %v457 = vsel %vm437, 1.0, 0.0
    %v458 = vsel %vm438, 1.0, 0.0
    %v459 = vsel %vm439, 1.0, 0.0
    %v460 = vsel %vm440, 1.0, 0.0
    %v461 = vsel %vm441, 1.0, 0.0
    %v462 = vsel %vm442, 1.0, 0.0
    %v463 = vsel %vm443, 1.0, 0.0
    %v464 = vmul.f32 %v161, %v343
    %v465 = vfloor.f32 %v464
    %v466 = vmul.f32 %v465, 16.0
    %v467 = vsub.f32 %v161, %v466
    %vm468 = vcmp.eq.f32.partialorder %v53, %v467
    %vm469 = vcmp.eq.f32.partialorder %v54, %v467
    %v470 = vsel %vm468, 1.0, 0.0
    %v471 = vsel %vm469, 1.0, 0.0
    %vm472 = vcmp.eq.f32.partialorder %v404, %v467
    %vm473 = vcmp.eq.f32.partialorder %v405, %v467
    %vm474 = vcmp.eq.f32.partialorder %v406, %v467
    %vm475 = vcmp.eq.f32.partialorder %v407, %v467
    %vm476 = vcmp.eq.f32.partialorder %v408, %v467
    %vm477 = vcmp.eq.f32.partialorder %v409, %v467
    %vm478 = vcmp.eq.f32.partialorder %v410, %v467
    %vm479 = vcmp.eq.f32.partialorder %v411, %v467
    %vm480 = vcmp.eq.f32.partialorder %v412, %v467
    %vm481 = vcmp.eq.f32.partialorder %v413, %v467
    %vm482 = vcmp.eq.f32.partialorder %v414, %v467
    %vm483 = vcmp.eq.f32.partialorder %v415, %v467
    %vm484 = vcmp.eq.f32.partialorder %v416, %v467
    %vm485 = vcmp.eq.f32.partialorder %v417, %v467
    %vm486 = vcmp.eq.f32.partialorder %v418, %v467
    %vm487 = vcmp.eq.f32.partialorder %v419, %v467
    %vm488 = vcmp.eq.f32.partialorder %v420, %v467
    %vm489 = vcmp.eq.f32.partialorder %v421, %v467
    %vm490 = vcmp.eq.f32.partialorder %v422, %v467
    %vm491 = vcmp.eq.f32.partialorder %v423, %v467
    %v492 = vrcp.pop 32.0
    %v493 = vmul.f32 %v53, %v492
    %v494 = vmul.f32 %v54, %v492
    %v495 = vmul.f32 %v55, %v492
    %v496 = vmul.f32 %v56, %v492
    %v497 = vmul.f32 %v57, %v492
    %v498 = vmul.f32 %v58, %v492
    %v499 = vmul.f32 %v59, %v492
    %v500 = vmul.f32 %v60, %v492
    %v501 = vmul.f32 %v61, %v492
    %v502 = vmul.f32 %v62, %v492
    %v503 = vmul.f32 %v63, %v492
    %v504 = vmul.f32 %v64, %v492
    %v505 = vmul.f32 %v65, %v492
    %v506 = vmul.f32 %v66, %v492
    %v507 = vmul.f32 %v67, %v492
    %v508 = vmul.f32 %v68, %v492
    %v509 = vmul.f32 %v69, %v492
    %v510 = vmul.f32 %v70, %v492
    %v511 = vmul.f32 %v71, %v492
    %v512 = vmul.f32 %v72, %v492
    %v513 = vfloor.f32 %v493
    %v514 = vfloor.f32 %v494
    %v515 = vfloor.f32 %v495
    %v516 = vfloor.f32 %v496
    %v517 = vfloor.f32 %v497
    %v518 = vfloor.f32 %v498
    %v519 = vfloor.f32 %v499
    %v520 = vfloor.f32 %v500
    %v521 = vfloor.f32 %v501
    %v522 = vfloor.f32 %v502
    %v523 = vfloor.f32 %v503
    %v524 = vfloor.f32 %v504
    %v525 = vfloor.f32 %v505
    %v526 = vfloor.f32 %v506
    %v527 = vfloor.f32 %v507
    %v528 = vfloor.f32 %v508
    %v529 = vfloor.f32 %v509
    %v530 = vfloor.f32 %v510
    %v531 = vfloor.f32 %v511
    %v532 = vfloor.f32 %v512
    %vm533 = vcmp.eq.f32.partialorder %v513, %v465
    %vm534 = vcmp.eq.f32.partialorder %v514, %v465
    %vm535 = vcmp.eq.f32.partialorder %v515, %v465
    %vm536 = vcmp.eq.f32.partialorder %v516, %v465
    %vm537 = vcmp.eq.f32.partialorder %v517, %v465
    %vm538 = vcmp.eq.f32.partialorder %v518, %v465
    %vm539 = vcmp.eq.f32.partialorder %v519, %v465
    %vm540 = vcmp.eq.f32.partialorder %v520, %v465
    %vm541 = vcmp.eq.f32.partialorder %v521, %v465
    %vm542 = vcmp.eq.f32.partialorder %v522, %v465
    %vm543 = vcmp.eq.f32.partialorder %v523, %v465
    %vm544 = vcmp.eq.f32.partialorder %v524, %v465
    %vm545 = vcmp.eq.f32.partialorder %v525, %v465
    %vm546 = vcmp.eq.f32.partialorder %v526, %v465
    %vm547 = vcmp.eq.f32.partialorder %v527, %v465
    %vm548 = vcmp.eq.f32.partialorder %v528, %v465
    %vm549 = vcmp.eq.f32.partialorder %v529, %v465
    %vm550 = vcmp.eq.f32.partialorder %v530, %v465
    %vm551 = vcmp.eq.f32.partialorder %v531, %v465
    %vm552 = vcmp.eq.f32.partialorder %v532, %v465
    %vm553 = vmand %vm472, %vm533
    %vm554 = vmand %vm473, %vm534
    %vm555 = vmand %vm474, %vm535
    %vm556 = vmand %vm475, %vm536
    %vm557 = vmand %vm476, %vm537
    %vm558 = vmand %vm477, %vm538
    %vm559 = vmand %vm478, %vm539
    %vm560 = vmand %vm479, %vm540
    %vm561 = vmand %vm480, %vm541
    %vm562 = vmand %vm481, %vm542
    %vm563 = vmand %vm482, %vm543
    %vm564 = vmand %vm483, %vm544
    %vm565 = vmand %vm484, %vm545
    %vm566 = vmand %vm485, %vm546
    %vm567 = vmand %vm486, %vm547
    %vm568 = vmand %vm487, %vm548
    %vm569 = vmand %vm488, %vm549
    %vm570 = vmand %vm489, %vm550
    %vm571 = vmand %vm490, %vm551
    %vm572 = vmand %vm491, %vm552
    %v573 = vsel %vm553, 0.5, 0.0
    %v574 = vsel %vm554, 0.5, 0.0
    %v575 = vsel %vm555, 0.5, 0.0
    %v576 = vsel %vm556, 0.5, 0.0
    %v577 = vsel %vm557, 0.5, 0.0
    %v578 = vsel %vm558, 0.5, 0.0
    %v579 = vsel %vm559, 0.5, 0.0
    %v580 = vsel %vm560, 0.5, 0.0
    %v581 = vsel %vm561, 0.5, 0.0
    %v582 = vsel %vm562, 0.5, 0.0
    %v583 = vsel %vm563, 0.5, 0.0
    %v584 = vsel %vm564, 0.5, 0.0
    %v585 = vsel %vm565, 0.5, 0.0
    %v586 = vsel %vm566, 0.5, 0.0
    %v587 = vsel %vm567, 0.5, 0.0
    %v588 = vsel %vm568, 0.5, 0.0
    %v589 = vsel %vm569, 0.5, 0.0
    %v590 = vsel %vm570, 0.5, 0.0
    %v591 = vsel %vm571, 0.5, 0.0
    %v592 = vsel %vm572, 0.5, 0.0
    %v593 = vld [vmem:[%s0] sm:$0xff]
    %v594 = vld [vmem:[%s0 + $0x8] sm:$0xff]
    %v595 = vld [vmem:[%s0 + $0x10] sm:$0xff]
    %v596 = vld [vmem:[%s0 + $0x18] sm:$0xff]
    %v597 = vld [vmem:[%s1] sm:$0xff]
    %v598 = vld [vmem:[%s1 + $0x8] sm:$0xff]
    %v599 = vld [vmem:[%s1 + $0x10] sm:$0xff]
    %v600 = vld [vmem:[%s1 + $0x18] sm:$0xff]
    %v601 = vld [vmem:[%s1 + $0x20] sm:$0xff]
    %v602 = vld [vmem:[%s1 + $0x28] sm:$0xff]
    %v603 = vld [vmem:[%s1 + $0x30] sm:$0xff]
    %v604 = vld [vmem:[%s1 + $0x38] sm:$0xff]
    %s605 = scalar_lea.vmem %s1, 64
    %v606 = vld [vmem:[%s605] sm:$0xff]
    %v607 = vld [vmem:[%s605 + $0x8] sm:$0xff]
    %v608 = vld [vmem:[%s605 + $0x10] sm:$0xff]
    %v609 = vld [vmem:[%s605 + $0x18] sm:$0xff]
    %v610 = vld [vmem:[%s605 + $0x20] sm:$0xff]
    %v611 = vld [vmem:[%s605 + $0x28] sm:$0xff]
    %v612 = vld [vmem:[%s605 + $0x30] sm:$0xff]
    %v613 = vld [vmem:[%s605 + $0x38] sm:$0xff]
    %vm618 = vcmask 1046528
    %v619 = vrot.slane %v593, 1
    %v620 = vrot.slane %v594, 1
    %v621 = vsel %vm618, %v619, %v620
    %v622 = vrot.slane %v595, 1
    %v623 = vsel %vm618, %v620, %v622
    %v624 = vrot.slane %v596, 1
    %v625 = vsel %vm618, %v622, %v624
    %vm626 = vcmask 261120
    %v627 = vsel %vm626, %v621, 0
    %v629 = vsel %vm626, %v623, 0
    %v631 = vsel %vm626, %v625, 0
    %v633 = vsel %vm626, %v624, 0
    %635 = vmatprep.subr.mxu0 %v607
    %636 = vmatpush1.msra.mxu0 %v606
    %637 = vmatprep.subr.mxu0 %v609
    %638 = vmatpush1.msra.mxu0 %v608
    %639 = vmatprep.subr.mxu0 %v611
    %640 = vmatpush1.msra.mxu0 %v610
    %641 = vmatprep.subr.mxu0 %v613
    %642 = vmatpush1.msra.mxu0 %v612
    %643 = vmatprep.subr.mxu0 0.0
    %644 = vmatpush1.msra.mxu0 0.0
    %645 = vmatprep.subr.mxu0 0.0
    %646 = vmatpush1.msra.mxu0 0.0
    %647 = vmatprep.subr.mxu0 0.0
    %648 = vmatpush1.msra.mxu0 0.0
    %649 = vmatprep.subr.mxu0 0.0
    %650 = vmatpush1.msra.mxu0 0.0
    %651 = vmatprep.subr.mxu0 0.0
    %652 = vmatpush1.msra.mxu0 0.0
    %653 = vmatprep.subr.mxu0 0.0
    %654 = vmatpush1.msra.mxu0 0.0
    %655 = vmatprep.subr.mxu0 0.0
    %656 = vmatpush1.msra.mxu0 0.0
    %657 = vmatprep.subr.mxu0 0.0
    %658 = vmatpush1.msra.mxu0 0.0
    %659 = vmatprep.subr.mxu0 0.0
    %660 = vmatpush1.msra.mxu0 0.0
    %661 = vmatprep.subr.mxu0 0.0
    %662 = vmatpush1.msra.mxu0 0.0
    %663 = vmatprep.subr.mxu0 0.0
    %664 = vmatpush1.msra.mxu0 0.0
    %665 = vmatprep.subr.mxu0 0.0
    %666 = vmatpush1.msra.mxu0 0.0
    %667 = vmatprep.subr.mxu0 0.0
    %668 = vmatpush1.msra.mxu0 0.0
    %669 = vmatprep.subr.mxu0 0.0
    %670 = vmatpush1.msra.mxu0 0.0
    %671 = vmatprep.subr.mxu0 0.0
    %672 = vmatpush1.msra.mxu0 0.0
    %673 = vmatprep.subr.mxu0 0.0
    %674 = vmatpush1.msra.mxu0 0.0
    %675 = vmatprep.subr.mxu0 0.0
    %676 = vmatpush1.msra.mxu0 0.0
    %677 = vmatprep.subr.mxu0 0.0
    %678 = vmatpush1.msra.mxu0 0.0
    %679 = vmatprep.subr.mxu0 0.0
    %680 = vmatpush1.msra.mxu0 0.0
    %681 = vmatprep.subr.mxu0 0.0
    %682 = vmatpush1.msra.mxu0 0.0
    %683 = vmatprep.subr.mxu0 0.0
    %684 = vmatpush1.msra.mxu0 0.0
    %685 = vmatprep.subr.mxu0 0.0
    %686 = vmatpush1.msra.mxu0 0.0
    %687 = vmatprep.subr.mxu0 0.0
    %688 = vmatpush1.msra.mxu0 0.0
    %689 = vmatprep.subr.mxu0 0.0
    %690 = vmatpush1.msra.mxu0 0.0
    %691 = vmatprep.subr.mxu0 0.0
    %692 = vmatpush1.msra.mxu0 0.0
    %693 = vmatprep.subr.mxu0 0.0
    %694 = vmatpush1.msra.mxu0 0.0
    %695 = vmatprep.subr.mxu0 0.0
    %696 = vmatpush1.msra.mxu0 0.0
    %697 = vmatprep.subr.mxu0 0.0
    %698 = vmatpush1.msra.mxu0 0.0
    %699 = vmatprep.mubr.f32.mxu0 0.0
    %700 = vmatmul.mubr.f32.gmra.mrb[0].mxu0 %v627
    %v701 = vpop.f32.mrb[0].mxu0
    %v702 = vadd.f32 0.0, %v701
    %v703 = vpop.f32.mrb[0].mxu0
    %v704 = vadd.f32 0.0, %v703
    %705 = vmatprep.mubr.f32.mxu0 0.0
    %706 = vmatmul.mubr.f32.gmra.mrb[0].mxu0 %v629
    %v707 = vpop.f32.mrb[0].mxu0
    %v708 = vadd.f32 0.0, %v707
    %v709 = vpop.f32.mrb[0].mxu0
    %v710 = vadd.f32 0.0, %v709
    %711 = vmatprep.mubr.f32.mxu0 0.0
    %712 = vmatmul.mubr.f32.gmra.mrb[0].mxu0 %v631
    %v713 = vpop.f32.mrb[0].mxu0
    %v714 = vadd.f32 0.0, %v713
    %v715 = vpop.f32.mrb[0].mxu0
    %v716 = vadd.f32 0.0, %v715
    %717 = vmatprep.mubr.f32.mxu0 0.0
    %718 = vmatmul.mubr.f32.gmra.mrb[0].mxu0 %v633
    %v719 = vpop.f32.mrb[0].mxu0
    %v720 = vadd.f32 0.0, %v719
    %v721 = vpop.f32.mrb[0].mxu0
    %v722 = vadd.f32 0.0, %v721
    %723 = vdwg.mxu0
    %v724 = vsel %vm626, %v593, 0
    %v726 = vsel %vm626, %v594, 0
    %v728 = vsel %vm626, %v595, 0
    %v730 = vsel %vm626, %v596, 0
    %732 = vmatprep.subr.mxu0 %v598
    %733 = vmatpush1.msra.mxu0 %v597
    %734 = vmatprep.subr.mxu0 %v600
    %735 = vmatpush1.msra.mxu0 %v599
    %736 = vmatprep.subr.mxu0 %v602
    %737 = vmatpush1.msra.mxu0 %v601
    %738 = vmatprep.subr.mxu0 %v604
    %739 = vmatpush1.msra.mxu0 %v603
    %740 = vmatprep.subr.mxu0 0.0
    %741 = vmatpush1.msra.mxu0 0.0
    %742 = vmatprep.subr.mxu0 0.0
    %743 = vmatpush1.msra.mxu0 0.0
    %744 = vmatprep.subr.mxu0 0.0
    %745 = vmatpush1.msra.mxu0 0.0
    %746 = vmatprep.subr.mxu0 0.0
    %747 = vmatpush1.msra.mxu0 0.0
    %748 = vmatprep.subr.mxu0 0.0
    %749 = vmatpush1.msra.mxu0 0.0
    %750 = vmatprep.subr.mxu0 0.0
    %751 = vmatpush1.msra.mxu0 0.0
    %752 = vmatprep.subr.mxu0 0.0
    %753 = vmatpush1.msra.mxu0 0.0
    %754 = vmatprep.subr.mxu0 0.0
    %755 = vmatpush1.msra.mxu0 0.0
    %756 = vmatprep.subr.mxu0 0.0
    %757 = vmatpush1.msra.mxu0 0.0
    %758 = vmatprep.subr.mxu0 0.0
    %759 = vmatpush1.msra.mxu0 0.0
    %760 = vmatprep.subr.mxu0 0.0
    %761 = vmatpush1.msra.mxu0 0.0
    %762 = vmatprep.subr.mxu0 0.0
    %763 = vmatpush1.msra.mxu0 0.0
    %764 = vmatprep.subr.mxu0 0.0
    %765 = vmatpush1.msra.mxu0 0.0
    %766 = vmatprep.subr.mxu0 0.0
    %767 = vmatpush1.msra.mxu0 0.0
    %768 = vmatprep.subr.mxu0 0.0
    %769 = vmatpush1.msra.mxu0 0.0
    %770 = vmatprep.subr.mxu0 0.0
    %771 = vmatpush1.msra.mxu0 0.0
    %772 = vmatprep.subr.mxu0 0.0
    %773 = vmatpush1.msra.mxu0 0.0
    %774 = vmatprep.subr.mxu0 0.0
    %775 = vmatpush1.msra.mxu0 0.0
    %776 = vmatprep.subr.mxu0 0.0
    %777 = vmatpush1.msra.mxu0 0.0
    %778 = vmatprep.subr.mxu0 0.0
    %779 = vmatpush1.msra.mxu0 0.0
    %780 = vmatprep.subr.mxu0 0.0
    %781 = vmatpush1.msra.mxu0 0.0
    %782 = vmatprep.subr.mxu0 0.0
    %783 = vmatpush1.msra.mxu0 0.0
    %784 = vmatprep.subr.mxu0 0.0
    %785 = vmatpush1.msra.mxu0 0.0
    %786 = vmatprep.subr.mxu0 0.0
    %787 = vmatpush1.msra.mxu0 0.0
    %788 = vmatprep.subr.mxu0 0.0
    %789 = vmatpush1.msra.mxu0 0.0
    %790 = vmatprep.subr.mxu0 0.0
    %791 = vmatpush1.msra.mxu0 0.0
    %792 = vmatprep.subr.mxu0 0.0
    %793 = vmatpush1.msra.mxu0 0.0
    %794 = vmatprep.subr.mxu0 0.0
    %795 = vmatpush1.msra.mxu0 0.0
    %796 = vmatprep.mubr.f32.mxu0 0.0
    %797 = vmatmul.mubr.f32.gmra.mrb[0].mxu0 %v724
    %v798 = vpop.f32.mrb[0].mxu0
    %v799 = vadd.f32 %v702, %v798
    %v800 = vpop.f32.mrb[0].mxu0
    %v801 = vadd.f32 %v704, %v800
    %802 = vmatprep.mubr.f32.mxu0 0.0
    %803 = vmatmul.mubr.f32.gmra.mrb[0].mxu0 %v726
    %v804 = vpop.f32.mrb[0].mxu0
    %v805 = vadd.f32 %v708, %v804
    %v806 = vpop.f32.mrb[0].mxu0
    %v807 = vadd.f32 %v710, %v806
    %808 = vmatprep.mubr.f32.mxu0 0.0
    %809 = vmatmul.mubr.f32.gmra.mrb[0].mxu0 %v728
    %v810 = vpop.f32.mrb[0].mxu0
    %v811 = vadd.f32 %v714, %v810
    %v812 = vpop.f32.mrb[0].mxu0
    %v813 = vadd.f32 %v716, %v812
    %814 = vmatprep.mubr.f32.mxu0 0.0
    %815 = vmatmul.mubr.f32.gmra.mrb[0].mxu0 %v730
    %v816 = vpop.f32.mrb[0].mxu0
    %v817 = vadd.f32 %v720, %v816
    %v818 = vpop.f32.mrb[0].mxu0
    %v819 = vadd.f32 %v722, %v818
    %820 = vdwg.mxu0
    %s821 = scalar_lea.vmem %s1, 128
    %v822 = vld [vmem:[%s821] sm:$0xff]
    %v823 = vld [vmem:[%s821 + $0x8] sm:$0xff]
    %v824 = vld [vmem:[%s821 + $0x10] sm:$0xff]
    %v825 = vld [vmem:[%s821 + $0x18] sm:$0xff]
    %v826 = vld [vmem:[%s821 + $0x20] sm:$0xff]
    %v827 = vld [vmem:[%s821 + $0x28] sm:$0xff]
    %v828 = vld [vmem:[%s821 + $0x30] sm:$0xff]
    %v829 = vld [vmem:[%s821 + $0x38] sm:$0xff]
    %vm830 = vcmask 1045504
    %v831 = vrot.slane %v593, 2
    %v832 = vrot.slane %v594, 2
    %v833 = vsel %vm830, %v831, %v832
    %v834 = vrot.slane %v595, 2
    %v835 = vsel %vm830, %v832, %v834
    %v836 = vrot.slane %v596, 2
    %v837 = vsel %vm830, %v834, %v836
    %v838 = vsel %vm626, %v833, 0
    %v840 = vsel %vm626, %v835, 0
    %v842 = vsel %vm626, %v837, 0
    %v844 = vsel %vm626, %v836, 0
    %846 = vmatprep.subr.mxu0 %v823
    %847 = vmatpush1.msra.mxu0 %v822
    %848 = vmatprep.subr.mxu0 %v825
    %849 = vmatpush1.msra.mxu0 %v824
    %850 = vmatprep.subr.mxu0 %v827
    %851 = vmatpush1.msra.mxu0 %v826
    %852 = vmatprep.subr.mxu0 %v829
    %853 = vmatpush1.msra.mxu0 %v828
    %854 = vmatprep.subr.mxu0 0.0
    %855 = vmatpush1.msra.mxu0 0.0
    %856 = vmatprep.subr.mxu0 0.0
    %857 = vmatpush1.msra.mxu0 0.0
    %858 = vmatprep.subr.mxu0 0.0
    %859 = vmatpush1.msra.mxu0 0.0
    %860 = vmatprep.subr.mxu0 0.0
    %861 = vmatpush1.msra.mxu0 0.0
    %862 = vmatprep.subr.mxu0 0.0
    %863 = vmatpush1.msra.mxu0 0.0
    %864 = vmatprep.subr.mxu0 0.0
    %865 = vmatpush1.msra.mxu0 0.0
    %866 = vmatprep.subr.mxu0 0.0
    %867 = vmatpush1.msra.mxu0 0.0
    %868 = vmatprep.subr.mxu0 0.0
    %869 = vmatpush1.msra.mxu0 0.0
    %870 = vmatprep.subr.mxu0 0.0
    %871 = vmatpush1.msra.mxu0 0.0
    %872 = vmatprep.subr.mxu0 0.0
    %873 = vmatpush1.msra.mxu0 0.0
    %874 = vmatprep.subr.mxu0 0.0
    %875 = vmatpush1.msra.mxu0 0.0
    %876 = vmatprep.subr.mxu0 0.0
    %877 = vmatpush1.msra.mxu0 0.0
    %878 = vmatprep.subr.mxu0 0.0
    %879 = vmatpush1.msra.mxu0 0.0
    %880 = vmatprep.subr.mxu0 0.0
    %881 = vmatpush1.msra.mxu0 0.0
    %882 = vmatprep.subr.mxu0 0.0
    %883 = vmatpush1.msra.mxu0 0.0
    %884 = vmatprep.subr.mxu0 0.0
    %885 = vmatpush1.msra.mxu0 0.0
    %886 = vmatprep.subr.mxu0 0.0
    %887 = vmatpush1.msra.mxu0 0.0
    %888 = vmatprep.subr.mxu0 0.0
    %889 = vmatpush1.msra.mxu0 0.0
    %890 = vmatprep.subr.mxu0 0.0
    %891 = vmatpush1.msra.mxu0 0.0
    %892 = vmatprep.subr.mxu0 0.0
    %893 = vmatpush1.msra.mxu0 0.0
    %894 = vmatprep.subr.mxu0 0.0
    %895 = vmatpush1.msra.mxu0 0.0
    %896 = vmatprep.subr.mxu0 0.0
    %897 = vmatpush1.msra.mxu0 0.0
    %898 = vmatprep.subr.mxu0 0.0
    %899 = vmatpush1.msra.mxu0 0.0
    %900 = vmatprep.subr.mxu0 0.0
    %901 = vmatpush1.msra.mxu0 0.0
    %902 = vmatprep.subr.mxu0 0.0
    %903 = vmatpush1.msra.mxu0 0.0
    %904 = vmatprep.subr.mxu0 0.0
    %905 = vmatpush1.msra.mxu0 0.0
    %906 = vmatprep.subr.mxu0 0.0
    %907 = vmatpush1.msra.mxu0 0.0
    %908 = vmatprep.subr.mxu0 0.0
    %909 = vmatpush1.msra.mxu0 0.0
    %910 = vmatprep.mubr.f32.mxu0 0.0
    %911 = vmatmul.mubr.f32.gmra.mrb[0].mxu0 %v838
    %v912 = vpop.f32.mrb[0].mxu0
    %v913 = vadd.f32 0.0, %v912
    %v914 = vpop.f32.mrb[0].mxu0
    %v915 = vadd.f32 0.0, %v914
    %916 = vmatprep.mubr.f32.mxu0 0.0
    %917 = vmatmul.mubr.f32.gmra.mrb[0].mxu0 %v840
    %v918 = vpop.f32.mrb[0].mxu0
    %v919 = vadd.f32 0.0, %v918
    %v920 = vpop.f32.mrb[0].mxu0
    %v921 = vadd.f32 0.0, %v920
    %922 = vmatprep.mubr.f32.mxu0 0.0
    %923 = vmatmul.mubr.f32.gmra.mrb[0].mxu0 %v842
    %v924 = vpop.f32.mrb[0].mxu0
    %v925 = vadd.f32 0.0, %v924
    %v926 = vpop.f32.mrb[0].mxu0
    %v927 = vadd.f32 0.0, %v926
    %928 = vmatprep.mubr.f32.mxu0 0.0
    %929 = vmatmul.mubr.f32.gmra.mrb[0].mxu0 %v844
    %v930 = vpop.f32.mrb[0].mxu0
    %v931 = vadd.f32 0.0, %v930
    %v932 = vpop.f32.mrb[0].mxu0
    %v933 = vadd.f32 0.0, %v932
    %934 = vdwg.mxu0
    %v935 = vadd.f32 %v799, %v913
    %v936 = vadd.f32 %v801, %v915
    %v937 = vadd.f32 %v805, %v919
    %v938 = vadd.f32 %v807, %v921
    %v939 = vadd.f32 %v811, %v925
    %v940 = vadd.f32 %v813, %v927
    %v941 = vadd.f32 %v817, %v931
    %v942 = vadd.f32 %v819, %v933
    %s943 = scalar_lea.vmem %s1, 192
    %v944 = vld [vmem:[%s943] sm:$0xff]
    %v945 = vld [vmem:[%s943 + $0x8] sm:$0xff]
    %v946 = vld [vmem:[%s943 + $0x10] sm:$0xff]
    %v947 = vld [vmem:[%s943 + $0x18] sm:$0xff]
    %v948 = vld [vmem:[%s943 + $0x20] sm:$0xff]
    %v949 = vld [vmem:[%s943 + $0x28] sm:$0xff]
    %v950 = vld [vmem:[%s943 + $0x30] sm:$0xff]
    %v951 = vld [vmem:[%s943 + $0x38] sm:$0xff]
    %vm952 = vcmask 1044480
    %v953 = vrot.slane %v593, 3
    %v954 = vrot.slane %v594, 3
    %v955 = vsel %vm952, %v953, %v954
    %v956 = vrot.slane %v595, 3
    %v957 = vsel %vm952, %v954, %v956
    %v958 = vrot.slane %v596, 3
    %v959 = vsel %vm952, %v956, %v958
    %v960 = vsel %vm626, %v955, 0
    %v962 = vsel %vm626, %v957, 0
    %v964 = vsel %vm626, %v959, 0
    %v966 = vsel %vm626, %v958, 0
    %968 = vmatprep.subr.mxu0 %v945
    %969 = vmatpush1.msra.mxu0 %v944
    %970 = vmatprep.subr.mxu0 %v947
    %971 = vmatpush1.msra.mxu0 %v946
    %972 = vmatprep.subr.mxu0 %v949
    %973 = vmatpush1.msra.mxu0 %v948
    %974 = vmatprep.subr.mxu0 %v951
    %975 = vmatpush1.msra.mxu0 %v950
    %976 = vmatprep.subr.mxu0 0.0
    %977 = vmatpush1.msra.mxu0 0.0
    %978 = vmatprep.subr.mxu0 0.0
    %979 = vmatpush1.msra.mxu0 0.0
    %980 = vmatprep.subr.mxu0 0.0
    %981 = vmatpush1.msra.mxu0 0.0
    %982 = vmatprep.subr.mxu0 0.0
    %983 = vmatpush1.msra.mxu0 0.0
    %984 = vmatprep.subr.mxu0 0.0
    %985 = vmatpush1.msra.mxu0 0.0
    %986 = vmatprep.subr.mxu0 0.0
    %987 = vmatpush1.msra.mxu0 0.0
    %988 = vmatprep.subr.mxu0 0.0
    %989 = vmatpush1.msra.mxu0 0.0
    %990 = vmatprep.subr.mxu0 0.0
    %991 = vmatpush1.msra.mxu0 0.0
    %992 = vmatprep.subr.mxu0 0.0
    %993 = vmatpush1.msra.mxu0 0.0
    %994 = vmatprep.subr.mxu0 0.0
    %995 = vmatpush1.msra.mxu0 0.0
    %996 = vmatprep.subr.mxu0 0.0
    %997 = vmatpush1.msra.mxu0 0.0
    %998 = vmatprep.subr.mxu0 0.0
    %999 = vmatpush1.msra.mxu0 0.0
    %1000 = vmatprep.subr.mxu0 0.0
    %1001 = vmatpush1.msra.mxu0 0.0
    %1002 = vmatprep.subr.mxu0 0.0
    %1003 = vmatpush1.msra.mxu0 0.0
    %1004 = vmatprep.subr.mxu0 0.0
    %1005 = vmatpush1.msra.mxu0 0.0
    %1006 = vmatprep.subr.mxu0 0.0
    %1007 = vmatpush1.msra.mxu0 0.0
    %1008 = vmatprep.subr.mxu0 0.0
    %1009 = vmatpush1.msra.mxu0 0.0
    %1010 = vmatprep.subr.mxu0 0.0
    %1011 = vmatpush1.msra.mxu0 0.0
    %1012 = vmatprep.subr.mxu0 0.0
    %1013 = vmatpush1.msra.mxu0 0.0
    %1014 = vmatprep.subr.mxu0 0.0
    %1015 = vmatpush1.msra.mxu0 0.0
    %1016 = vmatprep.subr.mxu0 0.0
    %1017 = vmatpush1.msra.mxu0 0.0
    %1018 = vmatprep.subr.mxu0 0.0
    %1019 = vmatpush1.msra.mxu0 0.0
    %1020 = vmatprep.subr.mxu0 0.0
    %1021 = vmatpush1.msra.mxu0 0.0
    %1022 = vmatprep.subr.mxu0 0.0
    %1023 = vmatpush1.msra.mxu0 0.0
    %1024 = vmatprep.subr.mxu0 0.0
    %1025 = vmatpush1.msra.mxu0 0.0
    %1026 = vmatprep.subr.mxu0 0.0
    %1027 = vmatpush1.msra.mxu0 0.0
    %1028 = vmatprep.subr.mxu0 0.0
    %1029 = vmatpush1.msra.mxu0 0.0
    %1030 = vmatprep.subr.mxu0 0.0
    %1031 = vmatpush1.msra.mxu0 0.0
    %1032 = vmatprep.mubr.f32.mxu0 0.0
    %1033 = vmatmul.mubr.f32.gmra.mrb[0].mxu0 %v960
    %v1034 = vpop.f32.mrb[0].mxu0
    %v1035 = vadd.f32 0.0, %v1034
    %v1036 = vpop.f32.mrb[0].mxu0
    %v1037 = vadd.f32 0.0, %v1036
    %1038 = vmatprep.mubr.f32.mxu0 0.0
    %1039 = vmatmul.mubr.f32.gmra.mrb[0].mxu0 %v962
    %v1040 = vpop.f32.mrb[0].mxu0
    %v1041 = vadd.f32 0.0, %v1040
    %v1042 = vpop.f32.mrb[0].mxu0
    %v1043 = vadd.f32 0.0, %v1042
    %1044 = vmatprep.mubr.f32.mxu0 0.0
    %1045 = vmatmul.mubr.f32.gmra.mrb[0].mxu0 %v964
    %v1046 = vpop.f32.mrb[0].mxu0
    %v1047 = vadd.f32 0.0, %v1046
    %v1048 = vpop.f32.mrb[0].mxu0
    %v1049 = vadd.f32 0.0, %v1048
    %1050 = vmatprep.mubr.f32.mxu0 0.0
    %1051 = vmatmul.mubr.f32.gmra.mrb[0].mxu0 %v966
    %v1052 = vpop.f32.mrb[0].mxu0
    %v1053 = vadd.f32 0.0, %v1052
    %v1054 = vpop.f32.mrb[0].mxu0
    %v1055 = vadd.f32 0.0, %v1054
    %1056 = vdwg.mxu0
    %v1057 = vadd.f32 %v935, %v1035
    %v1058 = vadd.f32 %v936, %v1037
    %v1059 = vadd.f32 %v937, %v1041
    %v1060 = vadd.f32 %v938, %v1043
    %v1061 = vadd.f32 %v939, %v1047
    %v1062 = vadd.f32 %v940, %v1049
    %v1063 = vadd.f32 %v941, %v1053
    %v1064 = vadd.f32 %v942, %v1055
    %s1065 = scalar_lea.vmem %s1, 256
    %v1066 = vld [vmem:[%s1065] sm:$0xff]
    %v1067 = vld [vmem:[%s1065 + $0x8] sm:$0xff]
    %v1068 = vld [vmem:[%s1065 + $0x10] sm:$0xff]
    %v1069 = vld [vmem:[%s1065 + $0x18] sm:$0xff]
    %v1070 = vld [vmem:[%s1065 + $0x20] sm:$0xff]
    %v1071 = vld [vmem:[%s1065 + $0x28] sm:$0xff]
    %v1072 = vld [vmem:[%s1065 + $0x30] sm:$0xff]
    %v1073 = vld [vmem:[%s1065 + $0x38] sm:$0xff]
    %vm1074 = vcmask 1043456
    %v1075 = vrot.slane %v593, 4
    %v1076 = vrot.slane %v594, 4
    %v1077 = vsel %vm1074, %v1075, %v1076
    %v1078 = vrot.slane %v595, 4
    %v1079 = vsel %vm1074, %v1076, %v1078
    %v1080 = vrot.slane %v596, 4
    %v1081 = vsel %vm1074, %v1078, %v1080
    %v1082 = vsel %vm626, %v1077, 0
    %v1084 = vsel %vm626, %v1079, 0
    %v1086 = vsel %vm626, %v1081, 0
    %v1088 = vsel %vm626, %v1080, 0
    %1090 = vmatprep.subr.mxu0 %v1067
    %1091 = vmatpush1.msra.mxu0 %v1066
    %1092 = vmatprep.subr.mxu0 %v1069
    %1093 = vmatpush1.msra.mxu0 %v1068
    %1094 = vmatprep.subr.mxu0 %v1071
    %1095 = vmatpush1.msra.mxu0 %v1070
    %1096 = vmatprep.subr.mxu0 %v1073
    %1097 = vmatpush1.msra.mxu0 %v1072
    %1098 = vmatprep.subr.mxu0 0.0
    %1099 = vmatpush1.msra.mxu0 0.0
    %1100 = vmatprep.subr.mxu0 0.0
    %1101 = vmatpush1.msra.mxu0 0.0
    %1102 = vmatprep.subr.mxu0 0.0
    %1103 = vmatpush1.msra.mxu0 0.0
    %1104 = vmatprep.subr.mxu0 0.0
    %1105 = vmatpush1.msra.mxu0 0.0
    %1106 = vmatprep.subr.mxu0 0.0
    %1107 = vmatpush1.msra.mxu0 0.0
    %1108 = vmatprep.subr.mxu0 0.0
    %1109 = vmatpush1.msra.mxu0 0.0
    %1110 = vmatprep.subr.mxu0 0.0
    %1111 = vmatpush1.msra.mxu0 0.0
    %1112 = vmatprep.subr.mxu0 0.0
    %1113 = vmatpush1.msra.mxu0 0.0
    %1114 = vmatprep.subr.mxu0 0.0
    %1115 = vmatpush1.msra.mxu0 0.0
    %1116 = vmatprep.subr.mxu0 0.0
    %1117 = vmatpush1.msra.mxu0 0.0
    %1118 = vmatprep.subr.mxu0 0.0
    %1119 = vmatpush1.msra.mxu0 0.0
    %1120 = vmatprep.subr.mxu0 0.0
    %1121 = vmatpush1.msra.mxu0 0.0
    %1122 = vmatprep.subr.mxu0 0.0
    %1123 = vmatpush1.msra.mxu0 0.0
    %1124 = vmatprep.subr.mxu0 0.0
    %1125 = vmatpush1.msra.mxu0 0.0
    %1126 = vmatprep.subr.mxu0 0.0
    %1127 = vmatpush1.msra.mxu0 0.0
    %1128 = vmatprep.subr.mxu0 0.0
    %1129 = vmatpush1.msra.mxu0 0.0
    %1130 = vmatprep.subr.mxu0 0.0
    %1131 = vmatpush1.msra.mxu0 0.0
    %1132 = vmatprep.subr.mxu0 0.0
    %1133 = vmatpush1.msra.mxu0 0.0
    %1134 = vmatprep.subr.mxu0 0.0
    %1135 = vmatpush1.msra.mxu0 0.0
    %1136 = vmatprep.subr.mxu0 0.0
    %1137 = vmatpush1.msra.mxu0 0.0
    %1138 = vmatprep.subr.mxu0 0.0
    %1139 = vmatpush1.msra.mxu0 0.0
    %1140 = vmatprep.subr.mxu0 0.0
    %1141 = vmatpush1.msra.mxu0 0.0
    %1142 = vmatprep.subr.mxu0 0.0
    %1143 = vmatpush1.msra.mxu0 0.0
    %1144 = vmatprep.subr.mxu0 0.0
    %1145 = vmatpush1.msra.mxu0 0.0
    %1146 = vmatprep.subr.mxu0 0.0
    %1147 = vmatpush1.msra.mxu0 0.0
    %1148 = vmatprep.subr.mxu0 0.0
    %1149 = vmatpush1.msra.mxu0 0.0
    %1150 = vmatprep.subr.mxu0 0.0
    %1151 = vmatpush1.msra.mxu0 0.0
    %1152 = vmatprep.subr.mxu0 0.0
    %1153 = vmatpush1.msra.mxu0 0.0
    %1154 = vmatprep.mubr.f32.mxu0 0.0
    %1155 = vmatmul.mubr.f32.gmra.mrb[0].mxu0 %v1082
    %v1156 = vpop.f32.mrb[0].mxu0
    %v1157 = vadd.f32 0.0, %v1156
    %v1158 = vpop.f32.mrb[0].mxu0
    %v1159 = vadd.f32 0.0, %v1158
    %1160 = vmatprep.mubr.f32.mxu0 0.0
    %1161 = vmatmul.mubr.f32.gmra.mrb[0].mxu0 %v1084
    %v1162 = vpop.f32.mrb[0].mxu0
    %v1163 = vadd.f32 0.0, %v1162
    %v1164 = vpop.f32.mrb[0].mxu0
    %v1165 = vadd.f32 0.0, %v1164
    %1166 = vmatprep.mubr.f32.mxu0 0.0
    %1167 = vmatmul.mubr.f32.gmra.mrb[0].mxu0 %v1086
    %v1168 = vpop.f32.mrb[0].mxu0
    %v1169 = vadd.f32 0.0, %v1168
    %v1170 = vpop.f32.mrb[0].mxu0
    %v1171 = vadd.f32 0.0, %v1170
    %1172 = vmatprep.mubr.f32.mxu0 0.0
    %1173 = vmatmul.mubr.f32.gmra.mrb[0].mxu0 %v1088
    %v1174 = vpop.f32.mrb[0].mxu0
    %v1175 = vadd.f32 0.0, %v1174
    %v1176 = vpop.f32.mrb[0].mxu0
    %v1177 = vadd.f32 0.0, %v1176
    %1178 = vdwg.mxu0
    %v1179 = vadd.f32 %v1057, %v1157
    %v1180 = vadd.f32 %v1058, %v1159
    %v1181 = vadd.f32 %v1059, %v1163
    %v1182 = vadd.f32 %v1060, %v1165
    %v1183 = vadd.f32 %v1061, %v1169
    %v1184 = vadd.f32 %v1062, %v1171
    %v1185 = vadd.f32 %v1063, %v1175
    %v1186 = vadd.f32 %v1064, %v1177
    %v1187 = vlaneseq
    %v1188 = vshrl.u32 %v1187, 7
    %v1189 = vsub.s32 0, %v1188
    %v1190 = vrot.slane %v27, %v1189
    %v1191 = vlaneseq
    %v1192 = vshrl.u32 %v1191, 7
    %v1193 = vsub.s32 0, %v1192
    %v1194 = vrot.slane %v28, %v1193
    %v1195 = vadd.f32 %v1179, %v1190
    %v1196 = vadd.f32 %v1180, %v1194
    %v1197 = vadd.f32 %v1181, %v1190
    %v1198 = vadd.f32 %v1182, %v1194
    %v1199 = vadd.f32 %v1183, %v1190
    %v1200 = vadd.f32 %v1184, %v1194
    %v1201 = vadd.f32 %v1185, %v1190
    %v1202 = vadd.f32 %v1186, %v1194
    %v1203 = vmax.f32 %v1195, 0.0
    %v1204 = vmax.f32 %v1196, 0.0
    %v1205 = vmax.f32 %v1197, 0.0
    %v1206 = vmax.f32 %v1198, 0.0
    %v1207 = vmax.f32 %v1199, 0.0
    %v1208 = vmax.f32 %v1200, 0.0
    %v1209 = vmax.f32 %v1201, 0.0
    %v1210 = vmax.f32 %v1202, 0.0
    %v1211 = vadd.f32 %v1203, %v1205
    %v1212 = vadd.f32 %v1211, %v1207
    %v1213 = vsel %vm1074, %v1209, 0.0
    %v1214 = vadd.f32 %v1212, %v1213
    %v1215 = vrot.slane %v1214, 4
    %v1216 = vadd.f32 %v1214, %v1215
    %v1217 = vrot.slane %v1216, 2
    %v1218 = vadd.f32 %v1216, %v1217
    %v1219 = vrot.slane %v1218, 1
    %v1220 = vadd.f32 %v1218, %v1219
    %vm1221 = vcmask 326656
    %v1222 = vsel %vm1221, %v1204, 0.0
    %v1223 = vsel %vm1221, %v1206, 0.0
    %v1224 = vadd.f32 %v1222, %v1223
    %v1225 = vsel %vm1221, %v1208, 0.0
    %v1226 = vadd.f32 %v1224, %v1225
    %vm1227 = vcmask 322560
    %v1228 = vsel %vm1227, %v1210, 0.0
    %v1229 = vadd.f32 %v1226, %v1228
    %v1230 = vrot.slane %v1229, 4
    %v1231 = vadd.f32 %v1229, %v1230
    %v1232 = vrot.slane %v1231, 2
    %v1233 = vadd.f32 %v1231, %v1232
    %v1234 = vrot.slane %v1233, 1
    %v1235 = vadd.f32 %v1233, %v1234
    %v1236 = vadd.f32 %v1220, 0.0
    %v1237 = vadd.f32 %v1235, 0.0
    %v1238 = vmul.f32 %v1203, %v1203
    %v1239 = vmul.f32 %v1204, %v1204
    %v1240 = vmul.f32 %v1205, %v1205
    %v1241 = vmul.f32 %v1206, %v1206
    %v1242 = vmul.f32 %v1207, %v1207
    %v1243 = vmul.f32 %v1208, %v1208
    %v1244 = vmul.f32 %v1209, %v1209
    %v1245 = vmul.f32 %v1210, %v1210
    %v1246 = vadd.f32 %v1238, %v1240
    %v1247 = vadd.f32 %v1246, %v1242
    %v1248 = vsel %vm1074, %v1244, 0.0
    %v1249 = vadd.f32 %v1247, %v1248
    %v1250 = vrot.slane %v1249, 4
    %v1251 = vadd.f32 %v1249, %v1250
    %v1252 = vrot.slane %v1251, 2
    %v1253 = vadd.f32 %v1251, %v1252
    %v1254 = vrot.slane %v1253, 1
    %v1255 = vadd.f32 %v1253, %v1254
    %v1256 = vsel %vm1221, %v1239, 0.0
    %v1257 = vsel %vm1221, %v1241, 0.0
    %v1258 = vadd.f32 %v1256, %v1257
    %v1259 = vsel %vm1221, %v1243, 0.0
    %v1260 = vadd.f32 %v1258, %v1259
    %v1261 = vsel %vm1227, %v1245, 0.0
    %v1262 = vadd.f32 %v1260, %v1261
    %v1263 = vrot.slane %v1262, 4
    %v1264 = vadd.f32 %v1262, %v1263
    %v1265 = vrot.slane %v1264, 2
    %v1266 = vadd.f32 %v1264, %v1265
    %v1267 = vrot.slane %v1266, 1
    %v1268 = vadd.f32 %v1266, %v1267
    %v1269 = vadd.f32 %v1255, 0.0
    %v1270 = vadd.f32 %v1268, 0.0
    %s1271 = scalar_lea.vmem %s0, 32
    %v1272 = vld [vmem:[%s1271] sm:$0xff]
    %v1273 = vld [vmem:[%s1271 + $0x8] sm:$0xff]
    %v1274 = vld [vmem:[%s1271 + $0x10] sm:$0xff]
    %v1275 = vld [vmem:[%s1271 + $0x18] sm:$0xff]
    %v1280 = vrot.slane %v1272, 1
    %v1281 = vrot.slane %v1273, 1
    %v1282 = vsel %vm618, %v1280, %v1281
    %v1283 = vrot.slane %v1274, 1
    %v1284 = vsel %vm618, %v1281, %v1283
    %v1285 = vrot.slane %v1275, 1
    %v1286 = vsel %vm618, %v1283, %v1285
    %v1287 = vsel %vm626, %v1282, 0
    %v1289 = vsel %vm626, %v1284, 0
    %v1291 = vsel %vm626, %v1286, 0
    %v1293 = vsel %vm626, %v1285, 0
    %1295 = vmatprep.subr.mxu0 %v607
    %1296 = vmatpush1.msra.mxu0 %v606
    %1297 = vmatprep.subr.mxu0 %v609
    %1298 = vmatpush1.msra.mxu0 %v608
    %1299 = vmatprep.subr.mxu0 %v611
    %1300 = vmatpush1.msra.mxu0 %v610
    %1301 = vmatprep.subr.mxu0 %v613
    %1302 = vmatpush1.msra.mxu0 %v612
    %1303 = vmatprep.subr.mxu0 0.0
    %1304 = vmatpush1.msra.mxu0 0.0
    %1305 = vmatprep.subr.mxu0 0.0
    %1306 = vmatpush1.msra.mxu0 0.0
    %1307 = vmatprep.subr.mxu0 0.0
    %1308 = vmatpush1.msra.mxu0 0.0
    %1309 = vmatprep.subr.mxu0 0.0
    %1310 = vmatpush1.msra.mxu0 0.0
    %1311 = vmatprep.subr.mxu0 0.0
    %1312 = vmatpush1.msra.mxu0 0.0
    %1313 = vmatprep.subr.mxu0 0.0
    %1314 = vmatpush1.msra.mxu0 0.0
    %1315 = vmatprep.subr.mxu0 0.0
    %1316 = vmatpush1.msra.mxu0 0.0
    %1317 = vmatprep.subr.mxu0 0.0
    %1318 = vmatpush1.msra.mxu0 0.0
    %1319 = vmatprep.subr.mxu0 0.0
    %1320 = vmatpush1.msra.mxu0 0.0
    %1321 = vmatprep.subr.mxu0 0.0
    %1322 = vmatpush1.msra.mxu0 0.0
    %1323 = vmatprep.subr.mxu0 0.0
    %1324 = vmatpush1.msra.mxu0 0.0
    %1325 = vmatprep.subr.mxu0 0.0
    %1326 = vmatpush1.msra.mxu0 0.0
    %1327 = vmatprep.subr.mxu0 0.0
    %1328 = vmatpush1.msra.mxu0 0.0
    %1329 = vmatprep.subr.mxu0 0.0
    %1330 = vmatpush1.msra.mxu0 0.0
    %1331 = vmatprep.subr.mxu0 0.0
    %1332 = vmatpush1.msra.mxu0 0.0
    %1333 = vmatprep.subr.mxu0 0.0
    %1334 = vmatpush1.msra.mxu0 0.0
    %1335 = vmatprep.subr.mxu0 0.0
    %1336 = vmatpush1.msra.mxu0 0.0
    %1337 = vmatprep.subr.mxu0 0.0
    %1338 = vmatpush1.msra.mxu0 0.0
    %1339 = vmatprep.subr.mxu0 0.0
    %1340 = vmatpush1.msra.mxu0 0.0
    %1341 = vmatprep.subr.mxu0 0.0
    %1342 = vmatpush1.msra.mxu0 0.0
    %1343 = vmatprep.subr.mxu0 0.0
    %1344 = vmatpush1.msra.mxu0 0.0
    %1345 = vmatprep.subr.mxu0 0.0
    %1346 = vmatpush1.msra.mxu0 0.0
    %1347 = vmatprep.subr.mxu0 0.0
    %1348 = vmatpush1.msra.mxu0 0.0
    %1349 = vmatprep.subr.mxu0 0.0
    %1350 = vmatpush1.msra.mxu0 0.0
    %1351 = vmatprep.subr.mxu0 0.0
    %1352 = vmatpush1.msra.mxu0 0.0
    %1353 = vmatprep.subr.mxu0 0.0
    %1354 = vmatpush1.msra.mxu0 0.0
    %1355 = vmatprep.subr.mxu0 0.0
    %1356 = vmatpush1.msra.mxu0 0.0
    %1357 = vmatprep.subr.mxu0 0.0
    %1358 = vmatpush1.msra.mxu0 0.0
    %1359 = vmatprep.mubr.f32.mxu0 0.0
    %1360 = vmatmul.mubr.f32.gmra.mrb[0].mxu0 %v1287
    %v1361 = vpop.f32.mrb[0].mxu0
    %v1362 = vadd.f32 0.0, %v1361
    %v1363 = vpop.f32.mrb[0].mxu0
    %v1364 = vadd.f32 0.0, %v1363
    %1365 = vmatprep.mubr.f32.mxu0 0.0
    %1366 = vmatmul.mubr.f32.gmra.mrb[0].mxu0 %v1289
    %v1367 = vpop.f32.mrb[0].mxu0
    %v1368 = vadd.f32 0.0, %v1367
    %v1369 = vpop.f32.mrb[0].mxu0
    %v1370 = vadd.f32 0.0, %v1369
    %1371 = vmatprep.mubr.f32.mxu0 0.0
    %1372 = vmatmul.mubr.f32.gmra.mrb[0].mxu0 %v1291
    %v1373 = vpop.f32.mrb[0].mxu0
    %v1374 = vadd.f32 0.0, %v1373
    %v1375 = vpop.f32.mrb[0].mxu0
    %v1376 = vadd.f32 0.0, %v1375
    %1377 = vmatprep.mubr.f32.mxu0 0.0
    %1378 = vmatmul.mubr.f32.gmra.mrb[0].mxu0 %v1293
    %v1379 = vpop.f32.mrb[0].mxu0
    %v1380 = vadd.f32 0.0, %v1379
    %v1381 = vpop.f32.mrb[0].mxu0
    %v1382 = vadd.f32 0.0, %v1381
    %1383 = vdwg.mxu0
    %v1384 = vsel %vm626, %v1272, 0
    %v1386 = vsel %vm626, %v1273, 0
    %v1388 = vsel %vm626, %v1274, 0
    %v1390 = vsel %vm626, %v1275, 0
    %1392 = vmatprep.subr.mxu0 %v598
    %1393 = vmatpush1.msra.mxu0 %v597
    %1394 = vmatprep.subr.mxu0 %v600
    %1395 = vmatpush1.msra.mxu0 %v599
    %1396 = vmatprep.subr.mxu0 %v602
    %1397 = vmatpush1.msra.mxu0 %v601
    %1398 = vmatprep.subr.mxu0 %v604
    %1399 = vmatpush1.msra.mxu0 %v603
    %1400 = vmatprep.subr.mxu0 0.0
    %1401 = vmatpush1.msra.mxu0 0.0
    %1402 = vmatprep.subr.mxu0 0.0
    %1403 = vmatpush1.msra.mxu0 0.0
    %1404 = vmatprep.subr.mxu0 0.0
    %1405 = vmatpush1.msra.mxu0 0.0
    %1406 = vmatprep.subr.mxu0 0.0
    %1407 = vmatpush1.msra.mxu0 0.0
    %1408 = vmatprep.subr.mxu0 0.0
    %1409 = vmatpush1.msra.mxu0 0.0
    %1410 = vmatprep.subr.mxu0 0.0
    %1411 = vmatpush1.msra.mxu0 0.0
    %1412 = vmatprep.subr.mxu0 0.0
    %1413 = vmatpush1.msra.mxu0 0.0
    %1414 = vmatprep.subr.mxu0 0.0
    %1415 = vmatpush1.msra.mxu0 0.0
    %1416 = vmatprep.subr.mxu0 0.0
    %1417 = vmatpush1.msra.mxu0 0.0
    %1418 = vmatprep.subr.mxu0 0.0
    %1419 = vmatpush1.msra.mxu0 0.0
    %1420 = vmatprep.subr.mxu0 0.0
    %1421 = vmatpush1.msra.mxu0 0.0
    %1422 = vmatprep.subr.mxu0 0.0
    %1423 = vmatpush1.msra.mxu0 0.0
    %1424 = vmatprep.subr.mxu0 0.0
    %1425 = vmatpush1.msra.mxu0 0.0
    %1426 = vmatprep.subr.mxu0 0.0
    %1427 = vmatpush1.msra.mxu0 0.0
    %1428 = vmatprep.subr.mxu0 0.0
    %1429 = vmatpush1.msra.mxu0 0.0
    %1430 = vmatprep.subr.mxu0 0.0
    %1431 = vmatpush1.msra.mxu0 0.0
    %1432 = vmatprep.subr.mxu0 0.0
    %1433 = vmatpush1.msra.mxu0 0.0
    %1434 = vmatprep.subr.mxu0 0.0
    %1435 = vmatpush1.msra.mxu0 0.0
    %1436 = vmatprep.subr.mxu0 0.0
    %1437 = vmatpush1.msra.mxu0 0.0
    %1438 = vmatprep.subr.mxu0 0.0
    %1439 = vmatpush1.msra.mxu0 0.0
    %1440 = vmatprep.subr.mxu0 0.0
    %1441 = vmatpush1.msra.mxu0 0.0
    %1442 = vmatprep.subr.mxu0 0.0
    %1443 = vmatpush1.msra.mxu0 0.0
    %1444 = vmatprep.subr.mxu0 0.0
    %1445 = vmatpush1.msra.mxu0 0.0
    %1446 = vmatprep.subr.mxu0 0.0
    %1447 = vmatpush1.msra.mxu0 0.0
    %1448 = vmatprep.subr.mxu0 0.0
    %1449 = vmatpush1.msra.mxu0 0.0
    %1450 = vmatprep.subr.mxu0 0.0
    %1451 = vmatpush1.msra.mxu0 0.0
    %1452 = vmatprep.subr.mxu0 0.0
    %1453 = vmatpush1.msra.mxu0 0.0
    %1454 = vmatprep.subr.mxu0 0.0
    %1455 = vmatpush1.msra.mxu0 0.0
    %1456 = vmatprep.mubr.f32.mxu0 0.0
    %1457 = vmatmul.mubr.f32.gmra.mrb[0].mxu0 %v1384
    %v1458 = vpop.f32.mrb[0].mxu0
    %v1459 = vadd.f32 %v1362, %v1458
    %v1460 = vpop.f32.mrb[0].mxu0
    %v1461 = vadd.f32 %v1364, %v1460
    %1462 = vmatprep.mubr.f32.mxu0 0.0
    %1463 = vmatmul.mubr.f32.gmra.mrb[0].mxu0 %v1386
    %v1464 = vpop.f32.mrb[0].mxu0
    %v1465 = vadd.f32 %v1368, %v1464
    %v1466 = vpop.f32.mrb[0].mxu0
    %v1467 = vadd.f32 %v1370, %v1466
    %1468 = vmatprep.mubr.f32.mxu0 0.0
    %1469 = vmatmul.mubr.f32.gmra.mrb[0].mxu0 %v1388
    %v1470 = vpop.f32.mrb[0].mxu0
    %v1471 = vadd.f32 %v1374, %v1470
    %v1472 = vpop.f32.mrb[0].mxu0
    %v1473 = vadd.f32 %v1376, %v1472
    %1474 = vmatprep.mubr.f32.mxu0 0.0
    %1475 = vmatmul.mubr.f32.gmra.mrb[0].mxu0 %v1390
    %v1476 = vpop.f32.mrb[0].mxu0
    %v1477 = vadd.f32 %v1380, %v1476
    %v1478 = vpop.f32.mrb[0].mxu0
    %v1479 = vadd.f32 %v1382, %v1478
    %1480 = vdwg.mxu0
    %v1481 = vrot.slane %v1272, 2
    %v1482 = vrot.slane %v1273, 2
    %v1483 = vsel %vm830, %v1481, %v1482
    %v1484 = vrot.slane %v1274, 2
    %v1485 = vsel %vm830, %v1482, %v1484
    %v1486 = vrot.slane %v1275, 2
    %v1487 = vsel %vm830, %v1484, %v1486
    %v1488 = vsel %vm626, %v1483, 0
    %v1490 = vsel %vm626, %v1485, 0
    %v1492 = vsel %vm626, %v1487, 0
    %v1494 = vsel %vm626, %v1486, 0
    %1496 = vmatprep.subr.mxu0 %v823
    %1497 = vmatpush1.msra.mxu0 %v822
    %1498 = vmatprep.subr.mxu0 %v825
    %1499 = vmatpush1.msra.mxu0 %v824
    %1500 = vmatprep.subr.mxu0 %v827
    %1501 = vmatpush1.msra.mxu0 %v826
    %1502 = vmatprep.subr.mxu0 %v829
    %1503 = vmatpush1.msra.mxu0 %v828
    %1504 = vmatprep.subr.mxu0 0.0
    %1505 = vmatpush1.msra.mxu0 0.0
    %1506 = vmatprep.subr.mxu0 0.0
    %1507 = vmatpush1.msra.mxu0 0.0
    %1508 = vmatprep.subr.mxu0 0.0
    %1509 = vmatpush1.msra.mxu0 0.0
    %1510 = vmatprep.subr.mxu0 0.0
    %1511 = vmatpush1.msra.mxu0 0.0
    %1512 = vmatprep.subr.mxu0 0.0
    %1513 = vmatpush1.msra.mxu0 0.0
    %1514 = vmatprep.subr.mxu0 0.0
    %1515 = vmatpush1.msra.mxu0 0.0
    %1516 = vmatprep.subr.mxu0 0.0
    %1517 = vmatpush1.msra.mxu0 0.0
    %1518 = vmatprep.subr.mxu0 0.0
    %1519 = vmatpush1.msra.mxu0 0.0
    %1520 = vmatprep.subr.mxu0 0.0
    %1521 = vmatpush1.msra.mxu0 0.0
    %1522 = vmatprep.subr.mxu0 0.0
    %1523 = vmatpush1.msra.mxu0 0.0
    %1524 = vmatprep.subr.mxu0 0.0
    %1525 = vmatpush1.msra.mxu0 0.0
    %1526 = vmatprep.subr.mxu0 0.0
    %1527 = vmatpush1.msra.mxu0 0.0
    %1528 = vmatprep.subr.mxu0 0.0
    %1529 = vmatpush1.msra.mxu0 0.0
    %1530 = vmatprep.subr.mxu0 0.0
    %1531 = vmatpush1.msra.mxu0 0.0
    %1532 = vmatprep.subr.mxu0 0.0
    %1533 = vmatpush1.msra.mxu0 0.0
    %1534 = vmatprep.subr.mxu0 0.0
    %1535 = vmatpush1.msra.mxu0 0.0
    %1536 = vmatprep.subr.mxu0 0.0
    %1537 = vmatpush1.msra.mxu0 0.0
    %1538 = vmatprep.subr.mxu0 0.0
    %1539 = vmatpush1.msra.mxu0 0.0
    %1540 = vmatprep.subr.mxu0 0.0
    %1541 = vmatpush1.msra.mxu0 0.0
    %1542 = vmatprep.subr.mxu0 0.0
    %1543 = vmatpush1.msra.mxu0 0.0
    %1544 = vmatprep.subr.mxu0 0.0
    %1545 = vmatpush1.msra.mxu0 0.0
    %1546 = vmatprep.subr.mxu0 0.0
    %1547 = vmatpush1.msra.mxu0 0.0
    %1548 = vmatprep.subr.mxu0 0.0
    %1549 = vmatpush1.msra.mxu0 0.0
    %1550 = vmatprep.subr.mxu0 0.0
    %1551 = vmatpush1.msra.mxu0 0.0
    %1552 = vmatprep.subr.mxu0 0.0
    %1553 = vmatpush1.msra.mxu0 0.0
    %1554 = vmatprep.subr.mxu0 0.0
    %1555 = vmatpush1.msra.mxu0 0.0
    %1556 = vmatprep.subr.mxu0 0.0
    %1557 = vmatpush1.msra.mxu0 0.0
    %1558 = vmatprep.subr.mxu0 0.0
    %1559 = vmatpush1.msra.mxu0 0.0
    %1560 = vmatprep.mubr.f32.mxu0 0.0
    %1561 = vmatmul.mubr.f32.gmra.mrb[0].mxu0 %v1488
    %v1562 = vpop.f32.mrb[0].mxu0
    %v1563 = vadd.f32 0.0, %v1562
    %v1564 = vpop.f32.mrb[0].mxu0
    %v1565 = vadd.f32 0.0, %v1564
    %1566 = vmatprep.mubr.f32.mxu0 0.0
    %1567 = vmatmul.mubr.f32.gmra.mrb[0].mxu0 %v1490
    %v1568 = vpop.f32.mrb[0].mxu0
    %v1569 = vadd.f32 0.0, %v1568
    %v1570 = vpop.f32.mrb[0].mxu0
    %v1571 = vadd.f32 0.0, %v1570
    %1572 = vmatprep.mubr.f32.mxu0 0.0
    %1573 = vmatmul.mubr.f32.gmra.mrb[0].mxu0 %v1492
    %v1574 = vpop.f32.mrb[0].mxu0
    %v1575 = vadd.f32 0.0, %v1574
    %v1576 = vpop.f32.mrb[0].mxu0
    %v1577 = vadd.f32 0.0, %v1576
    %1578 = vmatprep.mubr.f32.mxu0 0.0
    %1579 = vmatmul.mubr.f32.gmra.mrb[0].mxu0 %v1494
    %v1580 = vpop.f32.mrb[0].mxu0
    %v1581 = vadd.f32 0.0, %v1580
    %v1582 = vpop.f32.mrb[0].mxu0
    %v1583 = vadd.f32 0.0, %v1582
    %1584 = vdwg.mxu0
    %v1585 = vadd.f32 %v1459, %v1563
    %v1586 = vadd.f32 %v1461, %v1565
    %v1587 = vadd.f32 %v1465, %v1569
    %v1588 = vadd.f32 %v1467, %v1571
    %v1589 = vadd.f32 %v1471, %v1575
    %v1590 = vadd.f32 %v1473, %v1577
    %v1591 = vadd.f32 %v1477, %v1581
    %v1592 = vadd.f32 %v1479, %v1583
    %v1593 = vrot.slane %v1272, 3
    %v1594 = vrot.slane %v1273, 3
    %v1595 = vsel %vm952, %v1593, %v1594
    %v1596 = vrot.slane %v1274, 3
    %v1597 = vsel %vm952, %v1594, %v1596
    %v1598 = vrot.slane %v1275, 3
    %v1599 = vsel %vm952, %v1596, %v1598
    %v1600 = vsel %vm626, %v1595, 0
    %v1602 = vsel %vm626, %v1597, 0
    %v1604 = vsel %vm626, %v1599, 0
    %v1606 = vsel %vm626, %v1598, 0
    %1608 = vmatprep.subr.mxu0 %v945
    %1609 = vmatpush1.msra.mxu0 %v944
    %1610 = vmatprep.subr.mxu0 %v947
    %1611 = vmatpush1.msra.mxu0 %v946
    %1612 = vmatprep.subr.mxu0 %v949
    %1613 = vmatpush1.msra.mxu0 %v948
    %1614 = vmatprep.subr.mxu0 %v951
    %1615 = vmatpush1.msra.mxu0 %v950
    %1616 = vmatprep.subr.mxu0 0.0
    %1617 = vmatpush1.msra.mxu0 0.0
    %1618 = vmatprep.subr.mxu0 0.0
    %1619 = vmatpush1.msra.mxu0 0.0
    %1620 = vmatprep.subr.mxu0 0.0
    %1621 = vmatpush1.msra.mxu0 0.0
    %1622 = vmatprep.subr.mxu0 0.0
    %1623 = vmatpush1.msra.mxu0 0.0
    %1624 = vmatprep.subr.mxu0 0.0
    %1625 = vmatpush1.msra.mxu0 0.0
    %1626 = vmatprep.subr.mxu0 0.0
    %1627 = vmatpush1.msra.mxu0 0.0
    %1628 = vmatprep.subr.mxu0 0.0
    %1629 = vmatpush1.msra.mxu0 0.0
    %1630 = vmatprep.subr.mxu0 0.0
    %1631 = vmatpush1.msra.mxu0 0.0
    %1632 = vmatprep.subr.mxu0 0.0
    %1633 = vmatpush1.msra.mxu0 0.0
    %1634 = vmatprep.subr.mxu0 0.0
    %1635 = vmatpush1.msra.mxu0 0.0
    %1636 = vmatprep.subr.mxu0 0.0
    %1637 = vmatpush1.msra.mxu0 0.0
    %1638 = vmatprep.subr.mxu0 0.0
    %1639 = vmatpush1.msra.mxu0 0.0
    %1640 = vmatprep.subr.mxu0 0.0
    %1641 = vmatpush1.msra.mxu0 0.0
    %1642 = vmatprep.subr.mxu0 0.0
    %1643 = vmatpush1.msra.mxu0 0.0
    %1644 = vmatprep.subr.mxu0 0.0
    %1645 = vmatpush1.msra.mxu0 0.0
    %1646 = vmatprep.subr.mxu0 0.0
    %1647 = vmatpush1.msra.mxu0 0.0
    %1648 = vmatprep.subr.mxu0 0.0
    %1649 = vmatpush1.msra.mxu0 0.0
    %1650 = vmatprep.subr.mxu0 0.0
    %1651 = vmatpush1.msra.mxu0 0.0
    %1652 = vmatprep.subr.mxu0 0.0
    %1653 = vmatpush1.msra.mxu0 0.0
    %1654 = vmatprep.subr.mxu0 0.0
    %1655 = vmatpush1.msra.mxu0 0.0
    %1656 = vmatprep.subr.mxu0 0.0
    %1657 = vmatpush1.msra.mxu0 0.0
    %1658 = vmatprep.subr.mxu0 0.0
    %1659 = vmatpush1.msra.mxu0 0.0
    %1660 = vmatprep.subr.mxu0 0.0
    %1661 = vmatpush1.msra.mxu0 0.0
    %1662 = vmatprep.subr.mxu0 0.0
    %1663 = vmatpush1.msra.mxu0 0.0
    %1664 = vmatprep.subr.mxu0 0.0
    %1665 = vmatpush1.msra.mxu0 0.0
    %1666 = vmatprep.subr.mxu0 0.0
    %1667 = vmatpush1.msra.mxu0 0.0
    %1668 = vmatprep.subr.mxu0 0.0
    %1669 = vmatpush1.msra.mxu0 0.0
    %1670 = vmatprep.subr.mxu0 0.0
    %1671 = vmatpush1.msra.mxu0 0.0
    %1672 = vmatprep.mubr.f32.mxu0 0.0
    %1673 = vmatmul.mubr.f32.gmra.mrb[0].mxu0 %v1600
    %v1674 = vpop.f32.mrb[0].mxu0
    %v1675 = vadd.f32 0.0, %v1674
    %v1676 = vpop.f32.mrb[0].mxu0
    %v1677 = vadd.f32 0.0, %v1676
    %1678 = vmatprep.mubr.f32.mxu0 0.0
    %1679 = vmatmul.mubr.f32.gmra.mrb[0].mxu0 %v1602
    %v1680 = vpop.f32.mrb[0].mxu0
    %v1681 = vadd.f32 0.0, %v1680
    %v1682 = vpop.f32.mrb[0].mxu0
    %v1683 = vadd.f32 0.0, %v1682
    %1684 = vmatprep.mubr.f32.mxu0 0.0
    %1685 = vmatmul.mubr.f32.gmra.mrb[0].mxu0 %v1604
    %v1686 = vpop.f32.mrb[0].mxu0
    %v1687 = vadd.f32 0.0, %v1686
    %v1688 = vpop.f32.mrb[0].mxu0
    %v1689 = vadd.f32 0.0, %v1688
    %1690 = vmatprep.mubr.f32.mxu0 0.0
    %1691 = vmatmul.mubr.f32.gmra.mrb[0].mxu0 %v1606
    %v1692 = vpop.f32.mrb[0].mxu0
    %v1693 = vadd.f32 0.0, %v1692
    %v1694 = vpop.f32.mrb[0].mxu0
    %v1695 = vadd.f32 0.0, %v1694
    %1696 = vdwg.mxu0
    %v1697 = vadd.f32 %v1585, %v1675
    %v1698 = vadd.f32 %v1586, %v1677
    %v1699 = vadd.f32 %v1587, %v1681
    %v1700 = vadd.f32 %v1588, %v1683
    %v1701 = vadd.f32 %v1589, %v1687
    %v1702 = vadd.f32 %v1590, %v1689
    %v1703 = vadd.f32 %v1591, %v1693
    %v1704 = vadd.f32 %v1592, %v1695
    %v1705 = vrot.slane %v1272, 4
    %v1706 = vrot.slane %v1273, 4
    %v1707 = vsel %vm1074, %v1705, %v1706
    %v1708 = vrot.slane %v1274, 4
    %v1709 = vsel %vm1074, %v1706, %v1708
    %v1710 = vrot.slane %v1275, 4
    %v1711 = vsel %vm1074, %v1708, %v1710
    %v1712 = vsel %vm626, %v1707, 0
    %v1714 = vsel %vm626, %v1709, 0
    %v1716 = vsel %vm626, %v1711, 0
    %v1718 = vsel %vm626, %v1710, 0
    %1720 = vmatprep.subr.mxu0 %v1067
    %1721 = vmatpush1.msra.mxu0 %v1066
    %1722 = vmatprep.subr.mxu0 %v1069
    %1723 = vmatpush1.msra.mxu0 %v1068
    %1724 = vmatprep.subr.mxu0 %v1071
    %1725 = vmatpush1.msra.mxu0 %v1070
    %1726 = vmatprep.subr.mxu0 %v1073
    %1727 = vmatpush1.msra.mxu0 %v1072
    %1728 = vmatprep.subr.mxu0 0.0
    %1729 = vmatpush1.msra.mxu0 0.0
    %1730 = vmatprep.subr.mxu0 0.0
    %1731 = vmatpush1.msra.mxu0 0.0
    %1732 = vmatprep.subr.mxu0 0.0
    %1733 = vmatpush1.msra.mxu0 0.0
    %1734 = vmatprep.subr.mxu0 0.0
    %1735 = vmatpush1.msra.mxu0 0.0
    %1736 = vmatprep.subr.mxu0 0.0
    %1737 = vmatpush1.msra.mxu0 0.0
    %1738 = vmatprep.subr.mxu0 0.0
    %1739 = vmatpush1.msra.mxu0 0.0
    %1740 = vmatprep.subr.mxu0 0.0
    %1741 = vmatpush1.msra.mxu0 0.0
    %1742 = vmatprep.subr.mxu0 0.0
    %1743 = vmatpush1.msra.mxu0 0.0
    %1744 = vmatprep.subr.mxu0 0.0
    %1745 = vmatpush1.msra.mxu0 0.0
    %1746 = vmatprep.subr.mxu0 0.0
    %1747 = vmatpush1.msra.mxu0 0.0
    %1748 = vmatprep.subr.mxu0 0.0
    %1749 = vmatpush1.msra.mxu0 0.0
    %1750 = vmatprep.subr.mxu0 0.0
    %1751 = vmatpush1.msra.mxu0 0.0
    %1752 = vmatprep.subr.mxu0 0.0
    %1753 = vmatpush1.msra.mxu0 0.0
    %1754 = vmatprep.subr.mxu0 0.0
    %1755 = vmatpush1.msra.mxu0 0.0
    %1756 = vmatprep.subr.mxu0 0.0
    %1757 = vmatpush1.msra.mxu0 0.0
    %1758 = vmatprep.subr.mxu0 0.0
    %1759 = vmatpush1.msra.mxu0 0.0
    %1760 = vmatprep.subr.mxu0 0.0
    %1761 = vmatpush1.msra.mxu0 0.0
    %1762 = vmatprep.subr.mxu0 0.0
    %1763 = vmatpush1.msra.mxu0 0.0
    %1764 = vmatprep.subr.mxu0 0.0
    %1765 = vmatpush1.msra.mxu0 0.0
    %1766 = vmatprep.subr.mxu0 0.0
    %1767 = vmatpush1.msra.mxu0 0.0
    %1768 = vmatprep.subr.mxu0 0.0
    %1769 = vmatpush1.msra.mxu0 0.0
    %1770 = vmatprep.subr.mxu0 0.0
    %1771 = vmatpush1.msra.mxu0 0.0
    %1772 = vmatprep.subr.mxu0 0.0
    %1773 = vmatpush1.msra.mxu0 0.0
    %1774 = vmatprep.subr.mxu0 0.0
    %1775 = vmatpush1.msra.mxu0 0.0
    %1776 = vmatprep.subr.mxu0 0.0
    %1777 = vmatpush1.msra.mxu0 0.0
    %1778 = vmatprep.subr.mxu0 0.0
    %1779 = vmatpush1.msra.mxu0 0.0
    %1780 = vmatprep.subr.mxu0 0.0
    %1781 = vmatpush1.msra.mxu0 0.0
    %1782 = vmatprep.subr.mxu0 0.0
    %1783 = vmatpush1.msra.mxu0 0.0
    %1784 = vmatprep.mubr.f32.mxu0 0.0
    %1785 = vmatmul.mubr.f32.gmra.mrb[0].mxu0 %v1712
    %v1786 = vpop.f32.mrb[0].mxu0
    %v1787 = vadd.f32 0.0, %v1786
    %v1788 = vpop.f32.mrb[0].mxu0
    %v1789 = vadd.f32 0.0, %v1788
    %1790 = vmatprep.mubr.f32.mxu0 0.0
    %1791 = vmatmul.mubr.f32.gmra.mrb[0].mxu0 %v1714
    %v1792 = vpop.f32.mrb[0].mxu0
    %v1793 = vadd.f32 0.0, %v1792
    %v1794 = vpop.f32.mrb[0].mxu0
    %v1795 = vadd.f32 0.0, %v1794
    %1796 = vmatprep.mubr.f32.mxu0 0.0
    %1797 = vmatmul.mubr.f32.gmra.mrb[0].mxu0 %v1716
    %v1798 = vpop.f32.mrb[0].mxu0
    %v1799 = vadd.f32 0.0, %v1798
    %v1800 = vpop.f32.mrb[0].mxu0
    %v1801 = vadd.f32 0.0, %v1800
    %1802 = vmatprep.mubr.f32.mxu0 0.0
    %1803 = vmatmul.mubr.f32.gmra.mrb[0].mxu0 %v1718
    %v1804 = vpop.f32.mrb[0].mxu0
    %v1805 = vadd.f32 0.0, %v1804
    %v1806 = vpop.f32.mrb[0].mxu0
    %v1807 = vadd.f32 0.0, %v1806
    %1808 = vdwg.mxu0
    %v1809 = vadd.f32 %v1697, %v1787
    %v1810 = vadd.f32 %v1698, %v1789
    %v1811 = vadd.f32 %v1699, %v1793
    %v1812 = vadd.f32 %v1700, %v1795
    %v1813 = vadd.f32 %v1701, %v1799
    %v1814 = vadd.f32 %v1702, %v1801
    %v1815 = vadd.f32 %v1703, %v1805
    %v1816 = vadd.f32 %v1704, %v1807
    %v1817 = vadd.f32 %v1809, %v1190
    %v1818 = vadd.f32 %v1810, %v1194
    %v1819 = vadd.f32 %v1811, %v1190
    %v1820 = vadd.f32 %v1812, %v1194
    %v1821 = vadd.f32 %v1813, %v1190
    %v1822 = vadd.f32 %v1814, %v1194
    %v1823 = vadd.f32 %v1815, %v1190
    %v1824 = vadd.f32 %v1816, %v1194
    %v1825 = vmax.f32 %v1817, 0.0
    %v1826 = vmax.f32 %v1818, 0.0
    %v1827 = vmax.f32 %v1819, 0.0
    %v1828 = vmax.f32 %v1820, 0.0
    %v1829 = vmax.f32 %v1821, 0.0
    %v1830 = vmax.f32 %v1822, 0.0
    %v1831 = vmax.f32 %v1823, 0.0
    %v1832 = vmax.f32 %v1824, 0.0
    %v1833 = vadd.f32 %v1825, %v1827
    %v1834 = vadd.f32 %v1833, %v1829
    %v1835 = vsel %vm1074, %v1831, 0.0
    %v1836 = vadd.f32 %v1834, %v1835
    %v1837 = vrot.slane %v1836, 4
    %v1838 = vadd.f32 %v1836, %v1837
    %v1839 = vrot.slane %v1838, 2
    %v1840 = vadd.f32 %v1838, %v1839
    %v1841 = vrot.slane %v1840, 1
    %v1842 = vadd.f32 %v1840, %v1841
    %v1843 = vsel %vm1221, %v1826, 0.0
    %v1844 = vsel %vm1221, %v1828, 0.0
    %v1845 = vadd.f32 %v1843, %v1844
    %v1846 = vsel %vm1221, %v1830, 0.0
    %v1847 = vadd.f32 %v1845, %v1846
    %v1848 = vsel %vm1227, %v1832, 0.0
    %v1849 = vadd.f32 %v1847, %v1848
    %v1850 = vrot.slane %v1849, 4
    %v1851 = vadd.f32 %v1849, %v1850
    %v1852 = vrot.slane %v1851, 2
    %v1853 = vadd.f32 %v1851, %v1852
    %v1854 = vrot.slane %v1853, 1
    %v1855 = vadd.f32 %v1853, %v1854
    %v1856 = vadd.f32 %v1236, %v1842
    %v1857 = vadd.f32 %v1237, %v1855
    %v1858 = vmul.f32 %v1825, %v1825
    %v1859 = vmul.f32 %v1826, %v1826
    %v1860 = vmul.f32 %v1827, %v1827
    %v1861 = vmul.f32 %v1828, %v1828
    %v1862 = vmul.f32 %v1829, %v1829
    %v1863 = vmul.f32 %v1830, %v1830
    %v1864 = vmul.f32 %v1831, %v1831
    %v1865 = vmul.f32 %v1832, %v1832
    %v1866 = vadd.f32 %v1858, %v1860
    %v1867 = vadd.f32 %v1866, %v1862
    %v1868 = vsel %vm1074, %v1864, 0.0
    %v1869 = vadd.f32 %v1867, %v1868
    %v1870 = vrot.slane %v1869, 4
    %v1871 = vadd.f32 %v1869, %v1870
    %v1872 = vrot.slane %v1871, 2
    %v1873 = vadd.f32 %v1871, %v1872
    %v1874 = vrot.slane %v1873, 1
    %v1875 = vadd.f32 %v1873, %v1874
    %v1876 = vsel %vm1221, %v1859, 0.0
    %v1877 = vsel %vm1221, %v1861, 0.0
    %v1878 = vadd.f32 %v1876, %v1877
    %v1879 = vsel %vm1221, %v1863, 0.0
    %v1880 = vadd.f32 %v1878, %v1879
    %v1881 = vsel %vm1227, %v1865, 0.0
    %v1882 = vadd.f32 %v1880, %v1881
    %v1883 = vrot.slane %v1882, 4
    %v1884 = vadd.f32 %v1882, %v1883
    %v1885 = vrot.slane %v1884, 2
    %v1886 = vadd.f32 %v1884, %v1885
    %v1887 = vrot.slane %v1886, 1
    %v1888 = vadd.f32 %v1886, %v1887
    %v1889 = vadd.f32 %v1269, %v1875
    %v1890 = vadd.f32 %v1270, %v1888
    %v1892 = vsel %vm1221, %v1857, 0
    %1894 = vmatprep.subr.mxu0 0.0
    %1895 = vmatpush1.msra.mxu0 %v183
    %1896 = vmatprep.subr.mxu0 0.0
    %1897 = vmatpush1.msra.mxu0 %v184
    %1898 = vmatprep.subr.mxu0 0.0
    %1899 = vmatpush1.msra.mxu0 %v185
    %1900 = vmatprep.subr.mxu0 0.0
    %1901 = vmatpush1.msra.mxu0 %v186
    %1902 = vmatprep.subr.mxu0 0.0
    %1903 = vmatpush1.msra.mxu0 %v187
    %1904 = vmatprep.subr.mxu0 0.0
    %1905 = vmatpush1.msra.mxu0 %v188
    %1906 = vmatprep.subr.mxu0 0.0
    %1907 = vmatpush1.msra.mxu0 %v189
    %1908 = vmatprep.subr.mxu0 0.0
    %1909 = vmatpush1.msra.mxu0 %v190
    %1910 = vmatprep.subr.mxu0 0.0
    %1911 = vmatpush1.msra.mxu0 %v191
    %1912 = vmatprep.subr.mxu0 0.0
    %1913 = vmatpush1.msra.mxu0 %v192
    %1914 = vmatprep.subr.mxu0 0.0
    %1915 = vmatpush1.msra.mxu0 %v193
    %1916 = vmatprep.subr.mxu0 0.0
    %1917 = vmatpush1.msra.mxu0 %v194
    %1918 = vmatprep.subr.mxu0 0.0
    %1919 = vmatpush1.msra.mxu0 %v195
    %1920 = vmatprep.subr.mxu0 0.0
    %1921 = vmatpush1.msra.mxu0 %v196
    %1922 = vmatprep.subr.mxu0 0.0
    %1923 = vmatpush1.msra.mxu0 %v197
    %1924 = vmatprep.subr.mxu0 0.0
    %1925 = vmatpush1.msra.mxu0 %v198
    %1926 = vmatprep.subr.mxu0 0.0
    %1927 = vmatpush1.msra.mxu0 %v199
    %1928 = vmatprep.subr.mxu0 0.0
    %1929 = vmatpush1.msra.mxu0 %v200
    %1930 = vmatprep.subr.mxu0 0.0
    %1931 = vmatpush1.msra.mxu0 %v201
    %1932 = vmatprep.subr.mxu0 0.0
    %1933 = vmatpush1.msra.mxu0 %v202
    %1934 = vmatprep.subr.mxu0 0.0
    %1935 = vmatpush1.msra.mxu0 %v203
    %1936 = vmatprep.subr.mxu0 0.0
    %1937 = vmatpush1.msra.mxu0 0.0
    %1938 = vmatprep.subr.mxu0 0.0
    %1939 = vmatpush1.msra.mxu0 0.0
    %1940 = vmatprep.subr.mxu0 0.0
    %1941 = vmatpush1.msra.mxu0 0.0
    %1942 = vmatprep.subr.mxu0 0.0
    %1943 = vmatpush1.msra.mxu0 0.0
    %1944 = vmatprep.subr.mxu0 0.0
    %1945 = vmatpush1.msra.mxu0 0.0
    %1946 = vmatprep.subr.mxu0 0.0
    %1947 = vmatpush1.msra.mxu0 0.0
    %1948 = vmatprep.subr.mxu0 0.0
    %1949 = vmatpush1.msra.mxu0 0.0
    %1950 = vmatprep.subr.mxu0 0.0
    %1951 = vmatpush1.msra.mxu0 0.0
    %1952 = vmatprep.subr.mxu0 0.0
    %1953 = vmatpush1.msra.mxu0 0.0
    %1954 = vmatprep.subr.mxu0 0.0
    %1955 = vmatpush1.msra.mxu0 0.0
    %1956 = vmatprep.subr.mxu0 0.0
    %1957 = vmatpush1.msra.mxu0 0.0
    %1958 = vmatprep.mubr.f32.mxu0 %v1892
    %1959 = vmatmul.mubr.f32.gmra.mrb[0].mxu0 %v1856
    %v1960 = vpop.f32.mrb[0].mxu0
    %v1961 = vadd.f32 0.0, %v1960
    %v1962 = vpop.f32.mrb[0].mxu0
    %1963 = vdwg.mxu0
    %v1964 = vrcp.pop 1568.0
    %v1965 = vmul.f32 %v1961, %v1964
    %v1967 = vsel %vm1221, %v1890, 0
    %1969 = vmatprep.subr.mxu0 0.0
    %1970 = vmatpush1.msra.mxu0 %v183
    %1971 = vmatprep.subr.mxu0 0.0
    %1972 = vmatpush1.msra.mxu0 %v184
    %1973 = vmatprep.subr.mxu0 0.0
    %1974 = vmatpush1.msra.mxu0 %v185
    %1975 = vmatprep.subr.mxu0 0.0
    %1976 = vmatpush1.msra.mxu0 %v186
    %1977 = vmatprep.subr.mxu0 0.0
    %1978 = vmatpush1.msra.mxu0 %v187
    %1979 = vmatprep.subr.mxu0 0.0
    %1980 = vmatpush1.msra.mxu0 %v188
    %1981 = vmatprep.subr.mxu0 0.0
    %1982 = vmatpush1.msra.mxu0 %v189
    %1983 = vmatprep.subr.mxu0 0.0
    %1984 = vmatpush1.msra.mxu0 %v190
    %1985 = vmatprep.subr.mxu0 0.0
    %1986 = vmatpush1.msra.mxu0 %v191
    %1987 = vmatprep.subr.mxu0 0.0
    %1988 = vmatpush1.msra.mxu0 %v192
    %1989 = vmatprep.subr.mxu0 0.0
    %1990 = vmatpush1.msra.mxu0 %v193
    %1991 = vmatprep.subr.mxu0 0.0
    %1992 = vmatpush1.msra.mxu0 %v194
    %1993 = vmatprep.subr.mxu0 0.0
    %1994 = vmatpush1.msra.mxu0 %v195
    %1995 = vmatprep.subr.mxu0 0.0
    %1996 = vmatpush1.msra.mxu0 %v196
    %1997 = vmatprep.subr.mxu0 0.0
    %1998 = vmatpush1.msra.mxu0 %v197
    %1999 = vmatprep.subr.mxu0 0.0
    %2000 = vmatpush1.msra.mxu0 %v198
    %2001 = vmatprep.subr.mxu0 0.0
    %2002 = vmatpush1.msra.mxu0 %v199
    %2003 = vmatprep.subr.mxu0 0.0
    %2004 = vmatpush1.msra.mxu0 %v200
    %2005 = vmatprep.subr.mxu0 0.0
    %2006 = vmatpush1.msra.mxu0 %v201
    %2007 = vmatprep.subr.mxu0 0.0
    %2008 = vmatpush1.msra.mxu0 %v202
    %2009 = vmatprep.subr.mxu0 0.0
    %2010 = vmatpush1.msra.mxu0 %v203
    %2011 = vmatprep.subr.mxu0 0.0
    %2012 = vmatpush1.msra.mxu0 0.0
    %2013 = vmatprep.subr.mxu0 0.0
    %2014 = vmatpush1.msra.mxu0 0.0
    %2015 = vmatprep.subr.mxu0 0.0
    %2016 = vmatpush1.msra.mxu0 0.0
    %2017 = vmatprep.subr.mxu0 0.0
    %2018 = vmatpush1.msra.mxu0 0.0
    %2019 = vmatprep.subr.mxu0 0.0
    %2020 = vmatpush1.msra.mxu0 0.0
    %2021 = vmatprep.subr.mxu0 0.0
    %2022 = vmatpush1.msra.mxu0 0.0
    %2023 = vmatprep.subr.mxu0 0.0
    %2024 = vmatpush1.msra.mxu0 0.0
    %2025 = vmatprep.subr.mxu0 0.0
    %2026 = vmatpush1.msra.mxu0 0.0
    %2027 = vmatprep.subr.mxu0 0.0
    %2028 = vmatpush1.msra.mxu0 0.0
    %2029 = vmatprep.subr.mxu0 0.0
    %2030 = vmatpush1.msra.mxu0 0.0
    %2031 = vmatprep.subr.mxu0 0.0
    %2032 = vmatpush1.msra.mxu0 0.0
    %2033 = vmatprep.mubr.f32.mxu0 %v1967
    %2034 = vmatmul.mubr.f32.gmra.mrb[0].mxu0 %v1889
    %v2035 = vpop.f32.mrb[0].mxu0
    %v2036 = vadd.f32 0.0, %v2035
    %v2037 = vpop.f32.mrb[0].mxu0
    %2038 = vdwg.mxu0
    %v2039 = vmul.f32 %v2036, %v1964
    %v2040 = vmul.f32 %v1965, %v1965
    %v2041 = vsub.f32 %v2039, %v2040
    %v2042 = vadd.f32 %v2041, 1e-05
    %v2043 = vrsqrt.pop %v2042
    %vm2044 = vcmask 48128
    %v2046 = vsel %vm2044, %v2043, 0
    %v2049 = vsel %vm830, %v209, 0
    %2051 = vmatprep.subr.mxu0 0.0
    %2052 = vmatpush1.msra.mxu0 %v2049
    %2053 = vmatprep.subr.mxu0 0.0
    %2054 = vmatpush1.msra.mxu0 0.0
    %2055 = vmatprep.subr.mxu0 0.0
    %2056 = vmatpush1.msra.mxu0 0.0
    %2057 = vmatprep.subr.mxu0 0.0
    %2058 = vmatpush1.msra.mxu0 0.0
    %2059 = vmatprep.subr.mxu0 0.0
    %2060 = vmatpush1.msra.mxu0 0.0
    %2061 = vmatprep.subr.mxu0 0.0
    %2062 = vmatpush1.msra.mxu0 0.0
    %2063 = vmatprep.subr.mxu0 0.0
    %2064 = vmatpush1.msra.mxu0 0.0
    %2065 = vmatprep.subr.mxu0 0.0
    %2066 = vmatpush1.msra.mxu0 0.0
    %2067 = vmatprep.subr.mxu0 0.0
    %2068 = vmatpush1.msra.mxu0 0.0
    %2069 = vmatprep.subr.mxu0 0.0
    %2070 = vmatpush1.msra.mxu0 0.0
    %2071 = vmatprep.subr.mxu0 0.0
    %2072 = vmatpush1.msra.mxu0 0.0
    %2073 = vmatprep.subr.mxu0 0.0
    %2074 = vmatpush1.msra.mxu0 0.0
    %2075 = vmatprep.subr.mxu0 0.0
    %2076 = vmatpush1.msra.mxu0 0.0
    %2077 = vmatprep.subr.mxu0 0.0
    %2078 = vmatpush1.msra.mxu0 0.0
    %2079 = vmatprep.subr.mxu0 0.0
    %2080 = vmatpush1.msra.mxu0 0.0
    %2081 = vmatprep.subr.mxu0 0.0
    %2082 = vmatpush1.msra.mxu0 0.0
    %2083 = vmatprep.subr.mxu0 0.0
    %2084 = vmatpush1.msra.mxu0 0.0
    %2085 = vmatprep.subr.mxu0 0.0
    %2086 = vmatpush1.msra.mxu0 0.0
    %2087 = vmatprep.subr.mxu0 0.0
    %2088 = vmatpush1.msra.mxu0 0.0
    %2089 = vmatprep.subr.mxu0 0.0
    %2090 = vmatpush1.msra.mxu0 0.0
    %2091 = vmatprep.subr.mxu0 0.0
    %2092 = vmatpush1.msra.mxu0 0.0
    %2093 = vmatprep.subr.mxu0 0.0
    %2094 = vmatpush1.msra.mxu0 0.0
    %2095 = vmatprep.subr.mxu0 0.0
    %2096 = vmatpush1.msra.mxu0 0.0
    %2097 = vmatprep.subr.mxu0 0.0
    %2098 = vmatpush1.msra.mxu0 0.0
    %2099 = vmatprep.subr.mxu0 0.0
    %2100 = vmatpush1.msra.mxu0 0.0
    %2101 = vmatprep.subr.mxu0 0.0
    %2102 = vmatpush1.msra.mxu0 0.0
    %2103 = vmatprep.subr.mxu0 0.0
    %2104 = vmatpush1.msra.mxu0 0.0
    %2105 = vmatprep.subr.mxu0 0.0
    %2106 = vmatpush1.msra.mxu0 0.0
    %2107 = vmatprep.subr.mxu0 0.0
    %2108 = vmatpush1.msra.mxu0 0.0
    %2109 = vmatprep.subr.mxu0 0.0
    %2110 = vmatpush1.msra.mxu0 0.0
    %2111 = vmatprep.subr.mxu0 0.0
    %2112 = vmatpush1.msra.mxu0 0.0
    %2113 = vmatprep.subr.mxu0 0.0
    %2114 = vmatpush1.msra.mxu0 0.0
    %2115 = vmatprep.mubr.f32.mxu0 0.0
    %2116 = vmatmul.mubr.f32.gmra.mrb[0].mxu0 %v2046
    %v2117 = vpop.f32.mrb[0].mxu0
    %v2118 = vadd.f32 0.0, %v2117
    %v2119 = vpop.f32.mrb[0].mxu0
    %2120 = vdwg.mxu0
    %v2122 = vrot.slane %v2118, 7
    %v2124 = vmul.f32 %v27, %v2122
    %v2126 = vsel %vm2044, %v1965, 0
    %2128 = vmatprep.subr.mxu0 0.0
    %2129 = vmatpush1.msra.mxu0 %v2049
    %2130 = vmatprep.subr.mxu0 0.0
    %2131 = vmatpush1.msra.mxu0 0.0
    %2132 = vmatprep.subr.mxu0 0.0
    %2133 = vmatpush1.msra.mxu0 0.0
    %2134 = vmatprep.subr.mxu0 0.0
    %2135 = vmatpush1.msra.mxu0 0.0
    %2136 = vmatprep.subr.mxu0 0.0
    %2137 = vmatpush1.msra.mxu0 0.0
    %2138 = vmatprep.subr.mxu0 0.0
    %2139 = vmatpush1.msra.mxu0 0.0
    %2140 = vmatprep.subr.mxu0 0.0
    %2141 = vmatpush1.msra.mxu0 0.0
    %2142 = vmatprep.subr.mxu0 0.0
    %2143 = vmatpush1.msra.mxu0 0.0
    %2144 = vmatprep.subr.mxu0 0.0
    %2145 = vmatpush1.msra.mxu0 0.0
    %2146 = vmatprep.subr.mxu0 0.0
    %2147 = vmatpush1.msra.mxu0 0.0
    %2148 = vmatprep.subr.mxu0 0.0
    %2149 = vmatpush1.msra.mxu0 0.0
    %2150 = vmatprep.subr.mxu0 0.0
    %2151 = vmatpush1.msra.mxu0 0.0
    %2152 = vmatprep.subr.mxu0 0.0
    %2153 = vmatpush1.msra.mxu0 0.0
    %2154 = vmatprep.subr.mxu0 0.0
    %2155 = vmatpush1.msra.mxu0 0.0
    %2156 = vmatprep.subr.mxu0 0.0
    %2157 = vmatpush1.msra.mxu0 0.0
    %2158 = vmatprep.subr.mxu0 0.0
    %2159 = vmatpush1.msra.mxu0 0.0
    %2160 = vmatprep.subr.mxu0 0.0
    %2161 = vmatpush1.msra.mxu0 0.0
    %2162 = vmatprep.subr.mxu0 0.0
    %2163 = vmatpush1.msra.mxu0 0.0
    %2164 = vmatprep.subr.mxu0 0.0
    %2165 = vmatpush1.msra.mxu0 0.0
    %2166 = vmatprep.subr.mxu0 0.0
    %2167 = vmatpush1.msra.mxu0 0.0
    %2168 = vmatprep.subr.mxu0 0.0
    %2169 = vmatpush1.msra.mxu0 0.0
    %2170 = vmatprep.subr.mxu0 0.0
    %2171 = vmatpush1.msra.mxu0 0.0
    %2172 = vmatprep.subr.mxu0 0.0
    %2173 = vmatpush1.msra.mxu0 0.0
    %2174 = vmatprep.subr.mxu0 0.0
    %2175 = vmatpush1.msra.mxu0 0.0
    %2176 = vmatprep.subr.mxu0 0.0
    %2177 = vmatpush1.msra.mxu0 0.0
    %2178 = vmatprep.subr.mxu0 0.0
    %2179 = vmatpush1.msra.mxu0 0.0
    %2180 = vmatprep.subr.mxu0 0.0
    %2181 = vmatpush1.msra.mxu0 0.0
    %2182 = vmatprep.subr.mxu0 0.0
    %2183 = vmatpush1.msra.mxu0 0.0
    %2184 = vmatprep.subr.mxu0 0.0
    %2185 = vmatpush1.msra.mxu0 0.0
    %2186 = vmatprep.subr.mxu0 0.0
    %2187 = vmatpush1.msra.mxu0 0.0
    %2188 = vmatprep.subr.mxu0 0.0
    %2189 = vmatpush1.msra.mxu0 0.0
    %2190 = vmatprep.subr.mxu0 0.0
    %2191 = vmatpush1.msra.mxu0 0.0
    %2192 = vmatprep.mubr.f32.mxu0 0.0
    %2193 = vmatmul.mubr.f32.gmra.mrb[0].mxu0 %v2126
    %v2194 = vpop.f32.mrb[0].mxu0
    %v2195 = vadd.f32 0.0, %v2194
    %v2196 = vpop.f32.mrb[0].mxu0
    %2197 = vdwg.mxu0
    %v2199 = vrot.slane %v2124, 1
    %v2201 = vmul.f32 %v2195, %v2199
    %v2203 = vrot.slane %v2201, 6
    %v2205 = vsub.f32 %v27, %v2203
    %vm2206 = vcmask 228352
    %v2208 = vsel %vm2206, %v214, 0
    %v2211 = vsel %vm2206, %v215, 0
    %v2214 = vsel %vm1074, %v1209, 0
    %v2217 = vsel %vm1074, %v1210, 0
    %2219 = vmatprep.subr.mxu0 %v1204
    %2220 = vmatpush1.msra.mxu0 %v1203
    %2221 = vmatprep.subr.mxu0 %v1206
    %2222 = vmatpush1.msra.mxu0 %v1205
    %2223 = vmatprep.subr.mxu0 %v1208
    %2224 = vmatpush1.msra.mxu0 %v1207
    %2225 = vmatprep.subr.mxu0 %v2217
    %2226 = vmatpush1.msra.mxu0 %v2214
    %2227 = vmatprep.subr.mxu0 0.0
    %2228 = vmatpush1.msra.mxu0 0.0
    %2229 = vmatprep.subr.mxu0 0.0
    %2230 = vmatpush1.msra.mxu0 0.0
    %2231 = vmatprep.subr.mxu0 0.0
    %2232 = vmatpush1.msra.mxu0 0.0
    %2233 = vmatprep.subr.mxu0 0.0
    %2234 = vmatpush1.msra.mxu0 0.0
    %2235 = vmatprep.subr.mxu0 0.0
    %2236 = vmatpush1.msra.mxu0 0.0
    %2237 = vmatprep.subr.mxu0 0.0
    %2238 = vmatpush1.msra.mxu0 0.0
    %2239 = vmatprep.subr.mxu0 0.0
    %2240 = vmatpush1.msra.mxu0 0.0
    %2241 = vmatprep.subr.mxu0 0.0
    %2242 = vmatpush1.msra.mxu0 0.0
    %2243 = vmatprep.subr.mxu0 0.0
    %2244 = vmatpush1.msra.mxu0 0.0
    %2245 = vmatprep.subr.mxu0 0.0
    %2246 = vmatpush1.msra.mxu0 0.0
    %2247 = vmatprep.subr.mxu0 0.0
    %2248 = vmatpush1.msra.mxu0 0.0
    %2249 = vmatprep.subr.mxu0 0.0
    %2250 = vmatpush1.msra.mxu0 0.0
    %2251 = vmatprep.subr.mxu0 0.0
    %2252 = vmatpush1.msra.mxu0 0.0
    %2253 = vmatprep.subr.mxu0 0.0
    %2254 = vmatpush1.msra.mxu0 0.0
    %2255 = vmatprep.subr.mxu0 0.0
    %2256 = vmatpush1.msra.mxu0 0.0
    %2257 = vmatprep.subr.mxu0 0.0
    %2258 = vmatpush1.msra.mxu0 0.0
    %2259 = vmatprep.subr.mxu0 0.0
    %2260 = vmatpush1.msra.mxu0 0.0
    %2261 = vmatprep.subr.mxu0 0.0
    %2262 = vmatpush1.msra.mxu0 0.0
    %2263 = vmatprep.subr.mxu0 0.0
    %2264 = vmatpush1.msra.mxu0 0.0
    %2265 = vmatprep.subr.mxu0 0.0
    %2266 = vmatpush1.msra.mxu0 0.0
    %2267 = vmatprep.subr.mxu0 0.0
    %2268 = vmatpush1.msra.mxu0 0.0
    %2269 = vmatprep.subr.mxu0 0.0
    %2270 = vmatpush1.msra.mxu0 0.0
    %2271 = vmatprep.subr.mxu0 0.0
    %2272 = vmatpush1.msra.mxu0 0.0
    %2273 = vmatprep.subr.mxu0 0.0
    %2274 = vmatpush1.msra.mxu0 0.0
    %2275 = vmatprep.subr.mxu0 0.0
    %2276 = vmatpush1.msra.mxu0 0.0
    %2277 = vmatprep.subr.mxu0 0.0
    %2278 = vmatpush1.msra.mxu0 0.0
    %2279 = vmatprep.subr.mxu0 0.0
    %2280 = vmatpush1.msra.mxu0 0.0
    %2281 = vmatprep.subr.mxu0 0.0
    %2282 = vmatpush1.msra.mxu0 0.0
    %2283 = vmatprep.mubr.f32.mxu0 0.0
    %2284 = vmatmul.mubr.f32.gmra.mrb[0].mxu0 %v2208
    %v2285 = vpop.f32.mrb[0].mxu0
    %v2286 = vadd.f32 0.0, %v2285
    %v2287 = vpop.f32.mrb[0].mxu0
    %v2288 = vadd.f32 0.0, %v2287
    %2289 = vmatprep.mubr.f32.mxu0 0.0
    %2290 = vmatmul.mubr.f32.gmra.mrb[0].mxu0 %v2211
    %v2291 = vpop.f32.mrb[0].mxu0
    %v2292 = vadd.f32 0.0, %v2291
    %v2293 = vpop.f32.mrb[0].mxu0
    %v2294 = vadd.f32 0.0, %v2293
    %2295 = vdwg.mxu0
    %v2297 = vsel %vm1221, %v2288, 0
    %v2300 = vsel %vm1221, %v2294, 0
    %2302 = vmatprep.subr.mxu0 0.0
    %2303 = vmatpush1.msra.mxu0 %v322
    %2304 = vmatprep.subr.mxu0 0.0
    %2305 = vmatpush1.msra.mxu0 %v323
    %2306 = vmatprep.subr.mxu0 0.0
    %2307 = vmatpush1.msra.mxu0 %v324
    %2308 = vmatprep.subr.mxu0 0.0
    %2309 = vmatpush1.msra.mxu0 %v325
    %2310 = vmatprep.subr.mxu0 0.0
    %2311 = vmatpush1.msra.mxu0 %v326
    %2312 = vmatprep.subr.mxu0 0.0
    %2313 = vmatpush1.msra.mxu0 %v327
    %2314 = vmatprep.subr.mxu0 0.0
    %2315 = vmatpush1.msra.mxu0 %v328
    %2316 = vmatprep.subr.mxu0 0.0
    %2317 = vmatpush1.msra.mxu0 %v329
    %2318 = vmatprep.subr.mxu0 0.0
    %2319 = vmatpush1.msra.mxu0 %v330
    %2320 = vmatprep.subr.mxu0 0.0
    %2321 = vmatpush1.msra.mxu0 %v331
    %2322 = vmatprep.subr.mxu0 0.0
    %2323 = vmatpush1.msra.mxu0 %v332
    %2324 = vmatprep.subr.mxu0 0.0
    %2325 = vmatpush1.msra.mxu0 %v333
    %2326 = vmatprep.subr.mxu0 0.0
    %2327 = vmatpush1.msra.mxu0 %v334
    %2328 = vmatprep.subr.mxu0 0.0
    %2329 = vmatpush1.msra.mxu0 %v335
    %2330 = vmatprep.subr.mxu0 0.0
    %2331 = vmatpush1.msra.mxu0 %v336
    %2332 = vmatprep.subr.mxu0 0.0
    %2333 = vmatpush1.msra.mxu0 %v337
    %2334 = vmatprep.subr.mxu0 0.0
    %2335 = vmatpush1.msra.mxu0 %v338
    %2336 = vmatprep.subr.mxu0 0.0
    %2337 = vmatpush1.msra.mxu0 %v339
    %2338 = vmatprep.subr.mxu0 0.0
    %2339 = vmatpush1.msra.mxu0 %v340
    %2340 = vmatprep.subr.mxu0 0.0
    %2341 = vmatpush1.msra.mxu0 %v341
    %2342 = vmatprep.subr.mxu0 0.0
    %2343 = vmatpush1.msra.mxu0 %v342
    %2344 = vmatprep.subr.mxu0 0.0
    %2345 = vmatpush1.msra.mxu0 0.0
    %2346 = vmatprep.subr.mxu0 0.0
    %2347 = vmatpush1.msra.mxu0 0.0
    %2348 = vmatprep.subr.mxu0 0.0
    %2349 = vmatpush1.msra.mxu0 0.0
    %2350 = vmatprep.subr.mxu0 0.0
    %2351 = vmatpush1.msra.mxu0 0.0
    %2352 = vmatprep.subr.mxu0 0.0
    %2353 = vmatpush1.msra.mxu0 0.0
    %2354 = vmatprep.subr.mxu0 0.0
    %2355 = vmatpush1.msra.mxu0 0.0
    %2356 = vmatprep.subr.mxu0 0.0
    %2357 = vmatpush1.msra.mxu0 0.0
    %2358 = vmatprep.subr.mxu0 0.0
    %2359 = vmatpush1.msra.mxu0 0.0
    %2360 = vmatprep.subr.mxu0 0.0
    %2361 = vmatpush1.msra.mxu0 0.0
    %2362 = vmatprep.subr.mxu0 0.0
    %2363 = vmatpush1.msra.mxu0 0.0
    %2364 = vmatprep.subr.mxu0 0.0
    %2365 = vmatpush1.msra.mxu0 0.0
    %2366 = vmatprep.mubr.f32.mxu0 %v2297
    %2367 = vmatmul.mubr.f32.gmra.mrb[0].mxu0 %v2286
    %v2368 = vpop.f32.mrb[0].mxu0
    %v2369 = vadd.f32 0.0, %v2368
    %v2370 = vpop.f32.mrb[0].mxu0
    %2371 = vmatprep.mubr.f32.mxu0 %v2300
    %2372 = vmatmul.mubr.f32.gmra.mrb[0].mxu0 %v2292
    %v2373 = vpop.f32.mrb[0].mxu0
    %v2374 = vadd.f32 0.0, %v2373
    %v2375 = vpop.f32.mrb[0].mxu0
    %2376 = vdwg.mxu0
    %v2377 = vlaneseq
    %v2378 = vshrl.u32 %v2377, 7
    %v2379 = vsub.s32 1, %v2378
    %v2380 = vrot.slane %v2124, %v2379
    %v2381 = vmul.f32 %v2369, %v2380
    %v2382 = vmul.f32 %v2374, %v2380
    %v2383 = vlaneseq
    %v2384 = vshrl.u32 %v2383, 7
    %v2385 = vsub.s32 2, %v2384
    %v2386 = vrot.slane %v2205, %v2385
    %v2387 = vadd.f32 %v2381, %v2386
    %v2388 = vadd.f32 %v2382, %v2386
    %v2389 = vld [vmem:[%s2] sm:$0xff]
    %v2390 = vld [vmem:[%s2 + $0x8] sm:$0xff]
    %v2391 = vld [vmem:[%s2 + $0x10] sm:$0xff]
    %v2392 = vld [vmem:[%s2 + $0x18] sm:$0xff]
    %v2393 = vld [vmem:[%s2 + $0x20] sm:$0xff]
    %v2394 = vld [vmem:[%s2 + $0x28] sm:$0xff]
    %v2395 = vld [vmem:[%s2 + $0x30] sm:$0xff]
    %v2396 = vld [vmem:[%s2 + $0x38] sm:$0xff]
    %v2397 = vld [vmem:[%s2 + $0x40] sm:$0xff]
    %v2398 = vld [vmem:[%s2 + $0x48] sm:$0xff]
    %v2399 = vld [vmem:[%s2 + $0x50] sm:$0xff]
    %v2400 = vld [vmem:[%s2 + $0x58] sm:$0xff]
    %v2401 = vld [vmem:[%s2 + $0x60] sm:$0xff]
    %v2402 = vld [vmem:[%s2 + $0x68] sm:$0xff]
    %v2403 = vld [vmem:[%s2 + $0x70] sm:$0xff]
    %v2404 = vld [vmem:[%s2 + $0x78] sm:$0xff]
    %v2405 = vld [vmem:[%s2 + $0x80] sm:$0xff]
    %v2406 = vld [vmem:[%s2 + $0x88] sm:$0xff]
    %v2407 = vld [vmem:[%s2 + $0x90] sm:$0xff]
    %v2408 = vld [vmem:[%s2 + $0x98] sm:$0xff]
    %v2409 = vld [vmem:[%s2 + $0xa0] sm:$0xf]
    %v2410 = vld [vmem:[%s2 + $0xa8] sm:$0xf]
    %s2411 = scalar_lea.vmem %s2, 176
    %v2412 = vld [vmem:[%s2411] sm:$0xff]
    %v2413 = vld [vmem:[%s2411 + $0x8] sm:$0xff]
    %v2414 = vld [vmem:[%s2411 + $0x10] sm:$0xff]
    %v2415 = vld [vmem:[%s2411 + $0x18] sm:$0xff]
    %v2416 = vld [vmem:[%s2411 + $0x20] sm:$0xff]
    %v2417 = vld [vmem:[%s2411 + $0x28] sm:$0xff]
    %v2418 = vld [vmem:[%s2411 + $0x30] sm:$0xff]
    %v2419 = vld [vmem:[%s2411 + $0x38] sm:$0xff]
    %v2420 = vld [vmem:[%s2411 + $0x40] sm:$0xff]
    %v2421 = vld [vmem:[%s2411 + $0x48] sm:$0xff]
    %v2422 = vld [vmem:[%s2411 + $0x50] sm:$0xff]
    %v2423 = vld [vmem:[%s2411 + $0x58] sm:$0xff]
    %v2424 = vld [vmem:[%s2411 + $0x60] sm:$0xff]
    %v2425 = vld [vmem:[%s2411 + $0x68] sm:$0xff]
    %v2426 = vld [vmem:[%s2411 + $0x70] sm:$0xff]
    %v2427 = vld [vmem:[%s2411 + $0x78] sm:$0xff]
    %v2428 = vld [vmem:[%s2411 + $0x80] sm:$0xff]
    %v2429 = vld [vmem:[%s2411 + $0x88] sm:$0xff]
    %v2430 = vld [vmem:[%s2411 + $0x90] sm:$0xff]
    %v2431 = vld [vmem:[%s2411 + $0x98] sm:$0xff]
    %v2432 = vld [vmem:[%s2411 + $0xa0] sm:$0xf]
    %v2433 = vld [vmem:[%s2411 + $0xa8] sm:$0xf]
    %v2436 = vrot.slane %v2387, 1
    %v2437 = vrot.slane %v2388, 1
    %v2438 = vsel %vm618, %v2436, %v2437
    %vm2439 = vcmask 687104
    %v2440 = vsel %vm2439, %v2438, 0
    %v2442 = vsel %vm2439, %v2437, 0
    %v2445 = vsel %vm1074, %v2432, 0
    %v2448 = vsel %vm1074, %v2433, 0
    %2450 = vmatprep.subr.mxu0 %v2413
    %2451 = vmatpush1.msra.mxu0 %v2412
    %2452 = vmatprep.subr.mxu0 %v2415
    %2453 = vmatpush1.msra.mxu0 %v2414
    %2454 = vmatprep.subr.mxu0 %v2417
    %2455 = vmatpush1.msra.mxu0 %v2416
    %2456 = vmatprep.subr.mxu0 %v2419
    %2457 = vmatpush1.msra.mxu0 %v2418
    %2458 = vmatprep.subr.mxu0 %v2421
    %2459 = vmatpush1.msra.mxu0 %v2420
    %2460 = vmatprep.subr.mxu0 %v2423
    %2461 = vmatpush1.msra.mxu0 %v2422
    %2462 = vmatprep.subr.mxu0 %v2425
    %2463 = vmatpush1.msra.mxu0 %v2424
    %2464 = vmatprep.subr.mxu0 %v2427
    %2465 = vmatpush1.msra.mxu0 %v2426
    %2466 = vmatprep.subr.mxu0 %v2429
    %2467 = vmatpush1.msra.mxu0 %v2428
    %2468 = vmatprep.subr.mxu0 %v2431
    %2469 = vmatpush1.msra.mxu0 %v2430
    %2470 = vmatprep.subr.mxu0 %v2448
    %2471 = vmatpush1.msra.mxu0 %v2445
    %2472 = vmatprep.subr.mxu0 0.0
    %2473 = vmatpush1.msra.mxu0 0.0
    %2474 = vmatprep.subr.mxu0 0.0
    %2475 = vmatpush1.msra.mxu0 0.0
    %2476 = vmatprep.subr.mxu0 0.0
    %2477 = vmatpush1.msra.mxu0 0.0
    %2478 = vmatprep.subr.mxu0 0.0
    %2479 = vmatpush1.msra.mxu0 0.0
    %2480 = vmatprep.subr.mxu0 0.0
    %2481 = vmatpush1.msra.mxu0 0.0
    %2482 = vmatprep.subr.mxu0 0.0
    %2483 = vmatpush1.msra.mxu0 0.0
    %2484 = vmatprep.subr.mxu0 0.0
    %2485 = vmatpush1.msra.mxu0 0.0
    %2486 = vmatprep.subr.mxu0 0.0
    %2487 = vmatpush1.msra.mxu0 0.0
    %2488 = vmatprep.subr.mxu0 0.0
    %2489 = vmatpush1.msra.mxu0 0.0
    %2490 = vmatprep.subr.mxu0 0.0
    %2491 = vmatpush1.msra.mxu0 0.0
    %2492 = vmatprep.subr.mxu0 0.0
    %2493 = vmatpush1.msra.mxu0 0.0
    %2494 = vmatprep.subr.mxu0 0.0
    %2495 = vmatpush1.msra.mxu0 0.0
    %2496 = vmatprep.subr.mxu0 0.0
    %2497 = vmatpush1.msra.mxu0 0.0
    %2498 = vmatprep.subr.mxu0 0.0
    %2499 = vmatpush1.msra.mxu0 0.0
    %2500 = vmatprep.subr.mxu0 0.0
    %2501 = vmatpush1.msra.mxu0 0.0
    %2502 = vmatprep.subr.mxu0 0.0
    %2503 = vmatpush1.msra.mxu0 0.0
    %2504 = vmatprep.subr.mxu0 0.0
    %2505 = vmatpush1.msra.mxu0 0.0
    %2506 = vmatprep.subr.mxu0 0.0
    %2507 = vmatpush1.msra.mxu0 0.0
    %2508 = vmatprep.subr.mxu0 0.0
    %2509 = vmatpush1.msra.mxu0 0.0
    %2510 = vmatprep.subr.mxu0 0.0
    %2511 = vmatpush1.msra.mxu0 0.0
    %2512 = vmatprep.subr.mxu0 0.0
    %2513 = vmatpush1.msra.mxu0 0.0
    %2514 = vmatprep.mubr.f32.mxu0 0.0
    %2515 = vmatmul.mubr.f32.gmra.mrb[0].mxu0 %v2440
    %v2516 = vpop.f32.mrb[0].mxu0
    %v2517 = vadd.f32 0.0, %v2516
    %v2518 = vpop.f32.mrb[0].mxu0
    %v2519 = vadd.f32 0.0, %v2518
    %2520 = vmatprep.mubr.f32.mxu0 0.0
    %2521 = vmatmul.mubr.f32.gmra.mrb[0].mxu0 %v2442
    %v2522 = vpop.f32.mrb[0].mxu0
    %v2523 = vadd.f32 0.0, %v2522
    %v2524 = vpop.f32.mrb[0].mxu0
    %v2525 = vadd.f32 0.0, %v2524
    %2526 = vdwg.mxu0
    %v2527 = vsel %vm2439, %v2387, 0
    %v2529 = vsel %vm2439, %v2388, 0
    %v2532 = vsel %vm1074, %v2409, 0
    %v2535 = vsel %vm1074, %v2410, 0
    %2537 = vmatprep.subr.mxu0 %v2390
    %2538 = vmatpush1.msra.mxu0 %v2389
    %2539 = vmatprep.subr.mxu0 %v2392
    %2540 = vmatpush1.msra.mxu0 %v2391
    %2541 = vmatprep.subr.mxu0 %v2394
    %2542 = vmatpush1.msra.mxu0 %v2393
    %2543 = vmatprep.subr.mxu0 %v2396
    %2544 = vmatpush1.msra.mxu0 %v2395
    %2545 = vmatprep.subr.mxu0 %v2398
    %2546 = vmatpush1.msra.mxu0 %v2397
    %2547 = vmatprep.subr.mxu0 %v2400
    %2548 = vmatpush1.msra.mxu0 %v2399
    %2549 = vmatprep.subr.mxu0 %v2402
    %2550 = vmatpush1.msra.mxu0 %v2401
    %2551 = vmatprep.subr.mxu0 %v2404
    %2552 = vmatpush1.msra.mxu0 %v2403
    %2553 = vmatprep.subr.mxu0 %v2406
    %2554 = vmatpush1.msra.mxu0 %v2405
    %2555 = vmatprep.subr.mxu0 %v2408
    %2556 = vmatpush1.msra.mxu0 %v2407
    %2557 = vmatprep.subr.mxu0 %v2535
    %2558 = vmatpush1.msra.mxu0 %v2532
    %2559 = vmatprep.subr.mxu0 0.0
    %2560 = vmatpush1.msra.mxu0 0.0
    %2561 = vmatprep.subr.mxu0 0.0
    %2562 = vmatpush1.msra.mxu0 0.0
    %2563 = vmatprep.subr.mxu0 0.0
    %2564 = vmatpush1.msra.mxu0 0.0
    %2565 = vmatprep.subr.mxu0 0.0
    %2566 = vmatpush1.msra.mxu0 0.0
    %2567 = vmatprep.subr.mxu0 0.0
    %2568 = vmatpush1.msra.mxu0 0.0
    %2569 = vmatprep.subr.mxu0 0.0
    %2570 = vmatpush1.msra.mxu0 0.0
    %2571 = vmatprep.subr.mxu0 0.0
    %2572 = vmatpush1.msra.mxu0 0.0
    %2573 = vmatprep.subr.mxu0 0.0
    %2574 = vmatpush1.msra.mxu0 0.0
    %2575 = vmatprep.subr.mxu0 0.0
    %2576 = vmatpush1.msra.mxu0 0.0
    %2577 = vmatprep.subr.mxu0 0.0
    %2578 = vmatpush1.msra.mxu0 0.0
    %2579 = vmatprep.subr.mxu0 0.0
    %2580 = vmatpush1.msra.mxu0 0.0
    %2581 = vmatprep.subr.mxu0 0.0
    %2582 = vmatpush1.msra.mxu0 0.0
    %2583 = vmatprep.subr.mxu0 0.0
    %2584 = vmatpush1.msra.mxu0 0.0
    %2585 = vmatprep.subr.mxu0 0.0
    %2586 = vmatpush1.msra.mxu0 0.0
    %2587 = vmatprep.subr.mxu0 0.0
    %2588 = vmatpush1.msra.mxu0 0.0
    %2589 = vmatprep.subr.mxu0 0.0
    %2590 = vmatpush1.msra.mxu0 0.0
    %2591 = vmatprep.subr.mxu0 0.0
    %2592 = vmatpush1.msra.mxu0 0.0
    %2593 = vmatprep.subr.mxu0 0.0
    %2594 = vmatpush1.msra.mxu0 0.0
    %2595 = vmatprep.subr.mxu0 0.0
    %2596 = vmatpush1.msra.mxu0 0.0
    %2597 = vmatprep.subr.mxu0 0.0
    %2598 = vmatpush1.msra.mxu0 0.0
    %2599 = vmatprep.subr.mxu0 0.0
    %2600 = vmatpush1.msra.mxu0 0.0
    %2601 = vmatprep.mubr.f32.mxu0 0.0
    %2602 = vmatmul.mubr.f32.gmra.mrb[0].mxu0 %v2527
    %v2603 = vpop.f32.mrb[0].mxu0
    %v2604 = vadd.f32 %v2517, %v2603
    %v2605 = vpop.f32.mrb[0].mxu0
    %v2606 = vadd.f32 %v2519, %v2605
    %2607 = vmatprep.mubr.f32.mxu0 0.0
    %2608 = vmatmul.mubr.f32.gmra.mrb[0].mxu0 %v2529
    %v2609 = vpop.f32.mrb[0].mxu0
    %v2610 = vadd.f32 %v2523, %v2609
    %v2611 = vpop.f32.mrb[0].mxu0
    %v2612 = vadd.f32 %v2525, %v2611
    %2613 = vdwg.mxu0
    %s2614 = scalar_lea.vmem %s2, 352
    %v2615 = vld [vmem:[%s2614] sm:$0xff]
    %v2616 = vld [vmem:[%s2614 + $0x8] sm:$0xff]
    %v2617 = vld [vmem:[%s2614 + $0x10] sm:$0xff]
    %v2618 = vld [vmem:[%s2614 + $0x18] sm:$0xff]
    %v2619 = vld [vmem:[%s2614 + $0x20] sm:$0xff]
    %v2620 = vld [vmem:[%s2614 + $0x28] sm:$0xff]
    %v2621 = vld [vmem:[%s2614 + $0x30] sm:$0xff]
    %v2622 = vld [vmem:[%s2614 + $0x38] sm:$0xff]
    %v2623 = vld [vmem:[%s2614 + $0x40] sm:$0xff]
    %v2624 = vld [vmem:[%s2614 + $0x48] sm:$0xff]
    %v2625 = vld [vmem:[%s2614 + $0x50] sm:$0xff]
    %v2626 = vld [vmem:[%s2614 + $0x58] sm:$0xff]
    %v2627 = vld [vmem:[%s2614 + $0x60] sm:$0xff]
    %v2628 = vld [vmem:[%s2614 + $0x68] sm:$0xff]
    %v2629 = vld [vmem:[%s2614 + $0x70] sm:$0xff]
    %v2630 = vld [vmem:[%s2614 + $0x78] sm:$0xff]
    %v2631 = vld [vmem:[%s2614 + $0x80] sm:$0xff]
    %v2632 = vld [vmem:[%s2614 + $0x88] sm:$0xff]
    %v2633 = vld [vmem:[%s2614 + $0x90] sm:$0xff]
    %v2634 = vld [vmem:[%s2614 + $0x98] sm:$0xff]
    %v2635 = vld [vmem:[%s2614 + $0xa0] sm:$0xf]
    %v2636 = vld [vmem:[%s2614 + $0xa8] sm:$0xf]
    %v2637 = vrot.slane %v2387, 2
    %v2638 = vrot.slane %v2388, 2
    %v2639 = vsel %vm830, %v2637, %v2638
    %v2640 = vsel %vm2439, %v2639, 0
    %v2642 = vsel %vm2439, %v2638, 0
    %v2645 = vsel %vm1074, %v2635, 0
    %v2648 = vsel %vm1074, %v2636, 0
    %2650 = vmatprep.subr.mxu0 %v2616
    %2651 = vmatpush1.msra.mxu0 %v2615
    %2652 = vmatprep.subr.mxu0 %v2618
    %2653 = vmatpush1.msra.mxu0 %v2617
    %2654 = vmatprep.subr.mxu0 %v2620
    %2655 = vmatpush1.msra.mxu0 %v2619
    %2656 = vmatprep.subr.mxu0 %v2622
    %2657 = vmatpush1.msra.mxu0 %v2621
    %2658 = vmatprep.subr.mxu0 %v2624
    %2659 = vmatpush1.msra.mxu0 %v2623
    %2660 = vmatprep.subr.mxu0 %v2626
    %2661 = vmatpush1.msra.mxu0 %v2625
    %2662 = vmatprep.subr.mxu0 %v2628
    %2663 = vmatpush1.msra.mxu0 %v2627
    %2664 = vmatprep.subr.mxu0 %v2630
    %2665 = vmatpush1.msra.mxu0 %v2629
    %2666 = vmatprep.subr.mxu0 %v2632
    %2667 = vmatpush1.msra.mxu0 %v2631
    %2668 = vmatprep.subr.mxu0 %v2634
    %2669 = vmatpush1.msra.mxu0 %v2633
    %2670 = vmatprep.subr.mxu0 %v2648
    %2671 = vmatpush1.msra.mxu0 %v2645
    %2672 = vmatprep.subr.mxu0 0.0
    %2673 = vmatpush1.msra.mxu0 0.0
    %2674 = vmatprep.subr.mxu0 0.0
    %2675 = vmatpush1.msra.mxu0 0.0
    %2676 = vmatprep.subr.mxu0 0.0
    %2677 = vmatpush1.msra.mxu0 0.0
    %2678 = vmatprep.subr.mxu0 0.0
    %2679 = vmatpush1.msra.mxu0 0.0
    %2680 = vmatprep.subr.mxu0 0.0
    %2681 = vmatpush1.msra.mxu0 0.0
    %2682 = vmatprep.subr.mxu0 0.0
    %2683 = vmatpush1.msra.mxu0 0.0
    %2684 = vmatprep.subr.mxu0 0.0
    %2685 = vmatpush1.msra.mxu0 0.0
    %2686 = vmatprep.subr.mxu0 0.0
    %2687 = vmatpush1.msra.mxu0 0.0
    %2688 = vmatprep.subr.mxu0 0.0
    %2689 = vmatpush1.msra.mxu0 0.0
    %2690 = vmatprep.subr.mxu0 0.0
    %2691 = vmatpush1.msra.mxu0 0.0
    %2692 = vmatprep.subr.mxu0 0.0
    %2693 = vmatpush1.msra.mxu0 0.0
    %2694 = vmatprep.subr.mxu0 0.0
    %2695 = vmatpush1.msra.mxu0 0.0
    %2696 = vmatprep.subr.mxu0 0.0
    %2697 = vmatpush1.msra.mxu0 0.0
    %2698 = vmatprep.subr.mxu0 0.0
    %2699 = vmatpush1.msra.mxu0 0.0
    %2700 = vmatprep.subr.mxu0 0.0
    %2701 = vmatpush1.msra.mxu0 0.0
    %2702 = vmatprep.subr.mxu0 0.0
    %2703 = vmatpush1.msra.mxu0 0.0
    %2704 = vmatprep.subr.mxu0 0.0
    %2705 = vmatpush1.msra.mxu0 0.0
    %2706 = vmatprep.subr.mxu0 0.0
    %2707 = vmatpush1.msra.mxu0 0.0
    %2708 = vmatprep.subr.mxu0 0.0
    %2709 = vmatpush1.msra.mxu0 0.0
    %2710 = vmatprep.subr.mxu0 0.0
    %2711 = vmatpush1.msra.mxu0 0.0
    %2712 = vmatprep.subr.mxu0 0.0
    %2713 = vmatpush1.msra.mxu0 0.0
    %2714 = vmatprep.mubr.f32.mxu0 0.0
    %2715 = vmatmul.mubr.f32.gmra.mrb[0].mxu0 %v2640
    %v2716 = vpop.f32.mrb[0].mxu0
    %v2717 = vadd.f32 0.0, %v2716
    %v2718 = vpop.f32.mrb[0].mxu0
    %v2719 = vadd.f32 0.0, %v2718
    %2720 = vmatprep.mubr.f32.mxu0 0.0
    %2721 = vmatmul.mubr.f32.gmra.mrb[0].mxu0 %v2642
    %v2722 = vpop.f32.mrb[0].mxu0
    %v2723 = vadd.f32 0.0, %v2722
    %v2724 = vpop.f32.mrb[0].mxu0
    %v2725 = vadd.f32 0.0, %v2724
    %2726 = vdwg.mxu0
    %v2727 = vadd.f32 %v2604, %v2717
    %v2728 = vadd.f32 %v2606, %v2719
    %v2729 = vadd.f32 %v2610, %v2723
    %v2730 = vadd.f32 %v2612, %v2725
    %s2731 = scalar_lea.vmem %s2, 528
    %v2732 = vld [vmem:[%s2731] sm:$0xff]
    %v2733 = vld [vmem:[%s2731 + $0x8] sm:$0xff]
    %v2734 = vld [vmem:[%s2731 + $0x10] sm:$0xff]
    %v2735 = vld [vmem:[%s2731 + $0x18] sm:$0xff]
    %v2736 = vld [vmem:[%s2731 + $0x20] sm:$0xff]
    %v2737 = vld [vmem:[%s2731 + $0x28] sm:$0xff]
    %v2738 = vld [vmem:[%s2731 + $0x30] sm:$0xff]
    %v2739 = vld [vmem:[%s2731 + $0x38] sm:$0xff]
    %v2740 = vld [vmem:[%s2731 + $0x40] sm:$0xff]
    %v2741 = vld [vmem:[%s2731 + $0x48] sm:$0xff]
    %v2742 = vld [vmem:[%s2731 + $0x50] sm:$0xff]
    %v2743 = vld [vmem:[%s2731 + $0x58] sm:$0xff]
    %v2744 = vld [vmem:[%s2731 + $0x60] sm:$0xff]
    %v2745 = vld [vmem:[%s2731 + $0x68] sm:$0xff]
    %v2746 = vld [vmem:[%s2731 + $0x70] sm:$0xff]
    %v2747 = vld [vmem:[%s2731 + $0x78] sm:$0xff]
    %v2748 = vld [vmem:[%s2731 + $0x80] sm:$0xff]
    %v2749 = vld [vmem:[%s2731 + $0x88] sm:$0xff]
    %v2750 = vld [vmem:[%s2731 + $0x90] sm:$0xff]
    %v2751 = vld [vmem:[%s2731 + $0x98] sm:$0xff]
    %v2752 = vld [vmem:[%s2731 + $0xa0] sm:$0xf]
    %v2753 = vld [vmem:[%s2731 + $0xa8] sm:$0xf]
    %v2754 = vrot.slane %v2387, 3
    %v2755 = vrot.slane %v2388, 3
    %v2756 = vsel %vm952, %v2754, %v2755
    %v2757 = vsel %vm2439, %v2756, 0
    %v2759 = vsel %vm2439, %v2755, 0
    %v2762 = vsel %vm1074, %v2752, 0
    %v2765 = vsel %vm1074, %v2753, 0
    %2767 = vmatprep.subr.mxu0 %v2733
    %2768 = vmatpush1.msra.mxu0 %v2732
    %2769 = vmatprep.subr.mxu0 %v2735
    %2770 = vmatpush1.msra.mxu0 %v2734
    %2771 = vmatprep.subr.mxu0 %v2737
    %2772 = vmatpush1.msra.mxu0 %v2736
    %2773 = vmatprep.subr.mxu0 %v2739
    %2774 = vmatpush1.msra.mxu0 %v2738
    %2775 = vmatprep.subr.mxu0 %v2741
    %2776 = vmatpush1.msra.mxu0 %v2740
    %2777 = vmatprep.subr.mxu0 %v2743
    %2778 = vmatpush1.msra.mxu0 %v2742
    %2779 = vmatprep.subr.mxu0 %v2745
    %2780 = vmatpush1.msra.mxu0 %v2744
    %2781 = vmatprep.subr.mxu0 %v2747
    %2782 = vmatpush1.msra.mxu0 %v2746
    %2783 = vmatprep.subr.mxu0 %v2749
    %2784 = vmatpush1.msra.mxu0 %v2748
    %2785 = vmatprep.subr.mxu0 %v2751
    %2786 = vmatpush1.msra.mxu0 %v2750
    %2787 = vmatprep.subr.mxu0 %v2765
    %2788 = vmatpush1.msra.mxu0 %v2762
    %2789 = vmatprep.subr.mxu0 0.0
    %2790 = vmatpush1.msra.mxu0 0.0
    %2791 = vmatprep.subr.mxu0 0.0
    %2792 = vmatpush1.msra.mxu0 0.0
    %2793 = vmatprep.subr.mxu0 0.0
    %2794 = vmatpush1.msra.mxu0 0.0
    %2795 = vmatprep.subr.mxu0 0.0
    %2796 = vmatpush1.msra.mxu0 0.0
    %2797 = vmatprep.subr.mxu0 0.0
    %2798 = vmatpush1.msra.mxu0 0.0
    %2799 = vmatprep.subr.mxu0 0.0
    %2800 = vmatpush1.msra.mxu0 0.0
    %2801 = vmatprep.subr.mxu0 0.0
    %2802 = vmatpush1.msra.mxu0 0.0
    %2803 = vmatprep.subr.mxu0 0.0
    %2804 = vmatpush1.msra.mxu0 0.0
    %2805 = vmatprep.subr.mxu0 0.0
    %2806 = vmatpush1.msra.mxu0 0.0
    %2807 = vmatprep.subr.mxu0 0.0
    %2808 = vmatpush1.msra.mxu0 0.0
    %2809 = vmatprep.subr.mxu0 0.0
    %2810 = vmatpush1.msra.mxu0 0.0
    %2811 = vmatprep.subr.mxu0 0.0
    %2812 = vmatpush1.msra.mxu0 0.0
    %2813 = vmatprep.subr.mxu0 0.0
    %2814 = vmatpush1.msra.mxu0 0.0
    %2815 = vmatprep.subr.mxu0 0.0
    %2816 = vmatpush1.msra.mxu0 0.0
    %2817 = vmatprep.subr.mxu0 0.0
    %2818 = vmatpush1.msra.mxu0 0.0
    %2819 = vmatprep.subr.mxu0 0.0
    %2820 = vmatpush1.msra.mxu0 0.0
    %2821 = vmatprep.subr.mxu0 0.0
    %2822 = vmatpush1.msra.mxu0 0.0
    %2823 = vmatprep.subr.mxu0 0.0
    %2824 = vmatpush1.msra.mxu0 0.0
    %2825 = vmatprep.subr.mxu0 0.0
    %2826 = vmatpush1.msra.mxu0 0.0
    %2827 = vmatprep.subr.mxu0 0.0
    %2828 = vmatpush1.msra.mxu0 0.0
    %2829 = vmatprep.subr.mxu0 0.0
    %2830 = vmatpush1.msra.mxu0 0.0
    %2831 = vmatprep.mubr.f32.mxu0 0.0
    %2832 = vmatmul.mubr.f32.gmra.mrb[0].mxu0 %v2757
    %v2833 = vpop.f32.mrb[0].mxu0
    %v2834 = vadd.f32 0.0, %v2833
    %v2835 = vpop.f32.mrb[0].mxu0
    %v2836 = vadd.f32 0.0, %v2835
    %2837 = vmatprep.mubr.f32.mxu0 0.0
    %2838 = vmatmul.mubr.f32.gmra.mrb[0].mxu0 %v2759
    %v2839 = vpop.f32.mrb[0].mxu0
    %v2840 = vadd.f32 0.0, %v2839
    %v2841 = vpop.f32.mrb[0].mxu0
    %v2842 = vadd.f32 0.0, %v2841
    %2843 = vdwg.mxu0
    %v2844 = vadd.f32 %v2727, %v2834
    %v2845 = vadd.f32 %v2728, %v2836
    %v2846 = vadd.f32 %v2729, %v2840
    %v2847 = vadd.f32 %v2730, %v2842
    %s2848 = scalar_lea.vmem %s2, 704
    %v2849 = vld [vmem:[%s2848] sm:$0xff]
    %v2850 = vld [vmem:[%s2848 + $0x8] sm:$0xff]
    %v2851 = vld [vmem:[%s2848 + $0x10] sm:$0xff]
    %v2852 = vld [vmem:[%s2848 + $0x18] sm:$0xff]
    %v2853 = vld [vmem:[%s2848 + $0x20] sm:$0xff]
    %v2854 = vld [vmem:[%s2848 + $0x28] sm:$0xff]
    %v2855 = vld [vmem:[%s2848 + $0x30] sm:$0xff]
    %v2856 = vld [vmem:[%s2848 + $0x38] sm:$0xff]
    %v2857 = vld [vmem:[%s2848 + $0x40] sm:$0xff]
    %v2858 = vld [vmem:[%s2848 + $0x48] sm:$0xff]
    %v2859 = vld [vmem:[%s2848 + $0x50] sm:$0xff]
    %v2860 = vld [vmem:[%s2848 + $0x58] sm:$0xff]
    %v2861 = vld [vmem:[%s2848 + $0x60] sm:$0xff]
    %v2862 = vld [vmem:[%s2848 + $0x68] sm:$0xff]
    %v2863 = vld [vmem:[%s2848 + $0x70] sm:$0xff]
    %v2864 = vld [vmem:[%s2848 + $0x78] sm:$0xff]
    %v2865 = vld [vmem:[%s2848 + $0x80] sm:$0xff]
    %v2866 = vld [vmem:[%s2848 + $0x88] sm:$0xff]
    %v2867 = vld [vmem:[%s2848 + $0x90] sm:$0xff]
    %v2868 = vld [vmem:[%s2848 + $0x98] sm:$0xff]
    %v2869 = vld [vmem:[%s2848 + $0xa0] sm:$0xf]
    %v2870 = vld [vmem:[%s2848 + $0xa8] sm:$0xf]
    %v2871 = vrot.slane %v2387, 4
    %v2872 = vrot.slane %v2388, 4
    %v2873 = vsel %vm1074, %v2871, %v2872
    %v2874 = vsel %vm2439, %v2873, 0
    %v2876 = vsel %vm2439, %v2872, 0
    %v2879 = vsel %vm1074, %v2869, 0
    %v2882 = vsel %vm1074, %v2870, 0
    %2884 = vmatprep.subr.mxu0 %v2850
    %2885 = vmatpush1.msra.mxu0 %v2849
    %2886 = vmatprep.subr.mxu0 %v2852
    %2887 = vmatpush1.msra.mxu0 %v2851
    %2888 = vmatprep.subr.mxu0 %v2854
    %2889 = vmatpush1.msra.mxu0 %v2853
    %2890 = vmatprep.subr.mxu0 %v2856
    %2891 = vmatpush1.msra.mxu0 %v2855
    %2892 = vmatprep.subr.mxu0 %v2858
    %2893 = vmatpush1.msra.mxu0 %v2857
    %2894 = vmatprep.subr.mxu0 %v2860
    %2895 = vmatpush1.msra.mxu0 %v2859
    %2896 = vmatprep.subr.mxu0 %v2862
    %2897 = vmatpush1.msra.mxu0 %v2861
    %2898 = vmatprep.subr.mxu0 %v2864
    %2899 = vmatpush1.msra.mxu0 %v2863
    %2900 = vmatprep.subr.mxu0 %v2866
    %2901 = vmatpush1.msra.mxu0 %v2865
    %2902 = vmatprep.subr.mxu0 %v2868
    %2903 = vmatpush1.msra.mxu0 %v2867
    %2904 = vmatprep.subr.mxu0 %v2882
    %2905 = vmatpush1.msra.mxu0 %v2879
    %2906 = vmatprep.subr.mxu0 0.0
    %2907 = vmatpush1.msra.mxu0 0.0
    %2908 = vmatprep.subr.mxu0 0.0
    %2909 = vmatpush1.msra.mxu0 0.0
    %2910 = vmatprep.subr.mxu0 0.0
    %2911 = vmatpush1.msra.mxu0 0.0
    %2912 = vmatprep.subr.mxu0 0.0
    %2913 = vmatpush1.msra.mxu0 0.0
    %2914 = vmatprep.subr.mxu0 0.0
    %2915 = vmatpush1.msra.mxu0 0.0
    %2916 = vmatprep.subr.mxu0 0.0
    %2917 = vmatpush1.msra.mxu0 0.0
    %2918 = vmatprep.subr.mxu0 0.0
    %2919 = vmatpush1.msra.mxu0 0.0
    %2920 = vmatprep.subr.mxu0 0.0
    %2921 = vmatpush1.msra.mxu0 0.0
    %2922 = vmatprep.subr.mxu0 0.0
    %2923 = vmatpush1.msra.mxu0 0.0
    %2924 = vmatprep.subr.mxu0 0.0
    %2925 = vmatpush1.msra.mxu0 0.0
    %2926 = vmatprep.subr.mxu0 0.0
    %2927 = vmatpush1.msra.mxu0 0.0
    %2928 = vmatprep.subr.mxu0 0.0
    %2929 = vmatpush1.msra.mxu0 0.0
    %2930 = vmatprep.subr.mxu0 0.0
    %2931 = vmatpush1.msra.mxu0 0.0
    %2932 = vmatprep.subr.mxu0 0.0
    %2933 = vmatpush1.msra.mxu0 0.0
    %2934 = vmatprep.subr.mxu0 0.0
    %2935 = vmatpush1.msra.mxu0 0.0
    %2936 = vmatprep.subr.mxu0 0.0
    %2937 = vmatpush1.msra.mxu0 0.0
    %2938 = vmatprep.subr.mxu0 0.0
    %2939 = vmatpush1.msra.mxu0 0.0
    %2940 = vmatprep.subr.mxu0 0.0
    %2941 = vmatpush1.msra.mxu0 0.0
    %2942 = vmatprep.subr.mxu0 0.0
    %2943 = vmatpush1.msra.mxu0 0.0
    %2944 = vmatprep.subr.mxu0 0.0
    %2945 = vmatpush1.msra.mxu0 0.0
    %2946 = vmatprep.subr.mxu0 0.0
    %2947 = vmatpush1.msra.mxu0 0.0
    %2948 = vmatprep.mubr.f32.mxu0 0.0
    %2949 = vmatmul.mubr.f32.gmra.mrb[0].mxu0 %v2874
    %v2950 = vpop.f32.mrb[0].mxu0
    %v2951 = vadd.f32 0.0, %v2950
    %v2952 = vpop.f32.mrb[0].mxu0
    %v2953 = vadd.f32 0.0, %v2952
    %2954 = vmatprep.mubr.f32.mxu0 0.0
    %2955 = vmatmul.mubr.f32.gmra.mrb[0].mxu0 %v2876
    %v2956 = vpop.f32.mrb[0].mxu0
    %v2957 = vadd.f32 0.0, %v2956
    %v2958 = vpop.f32.mrb[0].mxu0
    %v2959 = vadd.f32 0.0, %v2958
    %2960 = vdwg.mxu0
    %v2961 = vadd.f32 %v2844, %v2951
    %v2962 = vadd.f32 %v2845, %v2953
    %v2963 = vadd.f32 %v2846, %v2957
    %v2964 = vadd.f32 %v2847, %v2959
    %v2965 = vlaneseq
    %v2966 = vshrl.u32 %v2965, 7
    %v2967 = vsub.s32 3, %v2966
    %v2968 = vrot.slane %v27, %v2967
    %v2969 = vlaneseq
    %v2970 = vshrl.u32 %v2969, 7
    %v2971 = vsub.s32 3, %v2970
    %v2972 = vrot.slane %v28, %v2971
    %v2973 = vadd.f32 %v2961, %v2968
    %v2974 = vadd.f32 %v2962, %v2972
    %v2975 = vadd.f32 %v2963, %v2968
    %v2976 = vadd.f32 %v2964, %v2972
    %v2977 = vmax.f32 %v2973, 0.0
    %v2978 = vmax.f32 %v2974, 0.0
    %v2979 = vmax.f32 %v2975, 0.0
    %v2980 = vmax.f32 %v2976, 0.0
    %vm2981 = vcmask 1041408
    %v2982 = vsel %vm2981, %v2979, 0.0
    %v2983 = vadd.f32 %v2977, %v2982
    %v2984 = vrot.slane %v2983, 4
    %v2985 = vadd.f32 %v2983, %v2984
    %v2986 = vrot.slane %v2985, 2
    %v2987 = vadd.f32 %v2985, %v2986
    %v2988 = vrot.slane %v2987, 1
    %v2989 = vadd.f32 %v2987, %v2988
    %v2990 = vsel %vm626, %v2978, 0.0
    %vm2991 = vcmask 254976
    %v2992 = vsel %vm2991, %v2980, 0.0
    %v2993 = vadd.f32 %v2990, %v2992
    %v2994 = vrot.slane %v2993, 4
    %v2995 = vadd.f32 %v2993, %v2994
    %v2996 = vrot.slane %v2995, 2
    %v2997 = vadd.f32 %v2995, %v2996
    %v2998 = vrot.slane %v2997, 1
    %v2999 = vadd.f32 %v2997, %v2998
    %v3000 = vadd.f32 %v2989, 0.0
    %v3001 = vadd.f32 %v2999, 0.0
    %v3002 = vmul.f32 %v2977, %v2977
    %v3003 = vmul.f32 %v2978, %v2978
    %v3004 = vmul.f32 %v2979, %v2979
    %v3005 = vmul.f32 %v2980, %v2980
    %v3006 = vsel %vm2981, %v3004, 0.0
    %v3007 = vadd.f32 %v3002, %v3006
    %v3008 = vrot.slane %v3007, 4
    %v3009 = vadd.f32 %v3007, %v3008
    %v3010 = vrot.slane %v3009, 2
    %v3011 = vadd.f32 %v3009, %v3010
    %v3012 = vrot.slane %v3011, 1
    %v3013 = vadd.f32 %v3011, %v3012
    %v3014 = vsel %vm626, %v3003, 0.0
    %v3015 = vsel %vm2991, %v3005, 0.0
    %v3016 = vadd.f32 %v3014, %v3015
    %v3017 = vrot.slane %v3016, 4
    %v3018 = vadd.f32 %v3016, %v3017
    %v3019 = vrot.slane %v3018, 2
    %v3020 = vadd.f32 %v3018, %v3019
    %v3021 = vrot.slane %v3020, 1
    %v3022 = vadd.f32 %v3020, %v3021
    %v3023 = vadd.f32 %v3013, 0.0
    %v3024 = vadd.f32 %v3022, 0.0
    %v3026 = vsel %vm1074, %v1831, 0
    %v3029 = vsel %vm1074, %v1832, 0
    %3031 = vmatprep.subr.mxu0 %v1826
    %3032 = vmatpush1.msra.mxu0 %v1825
    %3033 = vmatprep.subr.mxu0 %v1828
    %3034 = vmatpush1.msra.mxu0 %v1827
    %3035 = vmatprep.subr.mxu0 %v1830
    %3036 = vmatpush1.msra.mxu0 %v1829
    %3037 = vmatprep.subr.mxu0 %v3029
    %3038 = vmatpush1.msra.mxu0 %v3026
    %3039 = vmatprep.subr.mxu0 0.0
    %3040 = vmatpush1.msra.mxu0 0.0
    %3041 = vmatprep.subr.mxu0 0.0
    %3042 = vmatpush1.msra.mxu0 0.0
    %3043 = vmatprep.subr.mxu0 0.0
    %3044 = vmatpush1.msra.mxu0 0.0
    %3045 = vmatprep.subr.mxu0 0.0
    %3046 = vmatpush1.msra.mxu0 0.0
    %3047 = vmatprep.subr.mxu0 0.0
    %3048 = vmatpush1.msra.mxu0 0.0
    %3049 = vmatprep.subr.mxu0 0.0
    %3050 = vmatpush1.msra.mxu0 0.0
    %3051 = vmatprep.subr.mxu0 0.0
    %3052 = vmatpush1.msra.mxu0 0.0
    %3053 = vmatprep.subr.mxu0 0.0
    %3054 = vmatpush1.msra.mxu0 0.0
    %3055 = vmatprep.subr.mxu0 0.0
    %3056 = vmatpush1.msra.mxu0 0.0
    %3057 = vmatprep.subr.mxu0 0.0
    %3058 = vmatpush1.msra.mxu0 0.0
    %3059 = vmatprep.subr.mxu0 0.0
    %3060 = vmatpush1.msra.mxu0 0.0
    %3061 = vmatprep.subr.mxu0 0.0
    %3062 = vmatpush1.msra.mxu0 0.0
    %3063 = vmatprep.subr.mxu0 0.0
    %3064 = vmatpush1.msra.mxu0 0.0
    %3065 = vmatprep.subr.mxu0 0.0
    %3066 = vmatpush1.msra.mxu0 0.0
    %3067 = vmatprep.subr.mxu0 0.0
    %3068 = vmatpush1.msra.mxu0 0.0
    %3069 = vmatprep.subr.mxu0 0.0
    %3070 = vmatpush1.msra.mxu0 0.0
    %3071 = vmatprep.subr.mxu0 0.0
    %3072 = vmatpush1.msra.mxu0 0.0
    %3073 = vmatprep.subr.mxu0 0.0
    %3074 = vmatpush1.msra.mxu0 0.0
    %3075 = vmatprep.subr.mxu0 0.0
    %3076 = vmatpush1.msra.mxu0 0.0
    %3077 = vmatprep.subr.mxu0 0.0
    %3078 = vmatpush1.msra.mxu0 0.0
    %3079 = vmatprep.subr.mxu0 0.0
    %3080 = vmatpush1.msra.mxu0 0.0
    %3081 = vmatprep.subr.mxu0 0.0
    %3082 = vmatpush1.msra.mxu0 0.0
    %3083 = vmatprep.subr.mxu0 0.0
    %3084 = vmatpush1.msra.mxu0 0.0
    %3085 = vmatprep.subr.mxu0 0.0
    %3086 = vmatpush1.msra.mxu0 0.0
    %3087 = vmatprep.subr.mxu0 0.0
    %3088 = vmatpush1.msra.mxu0 0.0
    %3089 = vmatprep.subr.mxu0 0.0
    %3090 = vmatpush1.msra.mxu0 0.0
    %3091 = vmatprep.subr.mxu0 0.0
    %3092 = vmatpush1.msra.mxu0 0.0
    %3093 = vmatprep.subr.mxu0 0.0
    %3094 = vmatpush1.msra.mxu0 0.0
    %3095 = vmatprep.mubr.f32.mxu0 0.0
    %3096 = vmatmul.mubr.f32.gmra.mrb[0].mxu0 %v2208
    %v3097 = vpop.f32.mrb[0].mxu0
    %v3098 = vadd.f32 0.0, %v3097
    %v3099 = vpop.f32.mrb[0].mxu0
    %v3100 = vadd.f32 0.0, %v3099
    %3101 = vmatprep.mubr.f32.mxu0 0.0
    %3102 = vmatmul.mubr.f32.gmra.mrb[0].mxu0 %v2211
    %v3103 = vpop.f32.mrb[0].mxu0
    %v3104 = vadd.f32 0.0, %v3103
    %v3105 = vpop.f32.mrb[0].mxu0
    %v3106 = vadd.f32 0.0, %v3105
    %3107 = vdwg.mxu0
    %v3109 = vsel %vm1221, %v3100, 0
    %v3112 = vsel %vm1221, %v3106, 0
    %3114 = vmatprep.subr.mxu0 0.0
    %3115 = vmatpush1.msra.mxu0 %v322
    %3116 = vmatprep.subr.mxu0 0.0
    %3117 = vmatpush1.msra.mxu0 %v323
    %3118 = vmatprep.subr.mxu0 0.0
    %3119 = vmatpush1.msra.mxu0 %v324
    %3120 = vmatprep.subr.mxu0 0.0
    %3121 = vmatpush1.msra.mxu0 %v325
    %3122 = vmatprep.subr.mxu0 0.0
    %3123 = vmatpush1.msra.mxu0 %v326
    %3124 = vmatprep.subr.mxu0 0.0
    %3125 = vmatpush1.msra.mxu0 %v327
    %3126 = vmatprep.subr.mxu0 0.0
    %3127 = vmatpush1.msra.mxu0 %v328
    %3128 = vmatprep.subr.mxu0 0.0
    %3129 = vmatpush1.msra.mxu0 %v329
    %3130 = vmatprep.subr.mxu0 0.0
    %3131 = vmatpush1.msra.mxu0 %v330
    %3132 = vmatprep.subr.mxu0 0.0
    %3133 = vmatpush1.msra.mxu0 %v331
    %3134 = vmatprep.subr.mxu0 0.0
    %3135 = vmatpush1.msra.mxu0 %v332
    %3136 = vmatprep.subr.mxu0 0.0
    %3137 = vmatpush1.msra.mxu0 %v333
    %3138 = vmatprep.subr.mxu0 0.0
    %3139 = vmatpush1.msra.mxu0 %v334
    %3140 = vmatprep.subr.mxu0 0.0
    %3141 = vmatpush1.msra.mxu0 %v335
    %3142 = vmatprep.subr.mxu0 0.0
    %3143 = vmatpush1.msra.mxu0 %v336
    %3144 = vmatprep.subr.mxu0 0.0
    %3145 = vmatpush1.msra.mxu0 %v337
    %3146 = vmatprep.subr.mxu0 0.0
    %3147 = vmatpush1.msra.mxu0 %v338
    %3148 = vmatprep.subr.mxu0 0.0
    %3149 = vmatpush1.msra.mxu0 %v339
    %3150 = vmatprep.subr.mxu0 0.0
    %3151 = vmatpush1.msra.mxu0 %v340
    %3152 = vmatprep.subr.mxu0 0.0
    %3153 = vmatpush1.msra.mxu0 %v341
    %3154 = vmatprep.subr.mxu0 0.0
    %3155 = vmatpush1.msra.mxu0 %v342
    %3156 = vmatprep.subr.mxu0 0.0
    %3157 = vmatpush1.msra.mxu0 0.0
    %3158 = vmatprep.subr.mxu0 0.0
    %3159 = vmatpush1.msra.mxu0 0.0
    %3160 = vmatprep.subr.mxu0 0.0
    %3161 = vmatpush1.msra.mxu0 0.0
    %3162 = vmatprep.subr.mxu0 0.0
    %3163 = vmatpush1.msra.mxu0 0.0
    %3164 = vmatprep.subr.mxu0 0.0
    %3165 = vmatpush1.msra.mxu0 0.0
    %3166 = vmatprep.subr.mxu0 0.0
    %3167 = vmatpush1.msra.mxu0 0.0
    %3168 = vmatprep.subr.mxu0 0.0
    %3169 = vmatpush1.msra.mxu0 0.0
    %3170 = vmatprep.subr.mxu0 0.0
    %3171 = vmatpush1.msra.mxu0 0.0
    %3172 = vmatprep.subr.mxu0 0.0
    %3173 = vmatpush1.msra.mxu0 0.0
    %3174 = vmatprep.subr.mxu0 0.0
    %3175 = vmatpush1.msra.mxu0 0.0
    %3176 = vmatprep.subr.mxu0 0.0
    %3177 = vmatpush1.msra.mxu0 0.0
    %3178 = vmatprep.mubr.f32.mxu0 %v3109
    %3179 = vmatmul.mubr.f32.gmra.mrb[0].mxu0 %v3098
    %v3180 = vpop.f32.mrb[0].mxu0
    %v3181 = vadd.f32 0.0, %v3180
    %v3182 = vpop.f32.mrb[0].mxu0
    %3183 = vmatprep.mubr.f32.mxu0 %v3112
    %3184 = vmatmul.mubr.f32.gmra.mrb[0].mxu0 %v3104
    %v3185 = vpop.f32.mrb[0].mxu0
    %v3186 = vadd.f32 0.0, %v3185
    %v3187 = vpop.f32.mrb[0].mxu0
    %3188 = vdwg.mxu0
    %v3189 = vmul.f32 %v3181, %v2380
    %v3190 = vmul.f32 %v3186, %v2380
    %v3191 = vadd.f32 %v3189, %v2386
    %v3192 = vadd.f32 %v3190, %v2386
    %v3195 = vrot.slane %v3191, 1
    %v3196 = vrot.slane %v3192, 1
    %v3197 = vsel %vm618, %v3195, %v3196
    %v3198 = vsel %vm2439, %v3197, 0
    %v3200 = vsel %vm2439, %v3196, 0
    %3202 = vmatprep.subr.mxu0 %v2413
    %3203 = vmatpush1.msra.mxu0 %v2412
    %3204 = vmatprep.subr.mxu0 %v2415
    %3205 = vmatpush1.msra.mxu0 %v2414
    %3206 = vmatprep.subr.mxu0 %v2417
    %3207 = vmatpush1.msra.mxu0 %v2416
    %3208 = vmatprep.subr.mxu0 %v2419
    %3209 = vmatpush1.msra.mxu0 %v2418
    %3210 = vmatprep.subr.mxu0 %v2421
    %3211 = vmatpush1.msra.mxu0 %v2420
    %3212 = vmatprep.subr.mxu0 %v2423
    %3213 = vmatpush1.msra.mxu0 %v2422
    %3214 = vmatprep.subr.mxu0 %v2425
    %3215 = vmatpush1.msra.mxu0 %v2424
    %3216 = vmatprep.subr.mxu0 %v2427
    %3217 = vmatpush1.msra.mxu0 %v2426
    %3218 = vmatprep.subr.mxu0 %v2429
    %3219 = vmatpush1.msra.mxu0 %v2428
    %3220 = vmatprep.subr.mxu0 %v2431
    %3221 = vmatpush1.msra.mxu0 %v2430
    %3222 = vmatprep.subr.mxu0 %v2448
    %3223 = vmatpush1.msra.mxu0 %v2445
    %3224 = vmatprep.subr.mxu0 0.0
    %3225 = vmatpush1.msra.mxu0 0.0
    %3226 = vmatprep.subr.mxu0 0.0
    %3227 = vmatpush1.msra.mxu0 0.0
    %3228 = vmatprep.subr.mxu0 0.0
    %3229 = vmatpush1.msra.mxu0 0.0
    %3230 = vmatprep.subr.mxu0 0.0
    %3231 = vmatpush1.msra.mxu0 0.0
    %3232 = vmatprep.subr.mxu0 0.0
    %3233 = vmatpush1.msra.mxu0 0.0
    %3234 = vmatprep.subr.mxu0 0.0
    %3235 = vmatpush1.msra.mxu0 0.0
    %3236 = vmatprep.subr.mxu0 0.0
    %3237 = vmatpush1.msra.mxu0 0.0
    %3238 = vmatprep.subr.mxu0 0.0
    %3239 = vmatpush1.msra.mxu0 0.0
    %3240 = vmatprep.subr.mxu0 0.0
    %3241 = vmatpush1.msra.mxu0 0.0
    %3242 = vmatprep.subr.mxu0 0.0
    %3243 = vmatpush1.msra.mxu0 0.0
    %3244 = vmatprep.subr.mxu0 0.0
    %3245 = vmatpush1.msra.mxu0 0.0
    %3246 = vmatprep.subr.mxu0 0.0
    %3247 = vmatpush1.msra.mxu0 0.0
    %3248 = vmatprep.subr.mxu0 0.0
    %3249 = vmatpush1.msra.mxu0 0.0
    %3250 = vmatprep.subr.mxu0 0.0
    %3251 = vmatpush1.msra.mxu0 0.0
    %3252 = vmatprep.subr.mxu0 0.0
    %3253 = vmatpush1.msra.mxu0 0.0
    %3254 = vmatprep.subr.mxu0 0.0
    %3255 = vmatpush1.msra.mxu0 0.0
    %3256 = vmatprep.subr.mxu0 0.0
    %3257 = vmatpush1.msra.mxu0 0.0
    %3258 = vmatprep.subr.mxu0 0.0
    %3259 = vmatpush1.msra.mxu0 0.0
    %3260 = vmatprep.subr.mxu0 0.0
    %3261 = vmatpush1.msra.mxu0 0.0
    %3262 = vmatprep.subr.mxu0 0.0
    %3263 = vmatpush1.msra.mxu0 0.0
    %3264 = vmatprep.subr.mxu0 0.0
    %3265 = vmatpush1.msra.mxu0 0.0
    %3266 = vmatprep.mubr.f32.mxu0 0.0
    %3267 = vmatmul.mubr.f32.gmra.mrb[0].mxu0 %v3198
    %v3268 = vpop.f32.mrb[0].mxu0
    %v3269 = vadd.f32 0.0, %v3268
    %v3270 = vpop.f32.mrb[0].mxu0
    %v3271 = vadd.f32 0.0, %v3270
    %3272 = vmatprep.mubr.f32.mxu0 0.0
    %3273 = vmatmul.mubr.f32.gmra.mrb[0].mxu0 %v3200
    %v3274 = vpop.f32.mrb[0].mxu0
    %v3275 = vadd.f32 0.0, %v3274
    %v3276 = vpop.f32.mrb[0].mxu0
    %v3277 = vadd.f32 0.0, %v3276
    %3278 = vdwg.mxu0
    %v3279 = vsel %vm2439, %v3191, 0
    %v3281 = vsel %vm2439, %v3192, 0
    %3283 = vmatprep.subr.mxu0 %v2390
    %3284 = vmatpush1.msra.mxu0 %v2389
    %3285 = vmatprep.subr.mxu0 %v2392
    %3286 = vmatpush1.msra.mxu0 %v2391
    %3287 = vmatprep.subr.mxu0 %v2394
    %3288 = vmatpush1.msra.mxu0 %v2393
    %3289 = vmatprep.subr.mxu0 %v2396
    %3290 = vmatpush1.msra.mxu0 %v2395
    %3291 = vmatprep.subr.mxu0 %v2398
    %3292 = vmatpush1.msra.mxu0 %v2397
    %3293 = vmatprep.subr.mxu0 %v2400
    %3294 = vmatpush1.msra.mxu0 %v2399
    %3295 = vmatprep.subr.mxu0 %v2402
    %3296 = vmatpush1.msra.mxu0 %v2401
    %3297 = vmatprep.subr.mxu0 %v2404
    %3298 = vmatpush1.msra.mxu0 %v2403
    %3299 = vmatprep.subr.mxu0 %v2406
    %3300 = vmatpush1.msra.mxu0 %v2405
    %3301 = vmatprep.subr.mxu0 %v2408
    %3302 = vmatpush1.msra.mxu0 %v2407
    %3303 = vmatprep.subr.mxu0 %v2535
    %3304 = vmatpush1.msra.mxu0 %v2532
    %3305 = vmatprep.subr.mxu0 0.0
    %3306 = vmatpush1.msra.mxu0 0.0
    %3307 = vmatprep.subr.mxu0 0.0
    %3308 = vmatpush1.msra.mxu0 0.0
    %3309 = vmatprep.subr.mxu0 0.0
    %3310 = vmatpush1.msra.mxu0 0.0
    %3311 = vmatprep.subr.mxu0 0.0
    %3312 = vmatpush1.msra.mxu0 0.0
    %3313 = vmatprep.subr.mxu0 0.0
    %3314 = vmatpush1.msra.mxu0 0.0
    %3315 = vmatprep.subr.mxu0 0.0
    %3316 = vmatpush1.msra.mxu0 0.0
    %3317 = vmatprep.subr.mxu0 0.0
    %3318 = vmatpush1.msra.mxu0 0.0
    %3319 = vmatprep.subr.mxu0 0.0
    %3320 = vmatpush1.msra.mxu0 0.0
    %3321 = vmatprep.subr.mxu0 0.0
    %3322 = vmatpush1.msra.mxu0 0.0
    %3323 = vmatprep.subr.mxu0 0.0
    %3324 = vmatpush1.msra.mxu0 0.0
    %3325 = vmatprep.subr.mxu0 0.0
    %3326 = vmatpush1.msra.mxu0 0.0
    %3327 = vmatprep.subr.mxu0 0.0
    %3328 = vmatpush1.msra.mxu0 0.0
    %3329 = vmatprep.subr.mxu0 0.0
    %3330 = vmatpush1.msra.mxu0 0.0
    %3331 = vmatprep.subr.mxu0 0.0
    %3332 = vmatpush1.msra.mxu0 0.0
    %3333 = vmatprep.subr.mxu0 0.0
    %3334 = vmatpush1.msra.mxu0 0.0
    %3335 = vmatprep.subr.mxu0 0.0
    %3336 = vmatpush1.msra.mxu0 0.0
    %3337 = vmatprep.subr.mxu0 0.0
    %3338 = vmatpush1.msra.mxu0 0.0
    %3339 = vmatprep.subr.mxu0 0.0
    %3340 = vmatpush1.msra.mxu0 0.0
    %3341 = vmatprep.subr.mxu0 0.0
    %3342 = vmatpush1.msra.mxu0 0.0
    %3343 = vmatprep.subr.mxu0 0.0
    %3344 = vmatpush1.msra.mxu0 0.0
    %3345 = vmatprep.subr.mxu0 0.0
    %3346 = vmatpush1.msra.mxu0 0.0
    %3347 = vmatprep.mubr.f32.mxu0 0.0
    %3348 = vmatmul.mubr.f32.gmra.mrb[0].mxu0 %v3279
    %v3349 = vpop.f32.mrb[0].mxu0
    %v3350 = vadd.f32 %v3269, %v3349
    %v3351 = vpop.f32.mrb[0].mxu0
    %v3352 = vadd.f32 %v3271, %v3351
    %3353 = vmatprep.mubr.f32.mxu0 0.0
    %3354 = vmatmul.mubr.f32.gmra.mrb[0].mxu0 %v3281
    %v3355 = vpop.f32.mrb[0].mxu0
    %v3356 = vadd.f32 %v3275, %v3355
    %v3357 = vpop.f32.mrb[0].mxu0
    %v3358 = vadd.f32 %v3277, %v3357
    %3359 = vdwg.mxu0
    %v3360 = vrot.slane %v3191, 2
    %v3361 = vrot.slane %v3192, 2
    %v3362 = vsel %vm830, %v3360, %v3361
    %v3363 = vsel %vm2439, %v3362, 0
    %v3365 = vsel %vm2439, %v3361, 0
    %3367 = vmatprep.subr.mxu0 %v2616
    %3368 = vmatpush1.msra.mxu0 %v2615
    %3369 = vmatprep.subr.mxu0 %v2618
    %3370 = vmatpush1.msra.mxu0 %v2617
    %3371 = vmatprep.subr.mxu0 %v2620
    %3372 = vmatpush1.msra.mxu0 %v2619
    %3373 = vmatprep.subr.mxu0 %v2622
    %3374 = vmatpush1.msra.mxu0 %v2621
    %3375 = vmatprep.subr.mxu0 %v2624
    %3376 = vmatpush1.msra.mxu0 %v2623
    %3377 = vmatprep.subr.mxu0 %v2626
    %3378 = vmatpush1.msra.mxu0 %v2625
    %3379 = vmatprep.subr.mxu0 %v2628
    %3380 = vmatpush1.msra.mxu0 %v2627
    %3381 = vmatprep.subr.mxu0 %v2630
    %3382 = vmatpush1.msra.mxu0 %v2629
    %3383 = vmatprep.subr.mxu0 %v2632
    %3384 = vmatpush1.msra.mxu0 %v2631
    %3385 = vmatprep.subr.mxu0 %v2634
    %3386 = vmatpush1.msra.mxu0 %v2633
    %3387 = vmatprep.subr.mxu0 %v2648
    %3388 = vmatpush1.msra.mxu0 %v2645
    %3389 = vmatprep.subr.mxu0 0.0
    %3390 = vmatpush1.msra.mxu0 0.0
    %3391 = vmatprep.subr.mxu0 0.0
    %3392 = vmatpush1.msra.mxu0 0.0
    %3393 = vmatprep.subr.mxu0 0.0
    %3394 = vmatpush1.msra.mxu0 0.0
    %3395 = vmatprep.subr.mxu0 0.0
    %3396 = vmatpush1.msra.mxu0 0.0
    %3397 = vmatprep.subr.mxu0 0.0
    %3398 = vmatpush1.msra.mxu0 0.0
    %3399 = vmatprep.subr.mxu0 0.0
    %3400 = vmatpush1.msra.mxu0 0.0
    %3401 = vmatprep.subr.mxu0 0.0
    %3402 = vmatpush1.msra.mxu0 0.0
    %3403 = vmatprep.subr.mxu0 0.0
    %3404 = vmatpush1.msra.mxu0 0.0
    %3405 = vmatprep.subr.mxu0 0.0
    %3406 = vmatpush1.msra.mxu0 0.0
    %3407 = vmatprep.subr.mxu0 0.0
    %3408 = vmatpush1.msra.mxu0 0.0
    %3409 = vmatprep.subr.mxu0 0.0
    %3410 = vmatpush1.msra.mxu0 0.0
    %3411 = vmatprep.subr.mxu0 0.0
    %3412 = vmatpush1.msra.mxu0 0.0
    %3413 = vmatprep.subr.mxu0 0.0
    %3414 = vmatpush1.msra.mxu0 0.0
    %3415 = vmatprep.subr.mxu0 0.0
    %3416 = vmatpush1.msra.mxu0 0.0
    %3417 = vmatprep.subr.mxu0 0.0
    %3418 = vmatpush1.msra.mxu0 0.0
    %3419 = vmatprep.subr.mxu0 0.0
    %3420 = vmatpush1.msra.mxu0 0.0
    %3421 = vmatprep.subr.mxu0 0.0
    %3422 = vmatpush1.msra.mxu0 0.0
    %3423 = vmatprep.subr.mxu0 0.0
    %3424 = vmatpush1.msra.mxu0 0.0
    %3425 = vmatprep.subr.mxu0 0.0
    %3426 = vmatpush1.msra.mxu0 0.0
    %3427 = vmatprep.subr.mxu0 0.0
    %3428 = vmatpush1.msra.mxu0 0.0
    %3429 = vmatprep.subr.mxu0 0.0
    %3430 = vmatpush1.msra.mxu0 0.0
    %3431 = vmatprep.mubr.f32.mxu0 0.0
    %3432 = vmatmul.mubr.f32.gmra.mrb[0].mxu0 %v3363
    %v3433 = vpop.f32.mrb[0].mxu0
    %v3434 = vadd.f32 0.0, %v3433
    %v3435 = vpop.f32.mrb[0].mxu0
    %v3436 = vadd.f32 0.0, %v3435
    %3437 = vmatprep.mubr.f32.mxu0 0.0
    %3438 = vmatmul.mubr.f32.gmra.mrb[0].mxu0 %v3365
    %v3439 = vpop.f32.mrb[0].mxu0
    %v3440 = vadd.f32 0.0, %v3439
    %v3441 = vpop.f32.mrb[0].mxu0
    %v3442 = vadd.f32 0.0, %v3441
    %3443 = vdwg.mxu0
    %v3444 = vadd.f32 %v3350, %v3434
    %v3445 = vadd.f32 %v3352, %v3436
    %v3446 = vadd.f32 %v3356, %v3440
    %v3447 = vadd.f32 %v3358, %v3442
    %v3448 = vrot.slane %v3191, 3
    %v3449 = vrot.slane %v3192, 3
    %v3450 = vsel %vm952, %v3448, %v3449
    %v3451 = vsel %vm2439, %v3450, 0
    %v3453 = vsel %vm2439, %v3449, 0
    %3455 = vmatprep.subr.mxu0 %v2733
    %3456 = vmatpush1.msra.mxu0 %v2732
    %3457 = vmatprep.subr.mxu0 %v2735
    %3458 = vmatpush1.msra.mxu0 %v2734
    %3459 = vmatprep.subr.mxu0 %v2737
    %3460 = vmatpush1.msra.mxu0 %v2736
    %3461 = vmatprep.subr.mxu0 %v2739
    %3462 = vmatpush1.msra.mxu0 %v2738
    %3463 = vmatprep.subr.mxu0 %v2741
    %3464 = vmatpush1.msra.mxu0 %v2740
    %3465 = vmatprep.subr.mxu0 %v2743
    %3466 = vmatpush1.msra.mxu0 %v2742
    %3467 = vmatprep.subr.mxu0 %v2745
    %3468 = vmatpush1.msra.mxu0 %v2744
    %3469 = vmatprep.subr.mxu0 %v2747
    %3470 = vmatpush1.msra.mxu0 %v2746
    %3471 = vmatprep.subr.mxu0 %v2749
    %3472 = vmatpush1.msra.mxu0 %v2748
    %3473 = vmatprep.subr.mxu0 %v2751
    %3474 = vmatpush1.msra.mxu0 %v2750
    %3475 = vmatprep.subr.mxu0 %v2765
    %3476 = vmatpush1.msra.mxu0 %v2762
    %3477 = vmatprep.subr.mxu0 0.0
    %3478 = vmatpush1.msra.mxu0 0.0
    %3479 = vmatprep.subr.mxu0 0.0
    %3480 = vmatpush1.msra.mxu0 0.0
    %3481 = vmatprep.subr.mxu0 0.0
    %3482 = vmatpush1.msra.mxu0 0.0
    %3483 = vmatprep.subr.mxu0 0.0
    %3484 = vmatpush1.msra.mxu0 0.0
    %3485 = vmatprep.subr.mxu0 0.0
    %3486 = vmatpush1.msra.mxu0 0.0
    %3487 = vmatprep.subr.mxu0 0.0
    %3488 = vmatpush1.msra.mxu0 0.0
    %3489 = vmatprep.subr.mxu0 0.0
    %3490 = vmatpush1.msra.mxu0 0.0
    %3491 = vmatprep.subr.mxu0 0.0
    %3492 = vmatpush1.msra.mxu0 0.0
    %3493 = vmatprep.subr.mxu0 0.0
    %3494 = vmatpush1.msra.mxu0 0.0
    %3495 = vmatprep.subr.mxu0 0.0
    %3496 = vmatpush1.msra.mxu0 0.0
    %3497 = vmatprep.subr.mxu0 0.0
    %3498 = vmatpush1.msra.mxu0 0.0
    %3499 = vmatprep.subr.mxu0 0.0
    %3500 = vmatpush1.msra.mxu0 0.0
    %3501 = vmatprep.subr.mxu0 0.0
    %3502 = vmatpush1.msra.mxu0 0.0
    %3503 = vmatprep.subr.mxu0 0.0
    %3504 = vmatpush1.msra.mxu0 0.0
    %3505 = vmatprep.subr.mxu0 0.0
    %3506 = vmatpush1.msra.mxu0 0.0
    %3507 = vmatprep.subr.mxu0 0.0
    %3508 = vmatpush1.msra.mxu0 0.0
    %3509 = vmatprep.subr.mxu0 0.0
    %3510 = vmatpush1.msra.mxu0 0.0
    %3511 = vmatprep.subr.mxu0 0.0
    %3512 = vmatpush1.msra.mxu0 0.0
    %3513 = vmatprep.subr.mxu0 0.0
    %3514 = vmatpush1.msra.mxu0 0.0
    %3515 = vmatprep.subr.mxu0 0.0
    %3516 = vmatpush1.msra.mxu0 0.0
    %3517 = vmatprep.subr.mxu0 0.0
    %3518 = vmatpush1.msra.mxu0 0.0
    %3519 = vmatprep.mubr.f32.mxu0 0.0
    %3520 = vmatmul.mubr.f32.gmra.mrb[0].mxu0 %v3451
    %v3521 = vpop.f32.mrb[0].mxu0
    %v3522 = vadd.f32 0.0, %v3521
    %v3523 = vpop.f32.mrb[0].mxu0
    %v3524 = vadd.f32 0.0, %v3523
    %3525 = vmatprep.mubr.f32.mxu0 0.0
    %3526 = vmatmul.mubr.f32.gmra.mrb[0].mxu0 %v3453
    %v3527 = vpop.f32.mrb[0].mxu0
    %v3528 = vadd.f32 0.0, %v3527
    %v3529 = vpop.f32.mrb[0].mxu0
    %v3530 = vadd.f32 0.0, %v3529
    %3531 = vdwg.mxu0
    %v3532 = vadd.f32 %v3444, %v3522
    %v3533 = vadd.f32 %v3445, %v3524
    %v3534 = vadd.f32 %v3446, %v3528
    %v3535 = vadd.f32 %v3447, %v3530
    %v3536 = vrot.slane %v3191, 4
    %v3537 = vrot.slane %v3192, 4
    %v3538 = vsel %vm1074, %v3536, %v3537
    %v3539 = vsel %vm2439, %v3538, 0
    %v3541 = vsel %vm2439, %v3537, 0
    %3543 = vmatprep.subr.mxu0 %v2850
    %3544 = vmatpush1.msra.mxu0 %v2849
    %3545 = vmatprep.subr.mxu0 %v2852
    %3546 = vmatpush1.msra.mxu0 %v2851
    %3547 = vmatprep.subr.mxu0 %v2854
    %3548 = vmatpush1.msra.mxu0 %v2853
    %3549 = vmatprep.subr.mxu0 %v2856
    %3550 = vmatpush1.msra.mxu0 %v2855
    %3551 = vmatprep.subr.mxu0 %v2858
    %3552 = vmatpush1.msra.mxu0 %v2857
    %3553 = vmatprep.subr.mxu0 %v2860
    %3554 = vmatpush1.msra.mxu0 %v2859
    %3555 = vmatprep.subr.mxu0 %v2862
    %3556 = vmatpush1.msra.mxu0 %v2861
    %3557 = vmatprep.subr.mxu0 %v2864
    %3558 = vmatpush1.msra.mxu0 %v2863
    %3559 = vmatprep.subr.mxu0 %v2866
    %3560 = vmatpush1.msra.mxu0 %v2865
    %3561 = vmatprep.subr.mxu0 %v2868
    %3562 = vmatpush1.msra.mxu0 %v2867
    %3563 = vmatprep.subr.mxu0 %v2882
    %3564 = vmatpush1.msra.mxu0 %v2879
    %3565 = vmatprep.subr.mxu0 0.0
    %3566 = vmatpush1.msra.mxu0 0.0
    %3567 = vmatprep.subr.mxu0 0.0
    %3568 = vmatpush1.msra.mxu0 0.0
    %3569 = vmatprep.subr.mxu0 0.0
    %3570 = vmatpush1.msra.mxu0 0.0
    %3571 = vmatprep.subr.mxu0 0.0
    %3572 = vmatpush1.msra.mxu0 0.0
    %3573 = vmatprep.subr.mxu0 0.0
    %3574 = vmatpush1.msra.mxu0 0.0
    %3575 = vmatprep.subr.mxu0 0.0
    %3576 = vmatpush1.msra.mxu0 0.0
    %3577 = vmatprep.subr.mxu0 0.0
    %3578 = vmatpush1.msra.mxu0 0.0
    %3579 = vmatprep.subr.mxu0 0.0
    %3580 = vmatpush1.msra.mxu0 0.0
    %3581 = vmatprep.subr.mxu0 0.0
    %3582 = vmatpush1.msra.mxu0 0.0
    %3583 = vmatprep.subr.mxu0 0.0
    %3584 = vmatpush1.msra.mxu0 0.0
    %3585 = vmatprep.subr.mxu0 0.0
    %3586 = vmatpush1.msra.mxu0 0.0
    %3587 = vmatprep.subr.mxu0 0.0
    %3588 = vmatpush1.msra.mxu0 0.0
    %3589 = vmatprep.subr.mxu0 0.0
    %3590 = vmatpush1.msra.mxu0 0.0
    %3591 = vmatprep.subr.mxu0 0.0
    %3592 = vmatpush1.msra.mxu0 0.0
    %3593 = vmatprep.subr.mxu0 0.0
    %3594 = vmatpush1.msra.mxu0 0.0
    %3595 = vmatprep.subr.mxu0 0.0
    %3596 = vmatpush1.msra.mxu0 0.0
    %3597 = vmatprep.subr.mxu0 0.0
    %3598 = vmatpush1.msra.mxu0 0.0
    %3599 = vmatprep.subr.mxu0 0.0
    %3600 = vmatpush1.msra.mxu0 0.0
    %3601 = vmatprep.subr.mxu0 0.0
    %3602 = vmatpush1.msra.mxu0 0.0
    %3603 = vmatprep.subr.mxu0 0.0
    %3604 = vmatpush1.msra.mxu0 0.0
    %3605 = vmatprep.subr.mxu0 0.0
    %3606 = vmatpush1.msra.mxu0 0.0
    %3607 = vmatprep.mubr.f32.mxu0 0.0
    %3608 = vmatmul.mubr.f32.gmra.mrb[0].mxu0 %v3539
    %v3609 = vpop.f32.mrb[0].mxu0
    %v3610 = vadd.f32 0.0, %v3609
    %v3611 = vpop.f32.mrb[0].mxu0
    %v3612 = vadd.f32 0.0, %v3611
    %3613 = vmatprep.mubr.f32.mxu0 0.0
    %3614 = vmatmul.mubr.f32.gmra.mrb[0].mxu0 %v3541
    %v3615 = vpop.f32.mrb[0].mxu0
    %v3616 = vadd.f32 0.0, %v3615
    %v3617 = vpop.f32.mrb[0].mxu0
    %v3618 = vadd.f32 0.0, %v3617
    %3619 = vdwg.mxu0
    %v3620 = vadd.f32 %v3532, %v3610
    %v3621 = vadd.f32 %v3533, %v3612
    %v3622 = vadd.f32 %v3534, %v3616
    %v3623 = vadd.f32 %v3535, %v3618
    %v3624 = vadd.f32 %v3620, %v2968
    %v3625 = vadd.f32 %v3621, %v2972
    %v3626 = vadd.f32 %v3622, %v2968
    %v3627 = vadd.f32 %v3623, %v2972
    %v3628 = vmax.f32 %v3624, 0.0
    %v3629 = vmax.f32 %v3625, 0.0
    %v3630 = vmax.f32 %v3626, 0.0
    %v3631 = vmax.f32 %v3627, 0.0
    %v3632 = vsel %vm2981, %v3630, 0.0
    %v3633 = vadd.f32 %v3628, %v3632
    %v3634 = vrot.slane %v3633, 4
    %v3635 = vadd.f32 %v3633, %v3634
    %v3636 = vrot.slane %v3635, 2
    %v3637 = vadd.f32 %v3635, %v3636
    %v3638 = vrot.slane %v3637, 1
    %v3639 = vadd.f32 %v3637, %v3638
    %v3640 = vsel %vm626, %v3629, 0.0
    %v3641 = vsel %vm2991, %v3631, 0.0
    %v3642 = vadd.f32 %v3640, %v3641
    %v3643 = vrot.slane %v3642, 4
    %v3644 = vadd.f32 %v3642, %v3643
    %v3645 = vrot.slane %v3644, 2
    %v3646 = vadd.f32 %v3644, %v3645
    %v3647 = vrot.slane %v3646, 1
    %v3648 = vadd.f32 %v3646, %v3647
    %v3649 = vadd.f32 %v3000, %v3639
    %v3650 = vadd.f32 %v3001, %v3648
    %v3651 = vmul.f32 %v3628, %v3628
    %v3652 = vmul.f32 %v3629, %v3629
    %v3653 = vmul.f32 %v3630, %v3630
    %v3654 = vmul.f32 %v3631, %v3631
    %v3655 = vsel %vm2981, %v3653, 0.0
    %v3656 = vadd.f32 %v3651, %v3655
    %v3657 = vrot.slane %v3656, 4
    %v3658 = vadd.f32 %v3656, %v3657
    %v3659 = vrot.slane %v3658, 2
    %v3660 = vadd.f32 %v3658, %v3659
    %v3661 = vrot.slane %v3660, 1
    %v3662 = vadd.f32 %v3660, %v3661
    %v3663 = vsel %vm626, %v3652, 0.0
    %v3664 = vsel %vm2991, %v3654, 0.0
    %v3665 = vadd.f32 %v3663, %v3664
    %v3666 = vrot.slane %v3665, 4
    %v3667 = vadd.f32 %v3665, %v3666
    %v3668 = vrot.slane %v3667, 2
    %v3669 = vadd.f32 %v3667, %v3668
    %v3670 = vrot.slane %v3669, 1
    %v3671 = vadd.f32 %v3669, %v3670
    %v3672 = vadd.f32 %v3023, %v3662
    %v3673 = vadd.f32 %v3024, %v3671
    %v3675 = vsel %vm626, %v3650, 0
    %3677 = vmatprep.subr.mxu0 0.0
    %3678 = vmatpush1.msra.mxu0 %v444
    %3679 = vmatprep.subr.mxu0 0.0
    %3680 = vmatpush1.msra.mxu0 %v445
    %3681 = vmatprep.subr.mxu0 0.0
    %3682 = vmatpush1.msra.mxu0 %v446
    %3683 = vmatprep.subr.mxu0 0.0
    %3684 = vmatpush1.msra.mxu0 %v447
    %3685 = vmatprep.subr.mxu0 0.0
    %3686 = vmatpush1.msra.mxu0 %v448
    %3687 = vmatprep.subr.mxu0 0.0
    %3688 = vmatpush1.msra.mxu0 %v449
    %3689 = vmatprep.subr.mxu0 0.0
    %3690 = vmatpush1.msra.mxu0 %v450
    %3691 = vmatprep.subr.mxu0 0.0
    %3692 = vmatpush1.msra.mxu0 %v451
    %3693 = vmatprep.subr.mxu0 0.0
    %3694 = vmatpush1.msra.mxu0 %v452
    %3695 = vmatprep.subr.mxu0 0.0
    %3696 = vmatpush1.msra.mxu0 %v453
    %3697 = vmatprep.subr.mxu0 0.0
    %3698 = vmatpush1.msra.mxu0 %v454
    %3699 = vmatprep.subr.mxu0 0.0
    %3700 = vmatpush1.msra.mxu0 %v455
    %3701 = vmatprep.subr.mxu0 0.0
    %3702 = vmatpush1.msra.mxu0 %v456
    %3703 = vmatprep.subr.mxu0 0.0
    %3704 = vmatpush1.msra.mxu0 %v457
    %3705 = vmatprep.subr.mxu0 0.0
    %3706 = vmatpush1.msra.mxu0 %v458
    %3707 = vmatprep.subr.mxu0 0.0
    %3708 = vmatpush1.msra.mxu0 %v459
    %3709 = vmatprep.subr.mxu0 0.0
    %3710 = vmatpush1.msra.mxu0 %v460
    %3711 = vmatprep.subr.mxu0 0.0
    %3712 = vmatpush1.msra.mxu0 %v461
    %3713 = vmatprep.subr.mxu0 0.0
    %3714 = vmatpush1.msra.mxu0 %v462
    %3715 = vmatprep.subr.mxu0 0.0
    %3716 = vmatpush1.msra.mxu0 %v463
    %3717 = vmatprep.subr.mxu0 0.0
    %3718 = vmatpush1.msra.mxu0 0.0
    %3719 = vmatprep.subr.mxu0 0.0
    %3720 = vmatpush1.msra.mxu0 0.0
    %3721 = vmatprep.subr.mxu0 0.0
    %3722 = vmatpush1.msra.mxu0 0.0
    %3723 = vmatprep.subr.mxu0 0.0
    %3724 = vmatpush1.msra.mxu0 0.0
    %3725 = vmatprep.subr.mxu0 0.0
    %3726 = vmatpush1.msra.mxu0 0.0
    %3727 = vmatprep.subr.mxu0 0.0
    %3728 = vmatpush1.msra.mxu0 0.0
    %3729 = vmatprep.subr.mxu0 0.0
    %3730 = vmatpush1.msra.mxu0 0.0
    %3731 = vmatprep.subr.mxu0 0.0
    %3732 = vmatpush1.msra.mxu0 0.0
    %3733 = vmatprep.subr.mxu0 0.0
    %3734 = vmatpush1.msra.mxu0 0.0
    %3735 = vmatprep.subr.mxu0 0.0
    %3736 = vmatpush1.msra.mxu0 0.0
    %3737 = vmatprep.subr.mxu0 0.0
    %3738 = vmatpush1.msra.mxu0 0.0
    %3739 = vmatprep.subr.mxu0 0.0
    %3740 = vmatpush1.msra.mxu0 0.0
    %3741 = vmatprep.mubr.f32.mxu0 %v3675
    %3742 = vmatmul.mubr.f32.gmra.mrb[0].mxu0 %v3649
    %v3743 = vpop.f32.mrb[0].mxu0
    %v3744 = vadd.f32 0.0, %v3743
    %v3745 = vpop.f32.mrb[0].mxu0
    %3746 = vdwg.mxu0
    %v3747 = vrcp.pop 200.0
    %v3748 = vmul.f32 %v3744, %v3747
    %v3750 = vsel %vm626, %v3673, 0
    %3752 = vmatprep.subr.mxu0 0.0
    %3753 = vmatpush1.msra.mxu0 %v444
    %3754 = vmatprep.subr.mxu0 0.0
    %3755 = vmatpush1.msra.mxu0 %v445
    %3756 = vmatprep.subr.mxu0 0.0
    %3757 = vmatpush1.msra.mxu0 %v446
    %3758 = vmatprep.subr.mxu0 0.0
    %3759 = vmatpush1.msra.mxu0 %v447
    %3760 = vmatprep.subr.mxu0 0.0
    %3761 = vmatpush1.msra.mxu0 %v448
    %3762 = vmatprep.subr.mxu0 0.0
    %3763 = vmatpush1.msra.mxu0 %v449
    %3764 = vmatprep.subr.mxu0 0.0
    %3765 = vmatpush1.msra.mxu0 %v450
    %3766 = vmatprep.subr.mxu0 0.0
    %3767 = vmatpush1.msra.mxu0 %v451
    %3768 = vmatprep.subr.mxu0 0.0
    %3769 = vmatpush1.msra.mxu0 %v452
    %3770 = vmatprep.subr.mxu0 0.0
    %3771 = vmatpush1.msra.mxu0 %v453
    %3772 = vmatprep.subr.mxu0 0.0
    %3773 = vmatpush1.msra.mxu0 %v454
    %3774 = vmatprep.subr.mxu0 0.0
    %3775 = vmatpush1.msra.mxu0 %v455
    %3776 = vmatprep.subr.mxu0 0.0
    %3777 = vmatpush1.msra.mxu0 %v456
    %3778 = vmatprep.subr.mxu0 0.0
    %3779 = vmatpush1.msra.mxu0 %v457
    %3780 = vmatprep.subr.mxu0 0.0
    %3781 = vmatpush1.msra.mxu0 %v458
    %3782 = vmatprep.subr.mxu0 0.0
    %3783 = vmatpush1.msra.mxu0 %v459
    %3784 = vmatprep.subr.mxu0 0.0
    %3785 = vmatpush1.msra.mxu0 %v460
    %3786 = vmatprep.subr.mxu0 0.0
    %3787 = vmatpush1.msra.mxu0 %v461
    %3788 = vmatprep.subr.mxu0 0.0
    %3789 = vmatpush1.msra.mxu0 %v462
    %3790 = vmatprep.subr.mxu0 0.0
    %3791 = vmatpush1.msra.mxu0 %v463
    %3792 = vmatprep.subr.mxu0 0.0
    %3793 = vmatpush1.msra.mxu0 0.0
    %3794 = vmatprep.subr.mxu0 0.0
    %3795 = vmatpush1.msra.mxu0 0.0
    %3796 = vmatprep.subr.mxu0 0.0
    %3797 = vmatpush1.msra.mxu0 0.0
    %3798 = vmatprep.subr.mxu0 0.0
    %3799 = vmatpush1.msra.mxu0 0.0
    %3800 = vmatprep.subr.mxu0 0.0
    %3801 = vmatpush1.msra.mxu0 0.0
    %3802 = vmatprep.subr.mxu0 0.0
    %3803 = vmatpush1.msra.mxu0 0.0
    %3804 = vmatprep.subr.mxu0 0.0
    %3805 = vmatpush1.msra.mxu0 0.0
    %3806 = vmatprep.subr.mxu0 0.0
    %3807 = vmatpush1.msra.mxu0 0.0
    %3808 = vmatprep.subr.mxu0 0.0
    %3809 = vmatpush1.msra.mxu0 0.0
    %3810 = vmatprep.subr.mxu0 0.0
    %3811 = vmatpush1.msra.mxu0 0.0
    %3812 = vmatprep.subr.mxu0 0.0
    %3813 = vmatpush1.msra.mxu0 0.0
    %3814 = vmatprep.subr.mxu0 0.0
    %3815 = vmatpush1.msra.mxu0 0.0
    %3816 = vmatprep.mubr.f32.mxu0 %v3750
    %3817 = vmatmul.mubr.f32.gmra.mrb[0].mxu0 %v3672
    %v3818 = vpop.f32.mrb[0].mxu0
    %v3819 = vadd.f32 0.0, %v3818
    %v3820 = vpop.f32.mrb[0].mxu0
    %3821 = vdwg.mxu0
    %v3822 = vmul.f32 %v3819, %v3747
    %v3823 = vmul.f32 %v3748, %v3748
    %v3824 = vsub.f32 %v3822, %v3823
    %v3825 = vadd.f32 %v3824, 1e-05
    %v3826 = vrsqrt.pop %v3825
    %vm3827 = vcmask 130048
    %v3829 = vsel %vm3827, %v3826, 0
    %3831 = vmatprep.subr.mxu0 0.0
    %3832 = vmatpush1.msra.mxu0 %v470
    %3833 = vmatprep.subr.mxu0 0.0
    %3834 = vmatpush1.msra.mxu0 %v471
    %3835 = vmatprep.subr.mxu0 0.0
    %3836 = vmatpush1.msra.mxu0 0.0
    %3837 = vmatprep.subr.mxu0 0.0
    %3838 = vmatpush1.msra.mxu0 0.0
    %3839 = vmatprep.subr.mxu0 0.0
    %3840 = vmatpush1.msra.mxu0 0.0
    %3841 = vmatprep.subr.mxu0 0.0
    %3842 = vmatpush1.msra.mxu0 0.0
    %3843 = vmatprep.subr.mxu0 0.0
    %3844 = vmatpush1.msra.mxu0 0.0
    %3845 = vmatprep.subr.mxu0 0.0
    %3846 = vmatpush1.msra.mxu0 0.0
    %3847 = vmatprep.subr.mxu0 0.0
    %3848 = vmatpush1.msra.mxu0 0.0
    %3849 = vmatprep.subr.mxu0 0.0
    %3850 = vmatpush1.msra.mxu0 0.0
    %3851 = vmatprep.subr.mxu0 0.0
    %3852 = vmatpush1.msra.mxu0 0.0
    %3853 = vmatprep.subr.mxu0 0.0
    %3854 = vmatpush1.msra.mxu0 0.0
    %3855 = vmatprep.subr.mxu0 0.0
    %3856 = vmatpush1.msra.mxu0 0.0
    %3857 = vmatprep.subr.mxu0 0.0
    %3858 = vmatpush1.msra.mxu0 0.0
    %3859 = vmatprep.subr.mxu0 0.0
    %3860 = vmatpush1.msra.mxu0 0.0
    %3861 = vmatprep.subr.mxu0 0.0
    %3862 = vmatpush1.msra.mxu0 0.0
    %3863 = vmatprep.subr.mxu0 0.0
    %3864 = vmatpush1.msra.mxu0 0.0
    %3865 = vmatprep.subr.mxu0 0.0
    %3866 = vmatpush1.msra.mxu0 0.0
    %3867 = vmatprep.subr.mxu0 0.0
    %3868 = vmatpush1.msra.mxu0 0.0
    %3869 = vmatprep.subr.mxu0 0.0
    %3870 = vmatpush1.msra.mxu0 0.0
    %3871 = vmatprep.subr.mxu0 0.0
    %3872 = vmatpush1.msra.mxu0 0.0
    %3873 = vmatprep.subr.mxu0 0.0
    %3874 = vmatpush1.msra.mxu0 0.0
    %3875 = vmatprep.subr.mxu0 0.0
    %3876 = vmatpush1.msra.mxu0 0.0
    %3877 = vmatprep.subr.mxu0 0.0
    %3878 = vmatpush1.msra.mxu0 0.0
    %3879 = vmatprep.subr.mxu0 0.0
    %3880 = vmatpush1.msra.mxu0 0.0
    %3881 = vmatprep.subr.mxu0 0.0
    %3882 = vmatpush1.msra.mxu0 0.0
    %3883 = vmatprep.subr.mxu0 0.0
    %3884 = vmatpush1.msra.mxu0 0.0
    %3885 = vmatprep.subr.mxu0 0.0
    %3886 = vmatpush1.msra.mxu0 0.0
    %3887 = vmatprep.subr.mxu0 0.0
    %3888 = vmatpush1.msra.mxu0 0.0
    %3889 = vmatprep.subr.mxu0 0.0
    %3890 = vmatpush1.msra.mxu0 0.0
    %3891 = vmatprep.subr.mxu0 0.0
    %3892 = vmatpush1.msra.mxu0 0.0
    %3893 = vmatprep.subr.mxu0 0.0
    %3894 = vmatpush1.msra.mxu0 0.0
    %3895 = vmatprep.mubr.f32.mxu0 0.0
    %3896 = vmatmul.mubr.f32.gmra.mrb[0].mxu0 %v3829
    %v3897 = vpop.f32.mrb[0].mxu0
    %v3898 = vadd.f32 0.0, %v3897
    %v3899 = vpop.f32.mrb[0].mxu0
    %3900 = vdwg.mxu0
    %v3902 = vrot.slane %v3898, 4
    %v3904 = vmul.f32 %v27, %v3902
    %v3906 = vsel %vm3827, %v3748, 0
    %3908 = vmatprep.subr.mxu0 0.0
    %3909 = vmatpush1.msra.mxu0 %v470
    %3910 = vmatprep.subr.mxu0 0.0
    %3911 = vmatpush1.msra.mxu0 %v471
    %3912 = vmatprep.subr.mxu0 0.0
    %3913 = vmatpush1.msra.mxu0 0.0
    %3914 = vmatprep.subr.mxu0 0.0
    %3915 = vmatpush1.msra.mxu0 0.0
    %3916 = vmatprep.subr.mxu0 0.0
    %3917 = vmatpush1.msra.mxu0 0.0
    %3918 = vmatprep.subr.mxu0 0.0
    %3919 = vmatpush1.msra.mxu0 0.0
    %3920 = vmatprep.subr.mxu0 0.0
    %3921 = vmatpush1.msra.mxu0 0.0
    %3922 = vmatprep.subr.mxu0 0.0
    %3923 = vmatpush1.msra.mxu0 0.0
    %3924 = vmatprep.subr.mxu0 0.0
    %3925 = vmatpush1.msra.mxu0 0.0
    %3926 = vmatprep.subr.mxu0 0.0
    %3927 = vmatpush1.msra.mxu0 0.0
    %3928 = vmatprep.subr.mxu0 0.0
    %3929 = vmatpush1.msra.mxu0 0.0
    %3930 = vmatprep.subr.mxu0 0.0
    %3931 = vmatpush1.msra.mxu0 0.0
    %3932 = vmatprep.subr.mxu0 0.0
    %3933 = vmatpush1.msra.mxu0 0.0
    %3934 = vmatprep.subr.mxu0 0.0
    %3935 = vmatpush1.msra.mxu0 0.0
    %3936 = vmatprep.subr.mxu0 0.0
    %3937 = vmatpush1.msra.mxu0 0.0
    %3938 = vmatprep.subr.mxu0 0.0
    %3939 = vmatpush1.msra.mxu0 0.0
    %3940 = vmatprep.subr.mxu0 0.0
    %3941 = vmatpush1.msra.mxu0 0.0
    %3942 = vmatprep.subr.mxu0 0.0
    %3943 = vmatpush1.msra.mxu0 0.0
    %3944 = vmatprep.subr.mxu0 0.0
    %3945 = vmatpush1.msra.mxu0 0.0
    %3946 = vmatprep.subr.mxu0 0.0
    %3947 = vmatpush1.msra.mxu0 0.0
    %3948 = vmatprep.subr.mxu0 0.0
    %3949 = vmatpush1.msra.mxu0 0.0
    %3950 = vmatprep.subr.mxu0 0.0
    %3951 = vmatpush1.msra.mxu0 0.0
    %3952 = vmatprep.subr.mxu0 0.0
    %3953 = vmatpush1.msra.mxu0 0.0
    %3954 = vmatprep.subr.mxu0 0.0
    %3955 = vmatpush1.msra.mxu0 0.0
    %3956 = vmatprep.subr.mxu0 0.0
    %3957 = vmatpush1.msra.mxu0 0.0
    %3958 = vmatprep.subr.mxu0 0.0
    %3959 = vmatpush1.msra.mxu0 0.0
    %3960 = vmatprep.subr.mxu0 0.0
    %3961 = vmatpush1.msra.mxu0 0.0
    %3962 = vmatprep.subr.mxu0 0.0
    %3963 = vmatpush1.msra.mxu0 0.0
    %3964 = vmatprep.subr.mxu0 0.0
    %3965 = vmatpush1.msra.mxu0 0.0
    %3966 = vmatprep.subr.mxu0 0.0
    %3967 = vmatpush1.msra.mxu0 0.0
    %3968 = vmatprep.subr.mxu0 0.0
    %3969 = vmatpush1.msra.mxu0 0.0
    %3970 = vmatprep.subr.mxu0 0.0
    %3971 = vmatpush1.msra.mxu0 0.0
    %3972 = vmatprep.mubr.f32.mxu0 0.0
    %3973 = vmatmul.mubr.f32.gmra.mrb[0].mxu0 %v3906
    %v3974 = vpop.f32.mrb[0].mxu0
    %v3975 = vadd.f32 0.0, %v3974
    %v3976 = vpop.f32.mrb[0].mxu0
    %3977 = vdwg.mxu0
    %v3979 = vrot.slane %v3904, 4
    %v3981 = vmul.f32 %v3975, %v3979
    %v3983 = vrot.slane %v3981, 3
    %v3985 = vsub.f32 %v27, %v3983
    %vm3986 = vcmask 80896
    %v3987 = vsel %vm3986, %v214, 0
    %v3990 = vsel %vm2981, %v2979, 0
    %v3993 = vsel %vm2981, %v2980, 0
    %3995 = vmatprep.subr.mxu0 %v2978
    %3996 = vmatpush1.msra.mxu0 %v2977
    %3997 = vmatprep.subr.mxu0 %v3993
    %3998 = vmatpush1.msra.mxu0 %v3990
    %3999 = vmatprep.subr.mxu0 0.0
    %4000 = vmatpush1.msra.mxu0 0.0
    %4001 = vmatprep.subr.mxu0 0.0
    %4002 = vmatpush1.msra.mxu0 0.0
    %4003 = vmatprep.subr.mxu0 0.0
    %4004 = vmatpush1.msra.mxu0 0.0
    %4005 = vmatprep.subr.mxu0 0.0
    %4006 = vmatpush1.msra.mxu0 0.0
    %4007 = vmatprep.subr.mxu0 0.0
    %4008 = vmatpush1.msra.mxu0 0.0
    %4009 = vmatprep.subr.mxu0 0.0
    %4010 = vmatpush1.msra.mxu0 0.0
    %4011 = vmatprep.subr.mxu0 0.0
    %4012 = vmatpush1.msra.mxu0 0.0
    %4013 = vmatprep.subr.mxu0 0.0
    %4014 = vmatpush1.msra.mxu0 0.0
    %4015 = vmatprep.subr.mxu0 0.0
    %4016 = vmatpush1.msra.mxu0 0.0
    %4017 = vmatprep.subr.mxu0 0.0
    %4018 = vmatpush1.msra.mxu0 0.0
    %4019 = vmatprep.subr.mxu0 0.0
    %4020 = vmatpush1.msra.mxu0 0.0
    %4021 = vmatprep.subr.mxu0 0.0
    %4022 = vmatpush1.msra.mxu0 0.0
    %4023 = vmatprep.subr.mxu0 0.0
    %4024 = vmatpush1.msra.mxu0 0.0
    %4025 = vmatprep.subr.mxu0 0.0
    %4026 = vmatpush1.msra.mxu0 0.0
    %4027 = vmatprep.subr.mxu0 0.0
    %4028 = vmatpush1.msra.mxu0 0.0
    %4029 = vmatprep.subr.mxu0 0.0
    %4030 = vmatpush1.msra.mxu0 0.0
    %4031 = vmatprep.subr.mxu0 0.0
    %4032 = vmatpush1.msra.mxu0 0.0
    %4033 = vmatprep.subr.mxu0 0.0
    %4034 = vmatpush1.msra.mxu0 0.0
    %4035 = vmatprep.subr.mxu0 0.0
    %4036 = vmatpush1.msra.mxu0 0.0
    %4037 = vmatprep.subr.mxu0 0.0
    %4038 = vmatpush1.msra.mxu0 0.0
    %4039 = vmatprep.subr.mxu0 0.0
    %4040 = vmatpush1.msra.mxu0 0.0
    %4041 = vmatprep.subr.mxu0 0.0
    %4042 = vmatpush1.msra.mxu0 0.0
    %4043 = vmatprep.subr.mxu0 0.0
    %4044 = vmatpush1.msra.mxu0 0.0
    %4045 = vmatprep.subr.mxu0 0.0
    %4046 = vmatpush1.msra.mxu0 0.0
    %4047 = vmatprep.subr.mxu0 0.0
    %4048 = vmatpush1.msra.mxu0 0.0
    %4049 = vmatprep.subr.mxu0 0.0
    %4050 = vmatpush1.msra.mxu0 0.0
    %4051 = vmatprep.subr.mxu0 0.0
    %4052 = vmatpush1.msra.mxu0 0.0
    %4053 = vmatprep.subr.mxu0 0.0
    %4054 = vmatpush1.msra.mxu0 0.0
    %4055 = vmatprep.subr.mxu0 0.0
    %4056 = vmatpush1.msra.mxu0 0.0
    %4057 = vmatprep.subr.mxu0 0.0
    %4058 = vmatpush1.msra.mxu0 0.0
    %4059 = vmatprep.mubr.f32.mxu0 0.0
    %4060 = vmatmul.mubr.f32.gmra.mrb[0].mxu0 %v3987
    %v4061 = vpop.f32.mrb[0].mxu0
    %v4062 = vadd.f32 0.0, %v4061
    %v4063 = vpop.f32.mrb[0].mxu0
    %v4064 = vadd.f32 0.0, %v4063
    %4065 = vdwg.mxu0
    %v4067 = vsel %vm626, %v4064, 0
    %4069 = vmatprep.subr.mxu0 0.0
    %4070 = vmatpush1.msra.mxu0 %v573
    %4071 = vmatprep.subr.mxu0 0.0
    %4072 = vmatpush1.msra.mxu0 %v574
    %4073 = vmatprep.subr.mxu0 0.0
    %4074 = vmatpush1.msra.mxu0 %v575
    %4075 = vmatprep.subr.mxu0 0.0
    %4076 = vmatpush1.msra.mxu0 %v576
    %4077 = vmatprep.subr.mxu0 0.0
    %4078 = vmatpush1.msra.mxu0 %v577
    %4079 = vmatprep.subr.mxu0 0.0
    %4080 = vmatpush1.msra.mxu0 %v578
    %4081 = vmatprep.subr.mxu0 0.0
    %4082 = vmatpush1.msra.mxu0 %v579
    %4083 = vmatprep.subr.mxu0 0.0
    %4084 = vmatpush1.msra.mxu0 %v580
    %4085 = vmatprep.subr.mxu0 0.0
    %4086 = vmatpush1.msra.mxu0 %v581
    %4087 = vmatprep.subr.mxu0 0.0
    %4088 = vmatpush1.msra.mxu0 %v582
    %4089 = vmatprep.subr.mxu0 0.0
    %4090 = vmatpush1.msra.mxu0 %v583
    %4091 = vmatprep.subr.mxu0 0.0
    %4092 = vmatpush1.msra.mxu0 %v584
    %4093 = vmatprep.subr.mxu0 0.0
    %4094 = vmatpush1.msra.mxu0 %v585
    %4095 = vmatprep.subr.mxu0 0.0
    %4096 = vmatpush1.msra.mxu0 %v586
    %4097 = vmatprep.subr.mxu0 0.0
    %4098 = vmatpush1.msra.mxu0 %v587
    %4099 = vmatprep.subr.mxu0 0.0
    %4100 = vmatpush1.msra.mxu0 %v588
    %4101 = vmatprep.subr.mxu0 0.0
    %4102 = vmatpush1.msra.mxu0 %v589
    %4103 = vmatprep.subr.mxu0 0.0
    %4104 = vmatpush1.msra.mxu0 %v590
    %4105 = vmatprep.subr.mxu0 0.0
    %4106 = vmatpush1.msra.mxu0 %v591
    %4107 = vmatprep.subr.mxu0 0.0
    %4108 = vmatpush1.msra.mxu0 %v592
    %4109 = vmatprep.subr.mxu0 0.0
    %4110 = vmatpush1.msra.mxu0 0.0
    %4111 = vmatprep.subr.mxu0 0.0
    %4112 = vmatpush1.msra.mxu0 0.0
    %4113 = vmatprep.subr.mxu0 0.0
    %4114 = vmatpush1.msra.mxu0 0.0
    %4115 = vmatprep.subr.mxu0 0.0
    %4116 = vmatpush1.msra.mxu0 0.0
    %4117 = vmatprep.subr.mxu0 0.0
    %4118 = vmatpush1.msra.mxu0 0.0
    %4119 = vmatprep.subr.mxu0 0.0
    %4120 = vmatpush1.msra.mxu0 0.0
    %4121 = vmatprep.subr.mxu0 0.0
    %4122 = vmatpush1.msra.mxu0 0.0
    %4123 = vmatprep.subr.mxu0 0.0
    %4124 = vmatpush1.msra.mxu0 0.0
    %4125 = vmatprep.subr.mxu0 0.0
    %4126 = vmatpush1.msra.mxu0 0.0
    %4127 = vmatprep.subr.mxu0 0.0
    %4128 = vmatpush1.msra.mxu0 0.0
    %4129 = vmatprep.subr.mxu0 0.0
    %4130 = vmatpush1.msra.mxu0 0.0
    %4131 = vmatprep.subr.mxu0 0.0
    %4132 = vmatpush1.msra.mxu0 0.0
    %4133 = vmatprep.mubr.f32.mxu0 %v4067
    %4134 = vmatmul.mubr.f32.gmra.mrb[0].mxu0 %v4062
    %v4135 = vpop.f32.mrb[0].mxu0
    %v4136 = vadd.f32 0.0, %v4135
    %v4137 = vpop.f32.mrb[0].mxu0
    %4138 = vdwg.mxu0
    %v4139 = vlaneseq
    %v4140 = vshrl.u32 %v4139, 7
    %v4141 = vsub.s32 4, %v4140
    %v4142 = vrot.slane %v3904, %v4141
    %v4143 = vmul.f32 %v4136, %v4142
    %v4144 = vlaneseq
    %v4145 = vshrl.u32 %v4144, 7
    %v4146 = vsub.s32 5, %v4145
    %v4147 = vrot.slane %v3985, %v4146
    %v4148 = vadd.f32 %v4143, %v4147
    %v4150 = vrot.slane %v4148, 1
    %4151 = vrot.lane.b32.xlu0 %v4150, 80
    %v4152 = vpop.permute.xlu0 %4151
    %v4154 = vrot.slane %v4148, 2
    %4155 = vrot.lane.b32.xlu0 %v4154, 32
    %v4156 = vpop.permute.xlu0 %4155
    %v4158 = vrot.slane %v4148, 3
    %4159 = vrot.lane.b32.xlu0 %v4158, 112
    %v4160 = vpop.permute.xlu0 %4159
    %v4162 = vrot.slane %v4148, 4
    %4163 = vrot.lane.b32.xlu0 %v4162, 64
    %v4164 = vpop.permute.xlu0 %4163
    %vm4166 = vcmask 654336
    %v4167 = vsel %vm4166, %v4148, %v4152
    %v4168 = vsel %vm626, %v4152, %v4156
    %vm4169 = vcmask 916480
    %v4170 = vsel %vm4169, %v4168, %v4160
    %vm4171 = vcmask 523264
    %v4172 = vsel %vm4171, %v4160, %v4164
    %v4174 = vsel %vm2981, %v3630, 0
    %v4177 = vsel %vm2981, %v3631, 0
    %4179 = vmatprep.subr.mxu0 %v3629
    %4180 = vmatpush1.msra.mxu0 %v3628
    %4181 = vmatprep.subr.mxu0 %v4177
    %4182 = vmatpush1.msra.mxu0 %v4174
    %4183 = vmatprep.subr.mxu0 0.0
    %4184 = vmatpush1.msra.mxu0 0.0
    %4185 = vmatprep.subr.mxu0 0.0
    %4186 = vmatpush1.msra.mxu0 0.0
    %4187 = vmatprep.subr.mxu0 0.0
    %4188 = vmatpush1.msra.mxu0 0.0
    %4189 = vmatprep.subr.mxu0 0.0
    %4190 = vmatpush1.msra.mxu0 0.0
    %4191 = vmatprep.subr.mxu0 0.0
    %4192 = vmatpush1.msra.mxu0 0.0
    %4193 = vmatprep.subr.mxu0 0.0
    %4194 = vmatpush1.msra.mxu0 0.0
    %4195 = vmatprep.subr.mxu0 0.0
    %4196 = vmatpush1.msra.mxu0 0.0
    %4197 = vmatprep.subr.mxu0 0.0
    %4198 = vmatpush1.msra.mxu0 0.0
    %4199 = vmatprep.subr.mxu0 0.0
    %4200 = vmatpush1.msra.mxu0 0.0
    %4201 = vmatprep.subr.mxu0 0.0
    %4202 = vmatpush1.msra.mxu0 0.0
    %4203 = vmatprep.subr.mxu0 0.0
    %4204 = vmatpush1.msra.mxu0 0.0
    %4205 = vmatprep.subr.mxu0 0.0
    %4206 = vmatpush1.msra.mxu0 0.0
    %4207 = vmatprep.subr.mxu0 0.0
    %4208 = vmatpush1.msra.mxu0 0.0
    %4209 = vmatprep.subr.mxu0 0.0
    %4210 = vmatpush1.msra.mxu0 0.0
    %4211 = vmatprep.subr.mxu0 0.0
    %4212 = vmatpush1.msra.mxu0 0.0
    %4213 = vmatprep.subr.mxu0 0.0
    %4214 = vmatpush1.msra.mxu0 0.0
    %4215 = vmatprep.subr.mxu0 0.0
    %4216 = vmatpush1.msra.mxu0 0.0
    %4217 = vmatprep.subr.mxu0 0.0
    %4218 = vmatpush1.msra.mxu0 0.0
    %4219 = vmatprep.subr.mxu0 0.0
    %4220 = vmatpush1.msra.mxu0 0.0
    %4221 = vmatprep.subr.mxu0 0.0
    %4222 = vmatpush1.msra.mxu0 0.0
    %4223 = vmatprep.subr.mxu0 0.0
    %4224 = vmatpush1.msra.mxu0 0.0
    %4225 = vmatprep.subr.mxu0 0.0
    %4226 = vmatpush1.msra.mxu0 0.0
    %4227 = vmatprep.subr.mxu0 0.0
    %4228 = vmatpush1.msra.mxu0 0.0
    %4229 = vmatprep.subr.mxu0 0.0
    %4230 = vmatpush1.msra.mxu0 0.0
    %4231 = vmatprep.subr.mxu0 0.0
    %4232 = vmatpush1.msra.mxu0 0.0
    %4233 = vmatprep.subr.mxu0 0.0
    %4234 = vmatpush1.msra.mxu0 0.0
    %4235 = vmatprep.subr.mxu0 0.0
    %4236 = vmatpush1.msra.mxu0 0.0
    %4237 = vmatprep.subr.mxu0 0.0
    %4238 = vmatpush1.msra.mxu0 0.0
    %4239 = vmatprep.subr.mxu0 0.0
    %4240 = vmatpush1.msra.mxu0 0.0
    %4241 = vmatprep.subr.mxu0 0.0
    %4242 = vmatpush1.msra.mxu0 0.0
    %4243 = vmatprep.mubr.f32.mxu0 0.0
    %4244 = vmatmul.mubr.f32.gmra.mrb[0].mxu0 %v3987
    %v4245 = vpop.f32.mrb[0].mxu0
    %v4246 = vadd.f32 0.0, %v4245
    %v4247 = vpop.f32.mrb[0].mxu0
    %v4248 = vadd.f32 0.0, %v4247
    %4249 = vdwg.mxu0
    %v4251 = vsel %vm626, %v4248, 0
    %4253 = vmatprep.subr.mxu0 0.0
    %4254 = vmatpush1.msra.mxu0 %v573
    %4255 = vmatprep.subr.mxu0 0.0
    %4256 = vmatpush1.msra.mxu0 %v574
    %4257 = vmatprep.subr.mxu0 0.0
    %4258 = vmatpush1.msra.mxu0 %v575
    %4259 = vmatprep.subr.mxu0 0.0
    %4260 = vmatpush1.msra.mxu0 %v576
    %4261 = vmatprep.subr.mxu0 0.0
    %4262 = vmatpush1.msra.mxu0 %v577
    %4263 = vmatprep.subr.mxu0 0.0
    %4264 = vmatpush1.msra.mxu0 %v578
    %4265 = vmatprep.subr.mxu0 0.0
    %4266 = vmatpush1.msra.mxu0 %v579
    %4267 = vmatprep.subr.mxu0 0.0
    %4268 = vmatpush1.msra.mxu0 %v580
    %4269 = vmatprep.subr.mxu0 0.0
    %4270 = vmatpush1.msra.mxu0 %v581
    %4271 = vmatprep.subr.mxu0 0.0
    %4272 = vmatpush1.msra.mxu0 %v582
    %4273 = vmatprep.subr.mxu0 0.0
    %4274 = vmatpush1.msra.mxu0 %v583
    %4275 = vmatprep.subr.mxu0 0.0
    %4276 = vmatpush1.msra.mxu0 %v584
    %4277 = vmatprep.subr.mxu0 0.0
    %4278 = vmatpush1.msra.mxu0 %v585
    %4279 = vmatprep.subr.mxu0 0.0
    %4280 = vmatpush1.msra.mxu0 %v586
    %4281 = vmatprep.subr.mxu0 0.0
    %4282 = vmatpush1.msra.mxu0 %v587
    %4283 = vmatprep.subr.mxu0 0.0
    %4284 = vmatpush1.msra.mxu0 %v588
    %4285 = vmatprep.subr.mxu0 0.0
    %4286 = vmatpush1.msra.mxu0 %v589
    %4287 = vmatprep.subr.mxu0 0.0
    %4288 = vmatpush1.msra.mxu0 %v590
    %4289 = vmatprep.subr.mxu0 0.0
    %4290 = vmatpush1.msra.mxu0 %v591
    %4291 = vmatprep.subr.mxu0 0.0
    %4292 = vmatpush1.msra.mxu0 %v592
    %4293 = vmatprep.subr.mxu0 0.0
    %4294 = vmatpush1.msra.mxu0 0.0
    %4295 = vmatprep.subr.mxu0 0.0
    %4296 = vmatpush1.msra.mxu0 0.0
    %4297 = vmatprep.subr.mxu0 0.0
    %4298 = vmatpush1.msra.mxu0 0.0
    %4299 = vmatprep.subr.mxu0 0.0
    %4300 = vmatpush1.msra.mxu0 0.0
    %4301 = vmatprep.subr.mxu0 0.0
    %4302 = vmatpush1.msra.mxu0 0.0
    %4303 = vmatprep.subr.mxu0 0.0
    %4304 = vmatpush1.msra.mxu0 0.0
    %4305 = vmatprep.subr.mxu0 0.0
    %4306 = vmatpush1.msra.mxu0 0.0
    %4307 = vmatprep.subr.mxu0 0.0
    %4308 = vmatpush1.msra.mxu0 0.0
    %4309 = vmatprep.subr.mxu0 0.0
    %4310 = vmatpush1.msra.mxu0 0.0
    %4311 = vmatprep.subr.mxu0 0.0
    %4312 = vmatpush1.msra.mxu0 0.0
    %4313 = vmatprep.subr.mxu0 0.0
    %4314 = vmatpush1.msra.mxu0 0.0
    %4315 = vmatprep.subr.mxu0 0.0
    %4316 = vmatpush1.msra.mxu0 0.0
    %4317 = vmatprep.mubr.f32.mxu0 %v4251
    %4318 = vmatmul.mubr.f32.gmra.mrb[0].mxu0 %v4246
    %v4319 = vpop.f32.mrb[0].mxu0
    %v4320 = vadd.f32 0.0, %v4319
    %v4321 = vpop.f32.mrb[0].mxu0
    %4322 = vdwg.mxu0
    %v4323 = vmul.f32 %v4320, %v4142
    %v4324 = vadd.f32 %v4323, %v4147
    %v4326 = vrot.slane %v4324, 1
    %4327 = vrot.lane.b32.xlu0 %v4326, 80
    %v4328 = vpop.permute.xlu0 %4327
    %v4330 = vrot.slane %v4324, 2
    %4331 = vrot.lane.b32.xlu0 %v4330, 32
    %v4332 = vpop.permute.xlu0 %4331
    %v4334 = vrot.slane %v4324, 3
    %4335 = vrot.lane.b32.xlu0 %v4334, 112
    %v4336 = vpop.permute.xlu0 %4335
    %v4338 = vrot.slane %v4324, 4
    %4339 = vrot.lane.b32.xlu0 %v4338, 64
    %v4340 = vpop.permute.xlu0 %4339
    %v4342 = vsel %vm4166, %v4324, %v4328
    %v4343 = vsel %vm626, %v4328, %v4332
    %v4344 = vsel %vm4169, %v4343, %v4336
    %v4345 = vsel %vm4171, %v4336, %v4340
    %v4349 = vrot.slane %v4342, 7
    %v4350 = vrot.slane %v4344, 7
    %v4351 = vrot.slane %v4345, 7
    %v4352 = vrot.slane %v4340, 7
    %vm4357 = vcmask 1040384
    %v4358 = vsel %vm4357, %v4167, %v4349
    %v4359 = vsel %vm4357, %v4170, %v4350
    %v4360 = vsel %vm4357, %v4172, %v4351
    %v4361 = vsel %vm4357, %v4164, %v4352
    %v4362 = vld [vmem:[%s4] sm:$0xff]
    %v4363 = vld [vmem:[%s4 + $0x8] sm:$0xff]
    %v4364 = vld [vmem:[%s4 + $0x10] sm:$0xff]
    %v4365 = vld [vmem:[%s4 + $0x18] sm:$0xff]
    %v4366 = vld [vmem:[%s4 + $0x20] sm:$0xff]
    %v4367 = vld [vmem:[%s4 + $0x28] sm:$0xff]
    %v4368 = vld [vmem:[%s4 + $0x30] sm:$0xff]
    %v4369 = vld [vmem:[%s4 + $0x38] sm:$0xff]
    %v4370 = vld [vmem:[%s4 + $0x40] sm:$0xff]
    %v4371 = vld [vmem:[%s4 + $0x48] sm:$0xff]
    %v4372 = vld [vmem:[%s4 + $0x50] sm:$0xff]
    %v4373 = vld [vmem:[%s4 + $0x58] sm:$0xff]
    %v4374 = vld [vmem:[%s4 + $0x60] sm:$0xff]
    %v4375 = vld [vmem:[%s4 + $0x68] sm:$0xff]
    %v4376 = vld [vmem:[%s4 + $0x70] sm:$0xff]
    %v4377 = vld [vmem:[%s4 + $0x78] sm:$0xff]
    %v4378 = vld [vmem:[%s4 + $0x80] sm:$0xff]
    %v4379 = vld [vmem:[%s4 + $0x88] sm:$0xff]
    %v4380 = vld [vmem:[%s4 + $0x90] sm:$0xff]
    %v4381 = vld [vmem:[%s4 + $0x98] sm:$0xff]
    %v4382 = vld [vmem:[%s4 + $0xa0] sm:$0xff]
    %v4383 = vld [vmem:[%s4 + $0xa8] sm:$0xff]
    %v4384 = vld [vmem:[%s4 + $0xb0] sm:$0xff]
    %v4385 = vld [vmem:[%s4 + $0xb8] sm:$0xff]
    %v4386 = vld [vmem:[%s4 + $0xc0] sm:$0xff]
    %v4387 = vld [vmem:[%s4 + $0xc8] sm:$0xff]
    %v4388 = vld [vmem:[%s4 + $0xd0] sm:$0xff]
    %v4389 = vld [vmem:[%s4 + $0xd8] sm:$0xff]
    %v4390 = vld [vmem:[%s4 + $0xe0] sm:$0xff]
    %v4391 = vld [vmem:[%s4 + $0xe8] sm:$0xff]
    %v4392 = vld [vmem:[%s4 + $0xf0] sm:$0xff]
    %v4393 = vld [vmem:[%s4 + $0xf8] sm:$0xff]
    %v4394 = vld [vmem:[%s4 + $0x100] sm:$0xff]
    %v4395 = vld [vmem:[%s4 + $0x108] sm:$0xff]
    %v4396 = vld [vmem:[%s4 + $0x110] sm:$0xff]
    %v4397 = vld [vmem:[%s4 + $0x118] sm:$0xff]
    %v4398 = vld [vmem:[%s4 + $0x120] sm:$0xff]
    %v4399 = vld [vmem:[%s4 + $0x128] sm:$0xff]
    %v4400 = vld [vmem:[%s4 + $0x130] sm:$0xff]
    %v4401 = vld [vmem:[%s4 + $0x138] sm:$0xff]
    %v4402 = vld [vmem:[%s4 + $0x140] sm:$0xff]
    %v4403 = vld [vmem:[%s4 + $0x148] sm:$0xff]
    %v4404 = vld [vmem:[%s4 + $0x150] sm:$0xff]
    %v4405 = vld [vmem:[%s4 + $0x158] sm:$0xff]
    %v4406 = vld [vmem:[%s4 + $0x160] sm:$0xff]
    %v4407 = vld [vmem:[%s4 + $0x168] sm:$0xff]
    %v4408 = vld [vmem:[%s4 + $0x170] sm:$0xff]
    %v4409 = vld [vmem:[%s4 + $0x178] sm:$0xff]
    %v4410 = vld [vmem:[%s4 + $0x180] sm:$0xff]
    %v4411 = vld [vmem:[%s4 + $0x188] sm:$0xff]
    %v4412 = vld [vmem:[%s4 + $0x190] sm:$0xff]
    %v4413 = vld [vmem:[%s4 + $0x198] sm:$0xff]
    %v4414 = vld [vmem:[%s4 + $0x1a0] sm:$0xff]
    %v4415 = vld [vmem:[%s4 + $0x1a8] sm:$0xff]
    %v4416 = vld [vmem:[%s4 + $0x1b0] sm:$0xff]
    %v4417 = vld [vmem:[%s4 + $0x1b8] sm:$0xff]
    %v4418 = vld [vmem:[%s4 + $0x1c0] sm:$0xff]
    %v4419 = vld [vmem:[%s4 + $0x1c8] sm:$0xff]
    %v4420 = vld [vmem:[%s4 + $0x1d0] sm:$0xff]
    %v4421 = vld [vmem:[%s4 + $0x1d8] sm:$0xff]
    %v4422 = vld [vmem:[%s4 + $0x1e0] sm:$0xff]
    %v4423 = vld [vmem:[%s4 + $0x1e8] sm:$0xff]
    %v4424 = vld [vmem:[%s4 + $0x1f0] sm:$0xff]
    %v4425 = vld [vmem:[%s4 + $0x1f8] sm:$0xff]
    %v4426 = vld [vmem:[%s4 + $0x200] sm:$0xff]
    %v4427 = vld [vmem:[%s4 + $0x208] sm:$0xff]
    %v4428 = vld [vmem:[%s4 + $0x210] sm:$0xff]
    %v4429 = vld [vmem:[%s4 + $0x218] sm:$0xff]
    %v4430 = vld [vmem:[%s4 + $0x220] sm:$0xff]
    %v4431 = vld [vmem:[%s4 + $0x228] sm:$0xff]
    %v4432 = vld [vmem:[%s4 + $0x230] sm:$0xff]
    %v4433 = vld [vmem:[%s4 + $0x238] sm:$0xff]
    %v4434 = vld [vmem:[%s4 + $0x240] sm:$0xff]
    %v4435 = vld [vmem:[%s4 + $0x248] sm:$0xff]
    %v4436 = vld [vmem:[%s4 + $0x250] sm:$0xff]
    %v4437 = vld [vmem:[%s4 + $0x258] sm:$0xff]
    %v4438 = vld [vmem:[%s4 + $0x260] sm:$0xff]
    %v4439 = vld [vmem:[%s4 + $0x268] sm:$0xff]
    %v4440 = vld [vmem:[%s4 + $0x270] sm:$0xff]
    %v4441 = vld [vmem:[%s4 + $0x278] sm:$0xff]
    %v4442 = vld [vmem:[%s4 + $0x280] sm:$0xff]
    %v4443 = vld [vmem:[%s4 + $0x288] sm:$0xff]
    %v4444 = vld [vmem:[%s4 + $0x290] sm:$0xff]
    %v4445 = vld [vmem:[%s4 + $0x298] sm:$0xff]
    %v4446 = vld [vmem:[%s4 + $0x2a0] sm:$0xff]
    %v4447 = vld [vmem:[%s4 + $0x2a8] sm:$0xff]
    %v4448 = vld [vmem:[%s4 + $0x2b0] sm:$0xff]
    %v4449 = vld [vmem:[%s4 + $0x2b8] sm:$0xff]
    %v4450 = vld [vmem:[%s4 + $0x2c0] sm:$0xff]
    %v4451 = vld [vmem:[%s4 + $0x2c8] sm:$0xff]
    %v4452 = vld [vmem:[%s4 + $0x2d0] sm:$0xff]
    %v4453 = vld [vmem:[%s4 + $0x2d8] sm:$0xff]
    %v4454 = vld [vmem:[%s4 + $0x2e0] sm:$0xff]
    %v4455 = vld [vmem:[%s4 + $0x2e8] sm:$0xff]
    %v4456 = vld [vmem:[%s4 + $0x2f0] sm:$0xff]
    %v4457 = vld [vmem:[%s4 + $0x2f8] sm:$0xff]
    %v4458 = vld [vmem:[%s4 + $0x300] sm:$0xff]
    %v4459 = vld [vmem:[%s4 + $0x308] sm:$0xff]
    %v4460 = vld [vmem:[%s4 + $0x310] sm:$0xff]
    %v4461 = vld [vmem:[%s4 + $0x318] sm:$0xff]
    %v4462 = vlaneseq
    %v4463 = vshrl.u32 %v4462, 7
    %v4464 = vsub.s32 6, %v4463
    %v4465 = vrot.slane %v27, %v4464
    %v4466 = vlaneseq
    %v4467 = vshrl.u32 %v4466, 7
    %v4468 = vsub.s32 6, %v4467
    %v4469 = vrot.slane %v28, %v4468
    %v4471 = vsel %vm3827, %v4361, 0
    %4473 = vmatprep.subr.mxu0 %v4363
    %4474 = vmatpush1.msra.mxu0 %v4362
    %4475 = vmatprep.subr.mxu0 %v4365
    %4476 = vmatpush1.msra.mxu0 %v4364
    %4477 = vmatprep.subr.mxu0 %v4367
    %4478 = vmatpush1.msra.mxu0 %v4366
    %4479 = vmatprep.subr.mxu0 %v4369
    %4480 = vmatpush1.msra.mxu0 %v4368
    %4481 = vmatprep.subr.mxu0 %v4371
    %4482 = vmatpush1.msra.mxu0 %v4370
    %4483 = vmatprep.subr.mxu0 %v4373
    %4484 = vmatpush1.msra.mxu0 %v4372
    %4485 = vmatprep.subr.mxu0 %v4375
    %4486 = vmatpush1.msra.mxu0 %v4374
    %4487 = vmatprep.subr.mxu0 %v4377
    %4488 = vmatpush1.msra.mxu0 %v4376
    %4489 = vmatprep.subr.mxu0 %v4379
    %4490 = vmatpush1.msra.mxu0 %v4378
    %4491 = vmatprep.subr.mxu0 %v4381
    %4492 = vmatpush1.msra.mxu0 %v4380
    %4493 = vmatprep.subr.mxu0 %v4383
    %4494 = vmatpush1.msra.mxu0 %v4382
    %4495 = vmatprep.subr.mxu0 %v4385
    %4496 = vmatpush1.msra.mxu0 %v4384
    %4497 = vmatprep.subr.mxu0 %v4387
    %4498 = vmatpush1.msra.mxu0 %v4386
    %4499 = vmatprep.subr.mxu0 %v4389
    %4500 = vmatpush1.msra.mxu0 %v4388
    %4501 = vmatprep.subr.mxu0 %v4391
    %4502 = vmatpush1.msra.mxu0 %v4390
    %4503 = vmatprep.subr.mxu0 %v4393
    %4504 = vmatpush1.msra.mxu0 %v4392
    %4505 = vmatprep.subr.mxu0 %v4395
    %4506 = vmatpush1.msra.mxu0 %v4394
    %4507 = vmatprep.subr.mxu0 %v4397
    %4508 = vmatpush1.msra.mxu0 %v4396
    %4509 = vmatprep.subr.mxu0 %v4399
    %4510 = vmatpush1.msra.mxu0 %v4398
    %4511 = vmatprep.subr.mxu0 %v4401
    %4512 = vmatpush1.msra.mxu0 %v4400
    %4513 = vmatprep.subr.mxu0 %v4403
    %4514 = vmatpush1.msra.mxu0 %v4402
    %4515 = vmatprep.subr.mxu0 %v4405
    %4516 = vmatpush1.msra.mxu0 %v4404
    %4517 = vmatprep.subr.mxu0 %v4407
    %4518 = vmatpush1.msra.mxu0 %v4406
    %4519 = vmatprep.subr.mxu0 %v4409
    %4520 = vmatpush1.msra.mxu0 %v4408
    %4521 = vmatprep.subr.mxu0 %v4411
    %4522 = vmatpush1.msra.mxu0 %v4410
    %4523 = vmatprep.subr.mxu0 %v4413
    %4524 = vmatpush1.msra.mxu0 %v4412
    %4525 = vmatprep.subr.mxu0 %v4415
    %4526 = vmatpush1.msra.mxu0 %v4414
    %4527 = vmatprep.subr.mxu0 %v4417
    %4528 = vmatpush1.msra.mxu0 %v4416
    %4529 = vmatprep.subr.mxu0 %v4419
    %4530 = vmatpush1.msra.mxu0 %v4418
    %4531 = vmatprep.subr.mxu0 %v4421
    %4532 = vmatpush1.msra.mxu0 %v4420
    %4533 = vmatprep.subr.mxu0 %v4423
    %4534 = vmatpush1.msra.mxu0 %v4422
    %4535 = vmatprep.subr.mxu0 %v4425
    %4536 = vmatpush1.msra.mxu0 %v4424
    %4537 = vmatprep.mubr.f32.mxu0 %v4359
    %4538 = vmatmul.mubr.f32.gmra.mrb[0].mxu0 %v4358
    %v4539 = vpop.f32.mrb[0].mxu0
    %v4540 = vadd.f32 %v4465, %v4539
    %v4541 = vpop.f32.mrb[0].mxu0
    %v4542 = vadd.f32 %v4469, %v4541
    %4543 = vdwg.mxu0
    %4544 = vmatprep.subr.mxu0 %v4427
    %4545 = vmatpush1.msra.mxu0 %v4426
    %4546 = vmatprep.subr.mxu0 %v4429
    %4547 = vmatpush1.msra.mxu0 %v4428
    %4548 = vmatprep.subr.mxu0 %v4431
    %4549 = vmatpush1.msra.mxu0 %v4430
    %4550 = vmatprep.subr.mxu0 %v4433
    %4551 = vmatpush1.msra.mxu0 %v4432
    %4552 = vmatprep.subr.mxu0 %v4435
    %4553 = vmatpush1.msra.mxu0 %v4434
    %4554 = vmatprep.subr.mxu0 %v4437
    %4555 = vmatpush1.msra.mxu0 %v4436
    %4556 = vmatprep.subr.mxu0 %v4439
    %4557 = vmatpush1.msra.mxu0 %v4438
    %4558 = vmatprep.subr.mxu0 %v4441
    %4559 = vmatpush1.msra.mxu0 %v4440
    %4560 = vmatprep.subr.mxu0 %v4443
    %4561 = vmatpush1.msra.mxu0 %v4442
    %4562 = vmatprep.subr.mxu0 %v4445
    %4563 = vmatpush1.msra.mxu0 %v4444
    %4564 = vmatprep.subr.mxu0 %v4447
    %4565 = vmatpush1.msra.mxu0 %v4446
    %4566 = vmatprep.subr.mxu0 %v4449
    %4567 = vmatpush1.msra.mxu0 %v4448
    %4568 = vmatprep.subr.mxu0 %v4451
    %4569 = vmatpush1.msra.mxu0 %v4450
    %4570 = vmatprep.subr.mxu0 %v4453
    %4571 = vmatpush1.msra.mxu0 %v4452
    %4572 = vmatprep.subr.mxu0 %v4455
    %4573 = vmatpush1.msra.mxu0 %v4454
    %4574 = vmatprep.subr.mxu0 %v4457
    %4575 = vmatpush1.msra.mxu0 %v4456
    %4576 = vmatprep.subr.mxu0 %v4459
    %4577 = vmatpush1.msra.mxu0 %v4458
    %4578 = vmatprep.subr.mxu0 %v4461
    %4579 = vmatpush1.msra.mxu0 %v4460
    %4580 = vmatprep.subr.mxu0 0.0
    %4581 = vmatpush1.msra.mxu0 0.0
    %4582 = vmatprep.subr.mxu0 0.0
    %4583 = vmatpush1.msra.mxu0 0.0
    %4584 = vmatprep.subr.mxu0 0.0
    %4585 = vmatpush1.msra.mxu0 0.0
    %4586 = vmatprep.subr.mxu0 0.0
    %4587 = vmatpush1.msra.mxu0 0.0
    %4588 = vmatprep.subr.mxu0 0.0
    %4589 = vmatpush1.msra.mxu0 0.0
    %4590 = vmatprep.subr.mxu0 0.0
    %4591 = vmatpush1.msra.mxu0 0.0
    %4592 = vmatprep.subr.mxu0 0.0
    %4593 = vmatpush1.msra.mxu0 0.0
    %4594 = vmatprep.subr.mxu0 0.0
    %4595 = vmatpush1.msra.mxu0 0.0
    %4596 = vmatprep.subr.mxu0 0.0
    %4597 = vmatpush1.msra.mxu0 0.0
    %4598 = vmatprep.subr.mxu0 0.0
    %4599 = vmatpush1.msra.mxu0 0.0
    %4600 = vmatprep.subr.mxu0 0.0
    %4601 = vmatpush1.msra.mxu0 0.0
    %4602 = vmatprep.subr.mxu0 0.0
    %4603 = vmatpush1.msra.mxu0 0.0
    %4604 = vmatprep.subr.mxu0 0.0
    %4605 = vmatpush1.msra.mxu0 0.0
    %4606 = vmatprep.subr.mxu0 0.0
    %4607 = vmatpush1.msra.mxu0 0.0
    %4608 = vmatprep.mubr.f32.mxu0 %v4471
    %4609 = vmatmul.mubr.f32.gmra.mrb[0].mxu0 %v4360
    %v4610 = vpop.f32.mrb[0].mxu0
    %v4611 = vadd.f32 %v4540, %v4610
    %v4612 = vpop.f32.mrb[0].mxu0
    %v4613 = vadd.f32 %v4542, %v4612
    %4614 = vdwg.mxu0
    %v4615 = vmax.f32 %v4611, 0.0
    %v4616 = vmax.f32 %v4613, 0.0
    %v4617 = vsel %vm2981, %v4615, 0.0
    %v4618 = vrot.slane %v4617, 4
    %v4619 = vadd.f32 %v4617, %v4618
    %v4620 = vrot.slane %v4619, 2
    %v4621 = vadd.f32 %v4619, %v4620
    %v4622 = vrot.slane %v4621, 1
    %v4623 = vadd.f32 %v4621, %v4622
    %v4624 = vsel %vm2981, %v4616, 0.0
    %v4625 = vrot.slane %v4624, 4
    %v4626 = vadd.f32 %v4624, %v4625
    %v4627 = vrot.slane %v4626, 2
    %v4628 = vadd.f32 %v4626, %v4627
    %v4629 = vrot.slane %v4628, 1
    %v4630 = vadd.f32 %v4628, %v4629
    %v4631 = vrcp.pop 2.0
    %v4632 = vmul.f32 %v4623, %v4631
    %v4633 = vmul.f32 %v4630, %v4631
    %v4634 = vsub.f32 %v4615, %v4632
    %v4635 = vsub.f32 %v4616, %v4633
    %v4636 = vmul.f32 %v4634, %v4634
    %v4637 = vmul.f32 %v4635, %v4635
    %v4638 = vsel %vm2981, %v4636, 0.0
    %v4639 = vrot.slane %v4638, 4
    %v4640 = vadd.f32 %v4638, %v4639
    %v4641 = vrot.slane %v4640, 2
    %v4642 = vadd.f32 %v4640, %v4641
    %v4643 = vrot.slane %v4642, 1
    %v4644 = vadd.f32 %v4642, %v4643
    %v4645 = vsel %vm2981, %v4637, 0.0
    %v4646 = vrot.slane %v4645, 4
    %v4647 = vadd.f32 %v4645, %v4646
    %v4648 = vrot.slane %v4647, 2
    %v4649 = vadd.f32 %v4647, %v4648
    %v4650 = vrot.slane %v4649, 1
    %v4651 = vadd.f32 %v4649, %v4650
    %v4652 = vmul.f32 %v4644, %v4631
    %v4653 = vmul.f32 %v4651, %v4631
    %v4654 = vadd.f32 %v4652, 1e-05
    %v4655 = vadd.f32 %v4653, 1e-05
    %v4656 = vrsqrt.pop %v4654
    %v4657 = vrsqrt.pop %v4655
    %v4658 = vmul.f32 %v4634, %v4656
    %v4659 = vmul.f32 %v4635, %v4657
    %v4660 = vlaneseq
    %v4661 = vshrl.u32 %v4660, 7
    %v4662 = vsub.s32 7, %v4661
    %v4663 = vrot.slane %v27, %v4662
    %v4664 = vlaneseq
    %v4665 = vshrl.u32 %v4664, 7
    %v4666 = vsub.s32 7, %v4665
    %v4667 = vrot.slane %v28, %v4666
    %v4668 = vmul.f32 %v4658, %v4663
    %v4669 = vmul.f32 %v4659, %v4667
    %v4670 = vlaneseq
    %v4671 = vshrl.u32 %v4670, 7
    %v4672 = vsub.s32 0, %v4671
    %v4673 = vrot.slane %v29, %v4672
    %v4674 = vlaneseq
    %v4675 = vshrl.u32 %v4674, 7
    %v4676 = vsub.s32 0, %v4675
    %v4677 = vrot.slane %v30, %v4676
    %v4678 = vadd.f32 %v4668, %v4673
    %v4679 = vadd.f32 %v4669, %v4677
    %v4680 = vld [vmem:[%s5] sm:$0xff]
    %v4681 = vld [vmem:[%s5 + $0x8] sm:$0xff]
    %v4682 = vld [vmem:[%s5 + $0x10] sm:$0xff]
    %v4683 = vld [vmem:[%s5 + $0x18] sm:$0xff]
    %v4684 = vld [vmem:[%s5 + $0x20] sm:$0xff]
    %v4685 = vld [vmem:[%s5 + $0x28] sm:$0xff]
    %v4686 = vld [vmem:[%s5 + $0x30] sm:$0xff]
    %v4687 = vld [vmem:[%s5 + $0x38] sm:$0xff]
    %v4688 = vld [vmem:[%s5 + $0x40] sm:$0xff]
    %v4689 = vld [vmem:[%s5 + $0x48] sm:$0xff]
    %v4690 = vld [vmem:[%s5 + $0x50] sm:$0xff]
    %v4691 = vld [vmem:[%s5 + $0x58] sm:$0xff]
    %v4692 = vld [vmem:[%s5 + $0x60] sm:$0xff]
    %v4693 = vld [vmem:[%s5 + $0x68] sm:$0xff]
    %v4694 = vld [vmem:[%s5 + $0x70] sm:$0xff]
    %v4695 = vld [vmem:[%s5 + $0x78] sm:$0xff]
    %v4696 = vld [vmem:[%s5 + $0x80] sm:$0xff]
    %v4697 = vld [vmem:[%s5 + $0x88] sm:$0xff]
    %v4698 = vld [vmem:[%s5 + $0x90] sm:$0xff]
    %v4699 = vld [vmem:[%s5 + $0x98] sm:$0xff]
    %v4700 = vld [vmem:[%s5 + $0xa0] sm:$0xff]
    %v4701 = vld [vmem:[%s5 + $0xa8] sm:$0xff]
    %v4702 = vld [vmem:[%s5 + $0xb0] sm:$0xff]
    %v4703 = vld [vmem:[%s5 + $0xb8] sm:$0xff]
    %v4704 = vld [vmem:[%s5 + $0xc0] sm:$0xff]
    %v4705 = vld [vmem:[%s5 + $0xc8] sm:$0xff]
    %v4706 = vld [vmem:[%s5 + $0xd0] sm:$0xff]
    %v4707 = vld [vmem:[%s5 + $0xd8] sm:$0xff]
    %v4708 = vld [vmem:[%s5 + $0xe0] sm:$0xff]
    %v4709 = vld [vmem:[%s5 + $0xe8] sm:$0xff]
    %v4710 = vld [vmem:[%s5 + $0xf0] sm:$0xff]
    %v4711 = vld [vmem:[%s5 + $0xf8] sm:$0xff]
    %v4712 = vlaneseq
    %v4713 = vshrl.u32 %v4712, 7
    %v4714 = vsub.s32 1, %v4713
    %v4715 = vrot.slane %v29, %v4714
    %4716 = vmatprep.subr.mxu0 0.0
    %4717 = vmatpush1.msra.mxu0 %v4680
    %4718 = vmatprep.subr.mxu0 0.0
    %4719 = vmatpush1.msra.mxu0 %v4681
    %4720 = vmatprep.subr.mxu0 0.0
    %4721 = vmatpush1.msra.mxu0 %v4682
    %4722 = vmatprep.subr.mxu0 0.0
    %4723 = vmatpush1.msra.mxu0 %v4683
    %4724 = vmatprep.subr.mxu0 0.0
    %4725 = vmatpush1.msra.mxu0 %v4684
    %4726 = vmatprep.subr.mxu0 0.0
    %4727 = vmatpush1.msra.mxu0 %v4685
    %4728 = vmatprep.subr.mxu0 0.0
    %4729 = vmatpush1.msra.mxu0 %v4686
    %4730 = vmatprep.subr.mxu0 0.0
    %4731 = vmatpush1.msra.mxu0 %v4687
    %4732 = vmatprep.subr.mxu0 0.0
    %4733 = vmatpush1.msra.mxu0 %v4688
    %4734 = vmatprep.subr.mxu0 0.0
    %4735 = vmatpush1.msra.mxu0 %v4689
    %4736 = vmatprep.subr.mxu0 0.0
    %4737 = vmatpush1.msra.mxu0 %v4690
    %4738 = vmatprep.subr.mxu0 0.0
    %4739 = vmatpush1.msra.mxu0 %v4691
    %4740 = vmatprep.subr.mxu0 0.0
    %4741 = vmatpush1.msra.mxu0 %v4692
    %4742 = vmatprep.subr.mxu0 0.0
    %4743 = vmatpush1.msra.mxu0 %v4693
    %4744 = vmatprep.subr.mxu0 0.0
    %4745 = vmatpush1.msra.mxu0 %v4694
    %4746 = vmatprep.subr.mxu0 0.0
    %4747 = vmatpush1.msra.mxu0 %v4695
    %4748 = vmatprep.subr.mxu0 0.0
    %4749 = vmatpush1.msra.mxu0 %v4696
    %4750 = vmatprep.subr.mxu0 0.0
    %4751 = vmatpush1.msra.mxu0 %v4697
    %4752 = vmatprep.subr.mxu0 0.0
    %4753 = vmatpush1.msra.mxu0 %v4698
    %4754 = vmatprep.subr.mxu0 0.0
    %4755 = vmatpush1.msra.mxu0 %v4699
    %4756 = vmatprep.subr.mxu0 0.0
    %4757 = vmatpush1.msra.mxu0 %v4700
    %4758 = vmatprep.subr.mxu0 0.0
    %4759 = vmatpush1.msra.mxu0 %v4701
    %4760 = vmatprep.subr.mxu0 0.0
    %4761 = vmatpush1.msra.mxu0 %v4702
    %4762 = vmatprep.subr.mxu0 0.0
    %4763 = vmatpush1.msra.mxu0 %v4703
    %4764 = vmatprep.subr.mxu0 0.0
    %4765 = vmatpush1.msra.mxu0 %v4704
    %4766 = vmatprep.subr.mxu0 0.0
    %4767 = vmatpush1.msra.mxu0 %v4705
    %4768 = vmatprep.subr.mxu0 0.0
    %4769 = vmatpush1.msra.mxu0 %v4706
    %4770 = vmatprep.subr.mxu0 0.0
    %4771 = vmatpush1.msra.mxu0 %v4707
    %4772 = vmatprep.subr.mxu0 0.0
    %4773 = vmatpush1.msra.mxu0 %v4708
    %4774 = vmatprep.subr.mxu0 0.0
    %4775 = vmatpush1.msra.mxu0 %v4709
    %4776 = vmatprep.subr.mxu0 0.0
    %4777 = vmatpush1.msra.mxu0 %v4710
    %4778 = vmatprep.subr.mxu0 0.0
    %4779 = vmatpush1.msra.mxu0 %v4711
    %4780 = vmatprep.mubr.f32.mxu0 %v4679
    %4781 = vmatmul.mubr.f32.gmra.mrb[0].mxu0 %v4678
    %v4782 = vpop.f32.mrb[0].mxu0
    %v4783 = vadd.f32 %v4715, %v4782
    %v4784 = vpop.f32.mrb[0].mxu0
    %4785 = vdwg.mxu0
    %v4786 = vmax.f32 %v4783, 0.0
    %vm4787 = vcmask 517120
    %v4788 = vsel %vm4787, %v4786, 0.0
    %v4789 = vrot.slane %v4788, 4
    %v4790 = vadd.f32 %v4788, %v4789
    %v4791 = vrot.slane %v4790, 2
    %v4792 = vadd.f32 %v4790, %v4791
    %v4793 = vrot.slane %v4792, 1
    %v4794 = vadd.f32 %v4792, %v4793
    %v4795 = vmul.f32 %v4794, %v4631
    %v4796 = vsub.f32 %v4786, %v4795
    %v4797 = vmul.f32 %v4796, %v4796
    %v4798 = vsel %vm4787, %v4797, 0.0
    %v4799 = vrot.slane %v4798, 4
    %v4800 = vadd.f32 %v4798, %v4799
    %v4801 = vrot.slane %v4800, 2
    %v4802 = vadd.f32 %v4800, %v4801
    %v4803 = vrot.slane %v4802, 1
    %v4804 = vadd.f32 %v4802, %v4803
    %v4805 = vmul.f32 %v4804, %v4631
    %v4806 = vadd.f32 %v4805, 1e-05
    %v4807 = vrsqrt.pop %v4806
    %v4808 = vmul.f32 %v4796, %v4807
    %v4809 = vlaneseq
    %v4810 = vshrl.u32 %v4809, 7
    %v4811 = vsub.s32 2, %v4810
    %v4812 = vrot.slane %v29, %v4811
    %v4813 = vmul.f32 %v4808, %v4812
    %v4814 = vlaneseq
    %v4815 = vshrl.u32 %v4814, 7
    %v4816 = vsub.s32 3, %v4815
    %v4817 = vrot.slane %v29, %v4816
    %v4818 = vadd.f32 %v4813, %v4817
    %v4819 = vld [vmem:[%s6] sm:$0xff]
    %v4820 = vld [vmem:[%s6 + $0x8] sm:$0xff]
    %v4821 = vld [vmem:[%s6 + $0x10] sm:$0xff]
    %v4822 = vld [vmem:[%s6 + $0x18] sm:$0xff]
    %v4823 = vld [vmem:[%s6 + $0x20] sm:$0xff]
    %v4824 = vld [vmem:[%s6 + $0x28] sm:$0xff]
    %v4825 = vld [vmem:[%s6 + $0x30] sm:$0xff]
    %v4826 = vld [vmem:[%s6 + $0x38] sm:$0xff]
    %v4827 = vlaneseq
    %v4828 = vshrl.u32 %v4827, 7
    %v4829 = vsub.s32 4, %v4828
    %v4830 = vrot.slane %v29, %v4829
    %v4832 = vsel %vm4171, %v4818, 0
    %4834 = vmatprep.subr.mxu0 0.0
    %4835 = vmatpush1.msra.mxu0 %v4819
    %4836 = vmatprep.subr.mxu0 0.0
    %4837 = vmatpush1.msra.mxu0 %v4820
    %4838 = vmatprep.subr.mxu0 0.0
    %4839 = vmatpush1.msra.mxu0 %v4821
    %4840 = vmatprep.subr.mxu0 0.0
    %4841 = vmatpush1.msra.mxu0 %v4822
    %4842 = vmatprep.subr.mxu0 0.0
    %4843 = vmatpush1.msra.mxu0 %v4823
    %4844 = vmatprep.subr.mxu0 0.0
    %4845 = vmatpush1.msra.mxu0 %v4824
    %4846 = vmatprep.subr.mxu0 0.0
    %4847 = vmatpush1.msra.mxu0 %v4825
    %4848 = vmatprep.subr.mxu0 0.0
    %4849 = vmatpush1.msra.mxu0 %v4826
    %4850 = vmatprep.subr.mxu0 0.0
    %4851 = vmatpush1.msra.mxu0 0.0
    %4852 = vmatprep.subr.mxu0 0.0
    %4853 = vmatpush1.msra.mxu0 0.0
    %4854 = vmatprep.subr.mxu0 0.0
    %4855 = vmatpush1.msra.mxu0 0.0
    %4856 = vmatprep.subr.mxu0 0.0
    %4857 = vmatpush1.msra.mxu0 0.0
    %4858 = vmatprep.subr.mxu0 0.0
    %4859 = vmatpush1.msra.mxu0 0.0
    %4860 = vmatprep.subr.mxu0 0.0
    %4861 = vmatpush1.msra.mxu0 0.0
    %4862 = vmatprep.subr.mxu0 0.0
    %4863 = vmatpush1.msra.mxu0 0.0
    %4864 = vmatprep.subr.mxu0 0.0
    %4865 = vmatpush1.msra.mxu0 0.0
    %4866 = vmatprep.subr.mxu0 0.0
    %4867 = vmatpush1.msra.mxu0 0.0
    %4868 = vmatprep.subr.mxu0 0.0
    %4869 = vmatpush1.msra.mxu0 0.0
    %4870 = vmatprep.subr.mxu0 0.0
    %4871 = vmatpush1.msra.mxu0 0.0
    %4872 = vmatprep.subr.mxu0 0.0
    %4873 = vmatpush1.msra.mxu0 0.0
    %4874 = vmatprep.subr.mxu0 0.0
    %4875 = vmatpush1.msra.mxu0 0.0
    %4876 = vmatprep.subr.mxu0 0.0
    %4877 = vmatpush1.msra.mxu0 0.0
    %4878 = vmatprep.subr.mxu0 0.0
    %4879 = vmatpush1.msra.mxu0 0.0
    %4880 = vmatprep.subr.mxu0 0.0
    %4881 = vmatpush1.msra.mxu0 0.0
    %4882 = vmatprep.subr.mxu0 0.0
    %4883 = vmatpush1.msra.mxu0 0.0
    %4884 = vmatprep.subr.mxu0 0.0
    %4885 = vmatpush1.msra.mxu0 0.0
    %4886 = vmatprep.subr.mxu0 0.0
    %4887 = vmatpush1.msra.mxu0 0.0
    %4888 = vmatprep.subr.mxu0 0.0
    %4889 = vmatpush1.msra.mxu0 0.0
    %4890 = vmatprep.subr.mxu0 0.0
    %4891 = vmatpush1.msra.mxu0 0.0
    %4892 = vmatprep.subr.mxu0 0.0
    %4893 = vmatpush1.msra.mxu0 0.0
    %4894 = vmatprep.subr.mxu0 0.0
    %4895 = vmatpush1.msra.mxu0 0.0
    %4896 = vmatprep.subr.mxu0 0.0
    %4897 = vmatpush1.msra.mxu0 0.0
    %4898 = vmatprep.mubr.f32.mxu0 0.0
    %4899 = vmatmul.mubr.f32.gmra.mrb[0].mxu0 %v4832
    %v4900 = vpop.f32.mrb[0].mxu0
    %v4901 = vadd.f32 %v4830, %v4900
    %v4902 = vpop.f32.mrb[0].mxu0
    %4903 = vdwg.mxu0
    %vm4904 = vcmask 74752
    %4905 = vst.msk [vmem:[#allocation2] sm:$0x3] %vm4904, %v4901
    // Predicated region
    $region30: #{lenet_batchnorm_forward.1} parent=1 // pred_check
      _
    $region31: #{lenet_batchnorm_forward.1} parent=1 // pred_check_branch
      %4907 = sbr.rel (0) target = $region33
    $region32: #{lenet_batchnorm_forward.1} parent=1 // pred_region
      %s4909 = ssub.s32 32, 32
      %4910 = vsyncadd [#allocation3], %s4909
      %s4912 = sshll.u32 [#allocation2], 4
      %s4913 = int_to_ptr.vmem [resolvable:$true] %s4912
      %4915 = dma.vmem_to_hbm [thread:$0]  %s4913, 32, %s7, [#allocation3]
    $region33: #{lenet_batchnorm_forward.1} parent=1 // pred_fallthru
      _
    // Predicated region
    $region34: #{lenet_batchnorm_forward.1} parent=1 // pred_check
      _
    $region35: #{lenet_batchnorm_forward.1} parent=1 // pred_check_branch
      %4917 = sbr.rel (0) target = $region37
    $region36: #{lenet_batchnorm_forward.1} parent=1 // pred_region
      %4918 = dma.done [#allocation3], 32
    $region37: #{lenet_batchnorm_forward.1} parent=1 // pred_fallthru
      _
    %4919 = vsyncpa [#allocation3], 1

</llo_original>
